<compile_context>
chip_gen: v6e
topology: v6e:2x2x1
jax: 0.10.0
libtpu: 0.0.40
codegen_flags: <defaults>
</compile_context>

<pallas_src>
import functools

import jax
import jax.numpy as jnp
from jax import lax
from jax.experimental import pallas as pl
from jax.experimental.pallas import tpu as pltpu

INPUT_DIM = 300             # fixed by the module: nn.LSTM(300, ...)
LSTM_HIDDEN_DIM = 64        # lstm_hidden_dim (small for the test; default 256)
HID = LSTM_HIDDEN_DIM // 2  # per-direction hidden size = 32
TAGS = 6                    # tag_set_size
NUM_LAYERS = 2

H2 = 2 * HID                # 64
H4 = 4 * HID                # 128
H8 = 8 * HID                # 256  (fused fwd+bwd gate width)

# ----- packA row offsets (f32, H8 lanes): fused recurrent weights + biases --
A_WHH0 = 0                  # (2H, 8H) block-diag W_hh layer 0
A_WIH1 = H2                 # (2H, 8H) fused W_ih  layer 1
A_WHH1 = 2 * H2             # (2H, 8H) block-diag W_hh layer 1
A_B0 = 3 * H2               # (1, 8H) folded bias layer 0
A_B1 = 3 * H2 + 1           # (1, 8H) folded bias layer 1
A_ROWS = ((A_B1 + 1 + 7) // 8) * 8

# ----- packB row offsets (f32, TAGS lanes): tag head + CRF tables -----------
B_WTAG = 0                  # (2H, T) hidden2tag weight (transposed)
B_BTAG = H2                 # (1, T)  hidden2tag bias
B_TRANS = H2 + 1            # (T, T)  CRF transitions
B_START = B_TRANS + TAGS    # (1, T)  CRF start transitions
B_END = B_START + 1         # (1, T)  CRF end transitions
B_ROWS = ((B_END + 1 + 7) // 8) * 8


# ----------------------------------------------------------------------------
# Fused kernel: 2-layer biLSTM -> hidden2tag -> CRF NLL. One pallas_call,
# everything time-major and flattened to (S*B, F); loss goes out through SMEM.
# ----------------------------------------------------------------------------
def fused_kernel(x_ref, meta_ref, wih0_ref, packA_ref, packB_ref,
                 loss_ref,
                 xw_scr, h0_scr, h1_scr, emit_scr,
                 *, batch, seq):
    B, S, H, T = batch, seq, HID, TAGS
    HH2, HH8 = 2 * H, 8 * H

    # Lane masks over the fused gate layout [i_f|i_b|f_f|f_b|g_f|g_b|o_f|o_b].
    lane = lax.broadcasted_iota(jnp.int32, (B, HH8), 1)
    is_g = (lane >= 4 * H) & (lane < 6 * H)      # cell-candidate lanes, both dirs
    is_fwd = (lane % HH2) < H                    # forward-direction lanes

    def run_layer(whh, hout_scr):
        """Fused fwd+bwd LSTM recurrence over xw_scr, writes (S*B, 2H) hiddens.

        whh: (2H, 8H) block-diagonal recurrent weight (value, loaded once).
        Gate order follows PyTorch (i, f, g, o), fwd/bwd interleaved per gate.
        """
        h = jnp.zeros((B, HH2), jnp.float32)
        c = jnp.zeros((B, HH2), jnp.float32)
        for k in range(S):                       # fully unrolled, static indices
            tf, tb = k, S - 1 - k
            # Plain VMEM loads (hoistable); forward lanes from step tf,
            # backward lanes from step tb.
            xw_step = jnp.where(is_fwd,
                                xw_scr[tf * B:(tf + 1) * B, :],
                                xw_scr[tb * B:(tb + 1) * B, :])
            g = xw_step + jnp.dot(h, whh, preferred_element_type=jnp.float32)
            # Single sigmoid: tanh(x) = 2*sigmoid(2x) - 1 on the g lanes.
            a = jax.nn.sigmoid(jnp.where(is_g, 2.0 * g, g))
            act = jnp.where(is_g, 2.0 * a - 1.0, a)
            i_g = act[:, 0:HH2]
            f_g = act[:, HH2:2 * HH2]
            g_g = act[:, 2 * HH2:3 * HH2]
            o_g = act[:, 3 * HH2:4 * HH2]
            c = f_g * c + i_g * g_g
            h = o_g * jnp.tanh(c)
            hout_scr[tf * B:(tf + 1) * B, 0:H] = h[:, 0:H]       # fwd @ time tf
            hout_scr[tb * B:(tb + 1) * B, H:HH2] = h[:, H:HH2]   # bwd @ time tb

    # ---------------- layer 0 ----------------
    x_bf = x_ref[...].astype(jnp.bfloat16)       # bf16 x bf16 -> f32 accumulate
    xw_scr[...] = (jnp.dot(x_bf, wih0_ref[...],
                           preferred_element_type=jnp.float32)
                   + packA_ref[A_B0:A_B0 + 1, :])
    run_layer(packA_ref[A_WHH0:A_WHH0 + HH2, :], h0_scr)

    # ---------------- layer 1 ----------------
    # TODO(synk): inter-layer LSTM dropout (p=0.1) and nn.Dropout(0.5) are
    # identity in eval-mode forward semantics; train-mode masks not implemented.
    xw_scr[...] = (jnp.dot(h0_scr[...], packA_ref[A_WIH1:A_WIH1 + HH2, :],
                           preferred_element_type=jnp.float32)
                   + packA_ref[A_B1:A_B1 + 1, :])
    run_layer(packA_ref[A_WHH1:A_WHH1 + HH2, :], h1_scr)

    # ---------------- hidden2tag (never leaves VMEM) ----------------
    emit_scr[...] = (jnp.dot(h1_scr[...], packB_ref[B_WTAG:B_WTAG + HH2, :],
                             preferred_element_type=jnp.float32)
                     + packB_ref[B_BTAG:B_BTAG + 1, :])

    # ---------------- CRF negative log-likelihood ----------------
    trans = packB_ref[B_TRANS:B_TRANS + T, :]    # (T, T)
    start = packB_ref[B_START:B_START + 1, :]    # (1, T)
    end = packB_ref[B_END:B_END + 1, :]          # (1, T)

    maskv = meta_ref[:, 0:1]                     # (S*B, 1) prefix mask
    tgt_f = meta_ref[:, 1:2]                     # (S*B, 1) targets (as float)
    emit = emit_scr[...]                         # (S*B, T)

    # One-hot targets built in-kernel (exact float compare on small ints).
    Y = (lax.broadcasted_iota(jnp.int32, (S * B, T), 1).astype(jnp.float32)
         == tgt_f).astype(jnp.float32)

    # ---- gold path score: fully vectorized, off the serial chain ----
    gold = jnp.sum(emit * Y * maskv)                            # emissions
    gold = gold + jnp.sum(Y[0:B] * maskv[0:B] * start)          # start (m[0]==1)
    Yp = Y[0:(S - 1) * B]
    Yn = Y[B:S * B]
    mn = maskv[B:S * B]
    gold = gold + jnp.sum(jnp.dot(Yp, trans,
                                  preferred_element_type=jnp.float32)
                          * Yn * mn)                            # transitions
    # End transition at the last valid step (prefix-mask telescoping).
    gold = gold + jnp.sum(Y * maskv * end) - jnp.sum(Yp * mn * end)

    # ---- log-partition: forward algorithm, VPU logsumexp (no per-step MXU) --
    cmax = jnp.max(trans, axis=0, keepdims=True)                # (1, T)
    exp_trans = jnp.exp(trans - cmax)                           # (T, T)
    trow = [exp_trans[i:i + 1, :] for i in range(T)]            # hoisted rows

    alpha = start + emit_scr[0:B, :]                            # (B, T)
    for t in range(1, S):
        e_t = emit_scr[t * B:(t + 1) * B, :]                    # (B, T)
        m_t = meta_ref[t * B:(t + 1) * B, 0:1]                  # (B, 1)
        rmax = jnp.max(alpha, axis=1, keepdims=True)            # (B, 1)
        ea = jnp.exp(alpha - rmax)                              # (B, T)
        s = trow[0] * ea[:, 0:1]
        for i in range(1, T):
            s = s + trow[i] * ea[:, i:i + 1]                    # (B, T) VPU FMAs
        new = rmax + cmax + jnp.log(s) + e_t
        alpha = jnp.where(m_t > 0.5, new, alpha)

    final = alpha + end
    fmax = jnp.max(final, axis=1, keepdims=True)
    logz = fmax + jnp.log(jnp.sum(jnp.exp(final - fmax),
                                  axis=1, keepdims=True))       # (B, 1)
    loss_ref[0, 0] = jnp.sum(logz) - gold


# ----------------------------------------------------------------------------
# Parameter init (PyTorch layout) + one-time fold into the fused kernel layout.
# ----------------------------------------------------------------------------
def _randn(key, shape, scale=0.1):
    return scale * jax.random.normal(key, shape, dtype=jnp.float32)


def init_params(key):
    """Parameters in PyTorch nn.LSTM / nn.Linear / CRF shapes."""
    ks = iter(jax.random.split(key, 64))
    lstm = []
    in_dim = INPUT_DIM
    for _ in range(NUM_LAYERS):
        p = {}
        for d in ("f", "b"):
            p[f"w_ih_{d}"] = _randn(next(ks), (4 * HID, in_dim))
            p[f"w_hh_{d}"] = _randn(next(ks), (4 * HID, HID))
            p[f"b_ih_{d}"] = _randn(next(ks), (4 * HID,))
            p[f"b_hh_{d}"] = _randn(next(ks), (4 * HID,))
        lstm.append(p)
        in_dim = 2 * HID
    return {
        "lstm": lstm,
        "w_tag": _randn(next(ks), (TAGS, LSTM_HIDDEN_DIM)),
        "b_tag": _randn(next(ks), (TAGS,)),
        "trans": _randn(next(ks), (TAGS, TAGS)),
        "start": _randn(next(ks), (TAGS,)),
        "end": _randn(next(ks), (TAGS,)),
    }


def _gate_perm():
    """Column permutation mapping the [fwd i,f,g,o | bwd i,f,g,o] concat layout
    to the fused gate-major layout [i_f|i_b|f_f|f_b|g_f|g_b|o_f|o_b]."""
    p = jnp.arange(H8)
    gate = p // H2
    direction = (p // HID) % 2
    m = p % HID
    return direction * H4 + gate * HID + m


def fold_params(params):
    """One-time re-layout: fuse fwd/bwd weights, block-diag W_hh, fold biases,
    pack all small operands into two padded VMEM arrays, bf16 layer-0 W_ih."""
    perm = _gate_perm()

    def fuse_ih(w_f, w_b):                       # torch (4H, Din) -> (Din, 8H)
        return jnp.concatenate([w_f.T, w_b.T], axis=1)[:, perm]

    def fuse_hh(w_f, w_b):                       # block-diag -> (2H, 8H)
        z = jnp.zeros((HID, H4), jnp.float32)
        top = jnp.concatenate([w_f.T, z], axis=1)
        bot = jnp.concatenate([z, w_b.T], axis=1)
        return jnp.concatenate([top, bot], axis=0)[:, perm]

    def fuse_bias(p):
        bf = p["b_ih_f"] + p["b_hh_f"]
        bb = p["b_ih_b"] + p["b_hh_b"]
        return jnp.concatenate([bf, bb])[perm]

    l0, l1 = params["lstm"]
    # bf16 layer-0 input projection weight (dominant HBM operand); f32 accum.
    wih0 = fuse_ih(l0["w_ih_f"], l0["w_ih_b"]).astype(jnp.bfloat16)  # (300, 8H)

    packA = jnp.zeros((A_ROWS, H8), jnp.float32)
    packA = packA.at[A_WHH0:A_WHH0 + H2].set(fuse_hh(l0["w_hh_f"], l0["w_hh_b"]))
    packA = packA.at[A_WIH1:A_WIH1 + H2].set(fuse_ih(l1["w_ih_f"], l1["w_ih_b"]))
    packA = packA.at[A_WHH1:A_WHH1 + H2].set(fuse_hh(l1["w_hh_f"], l1["w_hh_b"]))
    packA = packA.at[A_B0].set(fuse_bias(l0))
    packA = packA.at[A_B1].set(fuse_bias(l1))

    packB = jnp.zeros((B_ROWS, TAGS), jnp.float32)
    packB = packB.at[B_WTAG:B_WTAG + H2].set(params["w_tag"].T)      # (2H, T)
    packB = packB.at[B_BTAG].set(params["b_tag"])
    packB = packB.at[B_TRANS:B_TRANS + TAGS].set(params["trans"])
    packB = packB.at[B_START].set(params["start"])
    packB = packB.at[B_END].set(params["end"])

    return {"wih0": wih0, "packA": packA, "packB": packB}


# ----------------------------------------------------------------------------
# Full forward: input.float() -> 2-layer biLSTM -> (dropout=id) -> linear ->
#               CRF negative log-likelihood. One pallas_call, 5 inputs.
# ----------------------------------------------------------------------------
def bilstm_crf_forward(folded, inputs, mask, target):
    """Eval-mode forward returning the CRF NLL loss (scalar).

    Assumptions (same as the reference CRF): `mask` is a prefix mask with
    mask[:, 0] == 1 for every batch row; targets lie in [0, TAGS).
    """
    B, S, _ = inputs.shape
    # Tiny one-time relayouts to time-major flattened form (row t*B + b).
    x = inputs.astype(jnp.float32).transpose(1, 0, 2).reshape(S * B, INPUT_DIM)
    meta = jnp.stack(
        [mask.astype(jnp.float32).T.reshape(S * B),
         target.astype(jnp.float32).T.reshape(S * B)], axis=1)       # (S*B, 2)

    kernel = functools.partial(fused_kernel, batch=B, seq=S)
    vmem = pl.BlockSpec(memory_space=pltpu.MemorySpace.VMEM)
    loss = pl.pallas_call(
        kernel,
        out_shape=jax.ShapeDtypeStruct((1, 1), jnp.float32),
        in_specs=[vmem] * 5,
        out_specs=pl.BlockSpec(memory_space=pltpu.MemorySpace.SMEM),
        scratch_shapes=[
            pltpu.VMEM((S * B, H8), jnp.float32),    # staged fused gate inputs
            pltpu.VMEM((S * B, H2), jnp.float32),    # layer-0 [h_fwd | h_bwd]
            pltpu.VMEM((S * B, H2), jnp.float32),    # layer-1 [h_fwd | h_bwd]
            pltpu.VMEM((S * B, TAGS), jnp.float32),  # emissions
        ],
    )(x, meta, folded["wih0"], folded["packA"], folded["packB"])
    return loss[0, 0]


if __name__ == "__main__":
    key = jax.random.PRNGKey(0)
    pk, ik, tk = jax.random.split(key, 3)
    folded = fold_params(init_params(pk))

    B, S = 2, 8
    # LongTensor-like input of per-token 300-d features, cast to float in fwd.
    inputs = jax.random.randint(ik, (B, S, INPUT_DIM), 0, 10, dtype=jnp.int32)
    lengths = jnp.array([S, 5], dtype=jnp.int32)
    mask = (jnp.arange(S)[None, :] < lengths[:, None]).astype(jnp.uint8)
    target = jax.random.randint(tk, (B, S), 0, TAGS, dtype=jnp.int32)

    loss = jax.jit(bilstm_crf_forward)(folded, inputs, mask, target)
    jax.block_until_ready(loss)
    print("KERNEL_OK")
</pallas_src>

<mosaic_0001>
module attributes {stable_mosaic.version = 11 : i64} {
  func.func @fused_kernel(%arg0: memref<16x300xf32, #tpu.memory_space<vmem>>, %arg1: memref<16x2xf32, #tpu.memory_space<vmem>>, %arg2: memref<300x256xbf16, #tpu.memory_space<vmem>>, %arg3: memref<200x256xf32, #tpu.memory_space<vmem>>, %arg4: memref<80x6xf32, #tpu.memory_space<vmem>>, %arg5: memref<1x1xf32, #tpu.memory_space<smem>>, %arg6: memref<16x256xf32, #tpu.memory_space<vmem>>, %arg7: memref<16x64xf32, #tpu.memory_space<vmem>>, %arg8: memref<16x64xf32, #tpu.memory_space<vmem>>, %arg9: memref<16x6xf32, #tpu.memory_space<vmem>>) attributes {dimension_semantics = [], scalar_prefetch = 0 : i64, scratch_operands = 4 : i64, tpu.core_type = #tpu.core_type<tc>} {
    %0 = tpu.iota {dimensions = array<i32: 1>} : vector<2x256xi32>
    %c128_i32 = arith.constant 128 : i32
    %1 = vector.broadcast %c128_i32 : i32 to vector<2x256xi32>
    %2 = arith.cmpi sge, %0, %1 : vector<2x256xi32>
    %c192_i32 = arith.constant 192 : i32
    %3 = vector.broadcast %c192_i32 : i32 to vector<2x256xi32>
    %4 = arith.cmpi slt, %0, %3 : vector<2x256xi32>
    %5 = arith.andi %2, %4 : vector<2x256xi1>
    %c64_i32 = arith.constant 64 : i32
    %c0_i32 = arith.constant 0 : i32
    %6 = arith.cmpi eq, %c64_i32, %c0_i32 : i32
    %c1_i32 = arith.constant 1 : i32
    %7 = arith.select %6, %c1_i32, %c64_i32 : i32
    %8 = vector.broadcast %7 : i32 to vector<2x256xi32>
    %9 = arith.remsi %0, %8 : vector<2x256xi32>
    %c0_i32_0 = arith.constant 0 : i32
    %10 = vector.broadcast %c0_i32_0 : i32 to vector<2x256xi32>
    %11 = arith.cmpi ne, %9, %10 : vector<2x256xi32>
    %c0_i32_1 = arith.constant 0 : i32
    %12 = vector.broadcast %c0_i32_1 : i32 to vector<2x256xi32>
    %13 = arith.cmpi slt, %9, %12 : vector<2x256xi32>
    %c0_i32_2 = arith.constant 0 : i32
    %14 = arith.cmpi slt, %7, %c0_i32_2 : i32
    %15 = vector.broadcast %14 : i1 to vector<2x256xi1>
    %16 = vector.broadcast %15 : vector<2x256xi1> to vector<2x256xi1>
    %17 = arith.xori %13, %16 : vector<2x256xi1>
    %18 = arith.andi %17, %11 : vector<2x256xi1>
    %19 = vector.broadcast %7 : i32 to vector<2x256xi32>
    %20 = arith.addi %9, %19 : vector<2x256xi32>
    %21 = arith.select %18, %20, %9 : vector<2x256xi1>, vector<2x256xi32>
    %c32_i32 = arith.constant 32 : i32
    %22 = vector.broadcast %c32_i32 : i32 to vector<2x256xi32>
    %23 = arith.cmpi slt, %21, %22 : vector<2x256xi32>
    %c0 = arith.constant 0 : index
    %c0_3 = arith.constant 0 : index
    %24 = vector.load %arg0[%c0, %c0_3] : memref<16x300xf32, #tpu.memory_space<vmem>>, vector<16x300xf32>
    %25 = arith.truncf %24 : vector<16x300xf32> to vector<16x300xbf16>
    %c0_4 = arith.constant 0 : index
    %c0_5 = arith.constant 0 : index
    %26 = vector.load %arg2[%c0_4, %c0_5] : memref<300x256xbf16, #tpu.memory_space<vmem>>, vector<300x256xbf16>
    %cst = arith.constant dense<0.000000e+00> : vector<16x256xf32>
    %27 = tpu.matmul %25, %26, %cst {dimension_numbers = #tpu.dot_dimension_numbers<[1], [0], [0], [1], [0, 0, 1, 1], [], []>} : vector<16x300xbf16>, vector<300x256xbf16>, vector<16x256xf32> -> vector<16x256xf32>
    %c192 = arith.constant 192 : index
    %c0_6 = arith.constant 0 : index
    %28 = vector.load %arg3[%c192, %c0_6] : memref<200x256xf32, #tpu.memory_space<vmem>>, vector<1x256xf32>
    %29 = vector.broadcast %28 : vector<1x256xf32> to vector<16x256xf32>
    %30 = arith.addf %27, %29 : vector<16x256xf32>
    %c0_7 = arith.constant 0 : index
    %c0_8 = arith.constant 0 : index
    %31 = vector.load %arg6[%c0_7, %c0_8] : memref<16x256xf32, #tpu.memory_space<vmem>>, vector<16x256xf32>
    tpu.vector_store %arg6[%c0_7, %c0_8], %30 {strides = array<i32>} : memref<16x256xf32, #tpu.memory_space<vmem>>, vector<16x256xf32>,
    %c0_9 = arith.constant 0 : index
    %c0_10 = arith.constant 0 : index
    %32 = vector.load %arg3[%c0_9, %c0_10] : memref<200x256xf32, #tpu.memory_space<vmem>>, vector<64x256xf32>
    %cst_11 = arith.constant 0.000000e+00 : f32
    %33 = vector.broadcast %cst_11 : f32 to vector<2x64xf32>
    %cst_12 = arith.constant 0.000000e+00 : f32
    %34 = vector.broadcast %cst_12 : f32 to vector<2x64xf32>
    %c0_13 = arith.constant 0 : index
    %c0_14 = arith.constant 0 : index
    %35 = vector.load %arg6[%c0_13, %c0_14] : memref<16x256xf32, #tpu.memory_space<vmem>>, vector<2x256xf32>
    %c14 = arith.constant 14 : index
    %c0_15 = arith.constant 0 : index
    %36 = vector.load %arg6[%c14, %c0_15] : memref<16x256xf32, #tpu.memory_space<vmem>>, vector<2x256xf32>
    %37 = arith.select %23, %35, %36 : vector<2x256xi1>, vector<2x256xf32>
    %cst_16 = arith.constant dense<0.000000e+00> : vector<2x256xf32>
    %38 = tpu.matmul %33, %32, %cst_16 {dimension_numbers = #tpu.dot_dimension_numbers<[1], [0], [0], [1], [0, 0, 1, 1], [], []>} : vector<2x64xf32>, vector<64x256xf32>, vector<2x256xf32> -> vector<2x256xf32>
    %39 = arith.addf %37, %38 : vector<2x256xf32>
    %cst_17 = arith.constant 2.000000e+00 : f32
    %40 = vector.broadcast %cst_17 : f32 to vector<2x256xf32>
    %41 = arith.mulf %40, %39 : vector<2x256xf32>
    %42 = arith.select %5, %41, %39 : vector<2x256xi1>, vector<2x256xf32>
    %43 = arith.negf %42 : vector<2x256xf32>
    %44 = math.exp %43 : vector<2x256xf32>
    %cst_18 = arith.constant 1.000000e+00 : f32
    %45 = vector.broadcast %cst_18 : f32 to vector<2x256xf32>
    %46 = arith.addf %45, %44 : vector<2x256xf32>
    %47 = arith.divf %45, %46 : vector<2x256xf32>
    %cst_19 = arith.constant 2.000000e+00 : f32
    %48 = vector.broadcast %cst_19 : f32 to vector<2x256xf32>
    %49 = arith.mulf %48, %47 : vector<2x256xf32>
    %cst_20 = arith.constant 1.000000e+00 : f32
    %50 = vector.broadcast %cst_20 : f32 to vector<2x256xf32>
    %51 = arith.subf %49, %50 : vector<2x256xf32>
    %52 = arith.select %5, %51, %47 : vector<2x256xi1>, vector<2x256xf32>
    %53 = vector.extract_strided_slice %52 {offsets = [0, 0], sizes = [2, 64], strides = [1, 1]} : vector<2x256xf32> to vector<2x64xf32>
    %54 = vector.extract_strided_slice %52 {offsets = [0, 64], sizes = [2, 64], strides = [1, 1]} : vector<2x256xf32> to vector<2x64xf32>
    %55 = vector.extract_strided_slice %52 {offsets = [0, 128], sizes = [2, 64], strides = [1, 1]} : vector<2x256xf32> to vector<2x64xf32>
    %56 = vector.extract_strided_slice %52 {offsets = [0, 192], sizes = [2, 64], strides = [1, 1]} : vector<2x256xf32> to vector<2x64xf32>
    %57 = arith.mulf %54, %34 : vector<2x64xf32>
    %58 = arith.mulf %53, %55 : vector<2x64xf32>
    %59 = arith.addf %57, %58 : vector<2x64xf32>
    %60 = math.tanh %59 : vector<2x64xf32>
    %61 = arith.mulf %56, %60 : vector<2x64xf32>
    %62 = vector.extract_strided_slice %61 {offsets = [0, 0], sizes = [2, 32], strides = [1, 1]} : vector<2x64xf32> to vector<2x32xf32>
    %c0_21 = arith.constant 0 : index
    %c0_22 = arith.constant 0 : index
    %63 = vector.load %arg7[%c0_21, %c0_22] : memref<16x64xf32, #tpu.memory_space<vmem>>, vector<2x32xf32>
    tpu.vector_store %arg7[%c0_21, %c0_22], %62 {strides = array<i32>} : memref<16x64xf32, #tpu.memory_space<vmem>>, vector<2x32xf32>,
    %64 = vector.extract_strided_slice %61 {offsets = [0, 32], sizes = [2, 32], strides = [1, 1]} : vector<2x64xf32> to vector<2x32xf32>
    %c14_23 = arith.constant 14 : index
    %c32 = arith.constant 32 : index
    %65 = vector.load %arg7[%c14_23, %c32] : memref<16x64xf32, #tpu.memory_space<vmem>>, vector<2x32xf32>
    tpu.vector_store %arg7[%c14_23, %c32], %64 {strides = array<i32>} : memref<16x64xf32, #tpu.memory_space<vmem>>, vector<2x32xf32>,
    %c2 = arith.constant 2 : index
    %c0_24 = arith.constant 0 : index
    %66 = vector.load %arg6[%c2, %c0_24] : memref<16x256xf32, #tpu.memory_space<vmem>>, vector<2x256xf32>
    %c12 = arith.constant 12 : index
    %c0_25 = arith.constant 0 : index
    %67 = vector.load %arg6[%c12, %c0_25] : memref<16x256xf32, #tpu.memory_space<vmem>>, vector<2x256xf32>
    %68 = arith.select %23, %66, %67 : vector<2x256xi1>, vector<2x256xf32>
    %cst_26 = arith.constant dense<0.000000e+00> : vector<2x256xf32>
    %69 = tpu.matmul %61, %32, %cst_26 {dimension_numbers = #tpu.dot_dimension_numbers<[1], [0], [0], [1], [0, 0, 1, 1], [], []>} : vector<2x64xf32>, vector<64x256xf32>, vector<2x256xf32> -> vector<2x256xf32>
    %70 = arith.addf %68, %69 : vector<2x256xf32>
    %cst_27 = arith.constant 2.000000e+00 : f32
    %71 = vector.broadcast %cst_27 : f32 to vector<2x256xf32>
    %72 = arith.mulf %71, %70 : vector<2x256xf32>
    %73 = arith.select %5, %72, %70 : vector<2x256xi1>, vector<2x256xf32>
    %74 = arith.negf %73 : vector<2x256xf32>
    %75 = math.exp %74 : vector<2x256xf32>
    %cst_28 = arith.constant 1.000000e+00 : f32
    %76 = vector.broadcast %cst_28 : f32 to vector<2x256xf32>
    %77 = arith.addf %76, %75 : vector<2x256xf32>
    %78 = arith.divf %76, %77 : vector<2x256xf32>
    %cst_29 = arith.constant 2.000000e+00 : f32
    %79 = vector.broadcast %cst_29 : f32 to vector<2x256xf32>
    %80 = arith.mulf %79, %78 : vector<2x256xf32>
    %cst_30 = arith.constant 1.000000e+00 : f32
    %81 = vector.broadcast %cst_30 : f32 to vector<2x256xf32>
    %82 = arith.subf %80, %81 : vector<2x256xf32>
    %83 = arith.select %5, %82, %78 : vector<2x256xi1>, vector<2x256xf32>
    %84 = vector.extract_strided_slice %83 {offsets = [0, 0], sizes = [2, 64], strides = [1, 1]} : vector<2x256xf32> to vector<2x64xf32>
    %85 = vector.extract_strided_slice %83 {offsets = [0, 64], sizes = [2, 64], strides = [1, 1]} : vector<2x256xf32> to vector<2x64xf32>
    %86 = vector.extract_strided_slice %83 {offsets = [0, 128], sizes = [2, 64], strides = [1, 1]} : vector<2x256xf32> to vector<2x64xf32>
    %87 = vector.extract_strided_slice %83 {offsets = [0, 192], sizes = [2, 64], strides = [1, 1]} : vector<2x256xf32> to vector<2x64xf32>
    %88 = arith.mulf %85, %59 : vector<2x64xf32>
    %89 = arith.mulf %84, %86 : vector<2x64xf32>
    %90 = arith.addf %88, %89 : vector<2x64xf32>
    %91 = math.tanh %90 : vector<2x64xf32>
    %92 = arith.mulf %87, %91 : vector<2x64xf32>
    %93 = vector.extract_strided_slice %92 {offsets = [0, 0], sizes = [2, 32], strides = [1, 1]} : vector<2x64xf32> to vector<2x32xf32>
    %c2_31 = arith.constant 2 : index
    %c0_32 = arith.constant 0 : index
    %94 = vector.load %arg7[%c2_31, %c0_32] : memref<16x64xf32, #tpu.memory_space<vmem>>, vector<2x32xf32>
    tpu.vector_store %arg7[%c2_31, %c0_32], %93 {strides = array<i32>} : memref<16x64xf32, #tpu.memory_space<vmem>>, vector<2x32xf32>,
    %95 = vector.extract_strided_slice %92 {offsets = [0, 32], sizes = [2, 32], strides = [1, 1]} : vector<2x64xf32> to vector<2x32xf32>
    %c12_33 = arith.constant 12 : index
    %c32_34 = arith.constant 32 : index
    %96 = vector.load %arg7[%c12_33, %c32_34] : memref<16x64xf32, #tpu.memory_space<vmem>>, vector<2x32xf32>
    tpu.vector_store %arg7[%c12_33, %c32_34], %95 {strides = array<i32>} : memref<16x64xf32, #tpu.memory_space<vmem>>, vector<2x32xf32>,
    %c4 = arith.constant 4 : index
    %c0_35 = arith.constant 0 : index
    %97 = vector.load %arg6[%c4, %c0_35] : memref<16x256xf32, #tpu.memory_space<vmem>>, vector<2x256xf32>
    %c10 = arith.constant 10 : index
    %c0_36 = arith.constant 0 : index
    %98 = vector.load %arg6[%c10, %c0_36] : memref<16x256xf32, #tpu.memory_space<vmem>>, vector<2x256xf32>
    %99 = arith.select %23, %97, %98 : vector<2x256xi1>, vector<2x256xf32>
    %cst_37 = arith.constant dense<0.000000e+00> : vector<2x256xf32>
    %100 = tpu.matmul %92, %32, %cst_37 {dimension_numbers = #tpu.dot_dimension_numbers<[1], [0], [0], [1], [0, 0, 1, 1], [], []>} : vector<2x64xf32>, vector<64x256xf32>, vector<2x256xf32> -> vector<2x256xf32>
    %101 = arith.addf %99, %100 : vector<2x256xf32>
    %cst_38 = arith.constant 2.000000e+00 : f32
    %102 = vector.broadcast %cst_38 : f32 to vector<2x256xf32>
    %103 = arith.mulf %102, %101 : vector<2x256xf32>
    %104 = arith.select %5, %103, %101 : vector<2x256xi1>, vector<2x256xf32>
    %105 = arith.negf %104 : vector<2x256xf32>
    %106 = math.exp %105 : vector<2x256xf32>
    %cst_39 = arith.constant 1.000000e+00 : f32
    %107 = vector.broadcast %cst_39 : f32 to vector<2x256xf32>
    %108 = arith.addf %107, %106 : vector<2x256xf32>
    %109 = arith.divf %107, %108 : vector<2x256xf32>
    %cst_40 = arith.constant 2.000000e+00 : f32
    %110 = vector.broadcast %cst_40 : f32 to vector<2x256xf32>
    %111 = arith.mulf %110, %109 : vector<2x256xf32>
    %cst_41 = arith.constant 1.000000e+00 : f32
    %112 = vector.broadcast %cst_41 : f32 to vector<2x256xf32>
    %113 = arith.subf %111, %112 : vector<2x256xf32>
    %114 = arith.select %5, %113, %109 : vector<2x256xi1>, vector<2x256xf32>
    %115 = vector.extract_strided_slice %114 {offsets = [0, 0], sizes = [2, 64], strides = [1, 1]} : vector<2x256xf32> to vector<2x64xf32>
    %116 = vector.extract_strided_slice %114 {offsets = [0, 64], sizes = [2, 64], strides = [1, 1]} : vector<2x256xf32> to vector<2x64xf32>
    %117 = vector.extract_strided_slice %114 {offsets = [0, 128], sizes = [2, 64], strides = [1, 1]} : vector<2x256xf32> to vector<2x64xf32>
    %118 = vector.extract_strided_slice %114 {offsets = [0, 192], sizes = [2, 64], strides = [1, 1]} : vector<2x256xf32> to vector<2x64xf32>
    %119 = arith.mulf %116, %90 : vector<2x64xf32>
    %120 = arith.mulf %115, %117 : vector<2x64xf32>
    %121 = arith.addf %119, %120 : vector<2x64xf32>
    %122 = math.tanh %121 : vector<2x64xf32>
    %123 = arith.mulf %118, %122 : vector<2x64xf32>
    %124 = vector.extract_strided_slice %123 {offsets = [0, 0], sizes = [2, 32], strides = [1, 1]} : vector<2x64xf32> to vector<2x32xf32>
    %c4_42 = arith.constant 4 : index
    %c0_43 = arith.constant 0 : index
    %125 = vector.load %arg7[%c4_42, %c0_43] : memref<16x64xf32, #tpu.memory_space<vmem>>, vector<2x32xf32>
    tpu.vector_store %arg7[%c4_42, %c0_43], %124 {strides = array<i32>} : memref<16x64xf32, #tpu.memory_space<vmem>>, vector<2x32xf32>,
    %126 = vector.extract_strided_slice %123 {offsets = [0, 32], sizes = [2, 32], strides = [1, 1]} : vector<2x64xf32> to vector<2x32xf32>
    %c10_44 = arith.constant 10 : index
    %c32_45 = arith.constant 32 : index
    %127 = vector.load %arg7[%c10_44, %c32_45] : memref<16x64xf32, #tpu.memory_space<vmem>>, vector<2x32xf32>
    tpu.vector_store %arg7[%c10_44, %c32_45], %126 {strides = array<i32>} : memref<16x64xf32, #tpu.memory_space<vmem>>, vector<2x32xf32>,
    %c6 = arith.constant 6 : index
    %c0_46 = arith.constant 0 : index
    %128 = vector.load %arg6[%c6, %c0_46] : memref<16x256xf32, #tpu.memory_space<vmem>>, vector<2x256xf32>
    %c8 = arith.constant 8 : index
    %c0_47 = arith.constant 0 : index
    %129 = vector.load %arg6[%c8, %c0_47] : memref<16x256xf32, #tpu.memory_space<vmem>>, vector<2x256xf32>
    %130 = arith.select %23, %128, %129 : vector<2x256xi1>, vector<2x256xf32>
    %cst_48 = arith.constant dense<0.000000e+00> : vector<2x256xf32>
    %131 = tpu.matmul %123, %32, %cst_48 {dimension_numbers = #tpu.dot_dimension_numbers<[1], [0], [0], [1], [0, 0, 1, 1], [], []>} : vector<2x64xf32>, vector<64x256xf32>, vector<2x256xf32> -> vector<2x256xf32>
    %132 = arith.addf %130, %131 : vector<2x256xf32>
    %cst_49 = arith.constant 2.000000e+00 : f32
    %133 = vector.broadcast %cst_49 : f32 to vector<2x256xf32>
    %134 = arith.mulf %133, %132 : vector<2x256xf32>
    %135 = arith.select %5, %134, %132 : vector<2x256xi1>, vector<2x256xf32>
    %136 = arith.negf %135 : vector<2x256xf32>
    %137 = math.exp %136 : vector<2x256xf32>
    %cst_50 = arith.constant 1.000000e+00 : f32
    %138 = vector.broadcast %cst_50 : f32 to vector<2x256xf32>
    %139 = arith.addf %138, %137 : vector<2x256xf32>
    %140 = arith.divf %138, %139 : vector<2x256xf32>
    %cst_51 = arith.constant 2.000000e+00 : f32
    %141 = vector.broadcast %cst_51 : f32 to vector<2x256xf32>
    %142 = arith.mulf %141, %140 : vector<2x256xf32>
    %cst_52 = arith.constant 1.000000e+00 : f32
    %143 = vector.broadcast %cst_52 : f32 to vector<2x256xf32>
    %144 = arith.subf %142, %143 : vector<2x256xf32>
    %145 = arith.select %5, %144, %140 : vector<2x256xi1>, vector<2x256xf32>
    %146 = vector.extract_strided_slice %145 {offsets = [0, 0], sizes = [2, 64], strides = [1, 1]} : vector<2x256xf32> to vector<2x64xf32>
    %147 = vector.extract_strided_slice %145 {offsets = [0, 64], sizes = [2, 64], strides = [1, 1]} : vector<2x256xf32> to vector<2x64xf32>
    %148 = vector.extract_strided_slice %145 {offsets = [0, 128], sizes = [2, 64], strides = [1, 1]} : vector<2x256xf32> to vector<2x64xf32>
    %149 = vector.extract_strided_slice %145 {offsets = [0, 192], sizes = [2, 64], strides = [1, 1]} : vector<2x256xf32> to vector<2x64xf32>
    %150 = arith.mulf %147, %121 : vector<2x64xf32>
    %151 = arith.mulf %146, %148 : vector<2x64xf32>
    %152 = arith.addf %150, %151 : vector<2x64xf32>
    %153 = math.tanh %152 : vector<2x64xf32>
    %154 = arith.mulf %149, %153 : vector<2x64xf32>
    %155 = vector.extract_strided_slice %154 {offsets = [0, 0], sizes = [2, 32], strides = [1, 1]} : vector<2x64xf32> to vector<2x32xf32>
    %c6_53 = arith.constant 6 : index
    %c0_54 = arith.constant 0 : index
    %156 = vector.load %arg7[%c6_53, %c0_54] : memref<16x64xf32, #tpu.memory_space<vmem>>, vector<2x32xf32>
    tpu.vector_store %arg7[%c6_53, %c0_54], %155 {strides = array<i32>} : memref<16x64xf32, #tpu.memory_space<vmem>>, vector<2x32xf32>,
    %157 = vector.extract_strided_slice %154 {offsets = [0, 32], sizes = [2, 32], strides = [1, 1]} : vector<2x64xf32> to vector<2x32xf32>
    %c8_55 = arith.constant 8 : index
    %c32_56 = arith.constant 32 : index
    %158 = vector.load %arg7[%c8_55, %c32_56] : memref<16x64xf32, #tpu.memory_space<vmem>>, vector<2x32xf32>
    tpu.vector_store %arg7[%c8_55, %c32_56], %157 {strides = array<i32>} : memref<16x64xf32, #tpu.memory_space<vmem>>, vector<2x32xf32>,
    %c8_57 = arith.constant 8 : index
    %c0_58 = arith.constant 0 : index
    %159 = vector.load %arg6[%c8_57, %c0_58] : memref<16x256xf32, #tpu.memory_space<vmem>>, vector<2x256xf32>
    %c6_59 = arith.constant 6 : index
    %c0_60 = arith.constant 0 : index
    %160 = vector.load %arg6[%c6_59, %c0_60] : memref<16x256xf32, #tpu.memory_space<vmem>>, vector<2x256xf32>
    %161 = arith.select %23, %159, %160 : vector<2x256xi1>, vector<2x256xf32>
    %cst_61 = arith.constant dense<0.000000e+00> : vector<2x256xf32>
    %162 = tpu.matmul %154, %32, %cst_61 {dimension_numbers = #tpu.dot_dimension_numbers<[1], [0], [0], [1], [0, 0, 1, 1], [], []>} : vector<2x64xf32>, vector<64x256xf32>, vector<2x256xf32> -> vector<2x256xf32>
    %163 = arith.addf %161, %162 : vector<2x256xf32>
    %cst_62 = arith.constant 2.000000e+00 : f32
    %164 = vector.broadcast %cst_62 : f32 to vector<2x256xf32>
    %165 = arith.mulf %164, %163 : vector<2x256xf32>
    %166 = arith.select %5, %165, %163 : vector<2x256xi1>, vector<2x256xf32>
    %167 = arith.negf %166 : vector<2x256xf32>
    %168 = math.exp %167 : vector<2x256xf32>
    %cst_63 = arith.constant 1.000000e+00 : f32
    %169 = vector.broadcast %cst_63 : f32 to vector<2x256xf32>
    %170 = arith.addf %169, %168 : vector<2x256xf32>
    %171 = arith.divf %169, %170 : vector<2x256xf32>
    %cst_64 = arith.constant 2.000000e+00 : f32
    %172 = vector.broadcast %cst_64 : f32 to vector<2x256xf32>
    %173 = arith.mulf %172, %171 : vector<2x256xf32>
    %cst_65 = arith.constant 1.000000e+00 : f32
    %174 = vector.broadcast %cst_65 : f32 to vector<2x256xf32>
    %175 = arith.subf %173, %174 : vector<2x256xf32>
    %176 = arith.select %5, %175, %171 : vector<2x256xi1>, vector<2x256xf32>
    %177 = vector.extract_strided_slice %176 {offsets = [0, 0], sizes = [2, 64], strides = [1, 1]} : vector<2x256xf32> to vector<2x64xf32>
    %178 = vector.extract_strided_slice %176 {offsets = [0, 64], sizes = [2, 64], strides = [1, 1]} : vector<2x256xf32> to vector<2x64xf32>
    %179 = vector.extract_strided_slice %176 {offsets = [0, 128], sizes = [2, 64], strides = [1, 1]} : vector<2x256xf32> to vector<2x64xf32>
    %180 = vector.extract_strided_slice %176 {offsets = [0, 192], sizes = [2, 64], strides = [1, 1]} : vector<2x256xf32> to vector<2x64xf32>
    %181 = arith.mulf %178, %152 : vector<2x64xf32>
    %182 = arith.mulf %177, %179 : vector<2x64xf32>
    %183 = arith.addf %181, %182 : vector<2x64xf32>
    %184 = math.tanh %183 : vector<2x64xf32>
    %185 = arith.mulf %180, %184 : vector<2x64xf32>
    %186 = vector.extract_strided_slice %185 {offsets = [0, 0], sizes = [2, 32], strides = [1, 1]} : vector<2x64xf32> to vector<2x32xf32>
    %c8_66 = arith.constant 8 : index
    %c0_67 = arith.constant 0 : index
    %187 = vector.load %arg7[%c8_66, %c0_67] : memref<16x64xf32, #tpu.memory_space<vmem>>, vector<2x32xf32>
    tpu.vector_store %arg7[%c8_66, %c0_67], %186 {strides = array<i32>} : memref<16x64xf32, #tpu.memory_space<vmem>>, vector<2x32xf32>,
    %188 = vector.extract_strided_slice %185 {offsets = [0, 32], sizes = [2, 32], strides = [1, 1]} : vector<2x64xf32> to vector<2x32xf32>
    %c6_68 = arith.constant 6 : index
    %c32_69 = arith.constant 32 : index
    %189 = vector.load %arg7[%c6_68, %c32_69] : memref<16x64xf32, #tpu.memory_space<vmem>>, vector<2x32xf32>
    tpu.vector_store %arg7[%c6_68, %c32_69], %188 {strides = array<i32>} : memref<16x64xf32, #tpu.memory_space<vmem>>, vector<2x32xf32>,
    %c10_70 = arith.constant 10 : index
    %c0_71 = arith.constant 0 : index
    %190 = vector.load %arg6[%c10_70, %c0_71] : memref<16x256xf32, #tpu.memory_space<vmem>>, vector<2x256xf32>
    %c4_72 = arith.constant 4 : index
    %c0_73 = arith.constant 0 : index
    %191 = vector.load %arg6[%c4_72, %c0_73] : memref<16x256xf32, #tpu.memory_space<vmem>>, vector<2x256xf32>
    %192 = arith.select %23, %190, %191 : vector<2x256xi1>, vector<2x256xf32>
    %cst_74 = arith.constant dense<0.000000e+00> : vector<2x256xf32>
    %193 = tpu.matmul %185, %32, %cst_74 {dimension_numbers = #tpu.dot_dimension_numbers<[1], [0], [0], [1], [0, 0, 1, 1], [], []>} : vector<2x64xf32>, vector<64x256xf32>, vector<2x256xf32> -> vector<2x256xf32>
    %194 = arith.addf %192, %193 : vector<2x256xf32>
    %cst_75 = arith.constant 2.000000e+00 : f32
    %195 = vector.broadcast %cst_75 : f32 to vector<2x256xf32>
    %196 = arith.mulf %195, %194 : vector<2x256xf32>
    %197 = arith.select %5, %196, %194 : vector<2x256xi1>, vector<2x256xf32>
    %198 = arith.negf %197 : vector<2x256xf32>
    %199 = math.exp %198 : vector<2x256xf32>
    %cst_76 = arith.constant 1.000000e+00 : f32
    %200 = vector.broadcast %cst_76 : f32 to vector<2x256xf32>
    %201 = arith.addf %200, %199 : vector<2x256xf32>
    %202 = arith.divf %200, %201 : vector<2x256xf32>
    %cst_77 = arith.constant 2.000000e+00 : f32
    %203 = vector.broadcast %cst_77 : f32 to vector<2x256xf32>
    %204 = arith.mulf %203, %202 : vector<2x256xf32>
    %cst_78 = arith.constant 1.000000e+00 : f32
    %205 = vector.broadcast %cst_78 : f32 to vector<2x256xf32>
    %206 = arith.subf %204, %205 : vector<2x256xf32>
    %207 = arith.select %5, %206, %202 : vector<2x256xi1>, vector<2x256xf32>
    %208 = vector.extract_strided_slice %207 {offsets = [0, 0], sizes = [2, 64], strides = [1, 1]} : vector<2x256xf32> to vector<2x64xf32>
    %209 = vector.extract_strided_slice %207 {offsets = [0, 64], sizes = [2, 64], strides = [1, 1]} : vector<2x256xf32> to vector<2x64xf32>
    %210 = vector.extract_strided_slice %207 {offsets = [0, 128], sizes = [2, 64], strides = [1, 1]} : vector<2x256xf32> to vector<2x64xf32>
    %211 = vector.extract_strided_slice %207 {offsets = [0, 192], sizes = [2, 64], strides = [1, 1]} : vector<2x256xf32> to vector<2x64xf32>
    %212 = arith.mulf %209, %183 : vector<2x64xf32>
    %213 = arith.mulf %208, %210 : vector<2x64xf32>
    %214 = arith.addf %212, %213 : vector<2x64xf32>
    %215 = math.tanh %214 : vector<2x64xf32>
    %216 = arith.mulf %211, %215 : vector<2x64xf32>
    %217 = vector.extract_strided_slice %216 {offsets = [0, 0], sizes = [2, 32], strides = [1, 1]} : vector<2x64xf32> to vector<2x32xf32>
    %c10_79 = arith.constant 10 : index
    %c0_80 = arith.constant 0 : index
    %218 = vector.load %arg7[%c10_79, %c0_80] : memref<16x64xf32, #tpu.memory_space<vmem>>, vector<2x32xf32>
    tpu.vector_store %arg7[%c10_79, %c0_80], %217 {strides = array<i32>} : memref<16x64xf32, #tpu.memory_space<vmem>>, vector<2x32xf32>,
    %219 = vector.extract_strided_slice %216 {offsets = [0, 32], sizes = [2, 32], strides = [1, 1]} : vector<2x64xf32> to vector<2x32xf32>
    %c4_81 = arith.constant 4 : index
    %c32_82 = arith.constant 32 : index
    %220 = vector.load %arg7[%c4_81, %c32_82] : memref<16x64xf32, #tpu.memory_space<vmem>>, vector<2x32xf32>
    tpu.vector_store %arg7[%c4_81, %c32_82], %219 {strides = array<i32>} : memref<16x64xf32, #tpu.memory_space<vmem>>, vector<2x32xf32>,
    %c12_83 = arith.constant 12 : index
    %c0_84 = arith.constant 0 : index
    %221 = vector.load %arg6[%c12_83, %c0_84] : memref<16x256xf32, #tpu.memory_space<vmem>>, vector<2x256xf32>
    %c2_85 = arith.constant 2 : index
    %c0_86 = arith.constant 0 : index
    %222 = vector.load %arg6[%c2_85, %c0_86] : memref<16x256xf32, #tpu.memory_space<vmem>>, vector<2x256xf32>
    %223 = arith.select %23, %221, %222 : vector<2x256xi1>, vector<2x256xf32>
    %cst_87 = arith.constant dense<0.000000e+00> : vector<2x256xf32>
    %224 = tpu.matmul %216, %32, %cst_87 {dimension_numbers = #tpu.dot_dimension_numbers<[1], [0], [0], [1], [0, 0, 1, 1], [], []>} : vector<2x64xf32>, vector<64x256xf32>, vector<2x256xf32> -> vector<2x256xf32>
    %225 = arith.addf %223, %224 : vector<2x256xf32>
    %cst_88 = arith.constant 2.000000e+00 : f32
    %226 = vector.broadcast %cst_88 : f32 to vector<2x256xf32>
    %227 = arith.mulf %226, %225 : vector<2x256xf32>
    %228 = arith.select %5, %227, %225 : vector<2x256xi1>, vector<2x256xf32>
    %229 = arith.negf %228 : vector<2x256xf32>
    %230 = math.exp %229 : vector<2x256xf32>
    %cst_89 = arith.constant 1.000000e+00 : f32
    %231 = vector.broadcast %cst_89 : f32 to vector<2x256xf32>
    %232 = arith.addf %231, %230 : vector<2x256xf32>
    %233 = arith.divf %231, %232 : vector<2x256xf32>
    %cst_90 = arith.constant 2.000000e+00 : f32
    %234 = vector.broadcast %cst_90 : f32 to vector<2x256xf32>
    %235 = arith.mulf %234, %233 : vector<2x256xf32>
    %cst_91 = arith.constant 1.000000e+00 : f32
    %236 = vector.broadcast %cst_91 : f32 to vector<2x256xf32>
    %237 = arith.subf %235, %236 : vector<2x256xf32>
    %238 = arith.select %5, %237, %233 : vector<2x256xi1>, vector<2x256xf32>
    %239 = vector.extract_strided_slice %238 {offsets = [0, 0], sizes = [2, 64], strides = [1, 1]} : vector<2x256xf32> to vector<2x64xf32>
    %240 = vector.extract_strided_slice %238 {offsets = [0, 64], sizes = [2, 64], strides = [1, 1]} : vector<2x256xf32> to vector<2x64xf32>
    %241 = vector.extract_strided_slice %238 {offsets = [0, 128], sizes = [2, 64], strides = [1, 1]} : vector<2x256xf32> to vector<2x64xf32>
    %242 = vector.extract_strided_slice %238 {offsets = [0, 192], sizes = [2, 64], strides = [1, 1]} : vector<2x256xf32> to vector<2x64xf32>
    %243 = arith.mulf %240, %214 : vector<2x64xf32>
    %244 = arith.mulf %239, %241 : vector<2x64xf32>
    %245 = arith.addf %243, %244 : vector<2x64xf32>
    %246 = math.tanh %245 : vector<2x64xf32>
    %247 = arith.mulf %242, %246 : vector<2x64xf32>
    %248 = vector.extract_strided_slice %247 {offsets = [0, 0], sizes = [2, 32], strides = [1, 1]} : vector<2x64xf32> to vector<2x32xf32>
    %c12_92 = arith.constant 12 : index
    %c0_93 = arith.constant 0 : index
    %249 = vector.load %arg7[%c12_92, %c0_93] : memref<16x64xf32, #tpu.memory_space<vmem>>, vector<2x32xf32>
    tpu.vector_store %arg7[%c12_92, %c0_93], %248 {strides = array<i32>} : memref<16x64xf32, #tpu.memory_space<vmem>>, vector<2x32xf32>,
    %250 = vector.extract_strided_slice %247 {offsets = [0, 32], sizes = [2, 32], strides = [1, 1]} : vector<2x64xf32> to vector<2x32xf32>
    %c2_94 = arith.constant 2 : index
    %c32_95 = arith.constant 32 : index
    %251 = vector.load %arg7[%c2_94, %c32_95] : memref<16x64xf32, #tpu.memory_space<vmem>>, vector<2x32xf32>
    tpu.vector_store %arg7[%c2_94, %c32_95], %250 {strides = array<i32>} : memref<16x64xf32, #tpu.memory_space<vmem>>, vector<2x32xf32>,
    %c14_96 = arith.constant 14 : index
    %c0_97 = arith.constant 0 : index
    %252 = vector.load %arg6[%c14_96, %c0_97] : memref<16x256xf32, #tpu.memory_space<vmem>>, vector<2x256xf32>
    %c0_98 = arith.constant 0 : index
    %c0_99 = arith.constant 0 : index
    %253 = vector.load %arg6[%c0_98, %c0_99] : memref<16x256xf32, #tpu.memory_space<vmem>>, vector<2x256xf32>
    %254 = arith.select %23, %252, %253 : vector<2x256xi1>, vector<2x256xf32>
    %cst_100 = arith.constant dense<0.000000e+00> : vector<2x256xf32>
    %255 = tpu.matmul %247, %32, %cst_100 {dimension_numbers = #tpu.dot_dimension_numbers<[1], [0], [0], [1], [0, 0, 1, 1], [], []>} : vector<2x64xf32>, vector<64x256xf32>, vector<2x256xf32> -> vector<2x256xf32>
    %256 = arith.addf %254, %255 : vector<2x256xf32>
    %cst_101 = arith.constant 2.000000e+00 : f32
    %257 = vector.broadcast %cst_101 : f32 to vector<2x256xf32>
    %258 = arith.mulf %257, %256 : vector<2x256xf32>
    %259 = arith.select %5, %258, %256 : vector<2x256xi1>, vector<2x256xf32>
    %260 = arith.negf %259 : vector<2x256xf32>
    %261 = math.exp %260 : vector<2x256xf32>
    %cst_102 = arith.constant 1.000000e+00 : f32
    %262 = vector.broadcast %cst_102 : f32 to vector<2x256xf32>
    %263 = arith.addf %262, %261 : vector<2x256xf32>
    %264 = arith.divf %262, %263 : vector<2x256xf32>
    %cst_103 = arith.constant 2.000000e+00 : f32
    %265 = vector.broadcast %cst_103 : f32 to vector<2x256xf32>
    %266 = arith.mulf %265, %264 : vector<2x256xf32>
    %cst_104 = arith.constant 1.000000e+00 : f32
    %267 = vector.broadcast %cst_104 : f32 to vector<2x256xf32>
    %268 = arith.subf %266, %267 : vector<2x256xf32>
    %269 = arith.select %5, %268, %264 : vector<2x256xi1>, vector<2x256xf32>
    %270 = vector.extract_strided_slice %269 {offsets = [0, 0], sizes = [2, 64], strides = [1, 1]} : vector<2x256xf32> to vector<2x64xf32>
    %271 = vector.extract_strided_slice %269 {offsets = [0, 64], sizes = [2, 64], strides = [1, 1]} : vector<2x256xf32> to vector<2x64xf32>
    %272 = vector.extract_strided_slice %269 {offsets = [0, 128], sizes = [2, 64], strides = [1, 1]} : vector<2x256xf32> to vector<2x64xf32>
    %273 = vector.extract_strided_slice %269 {offsets = [0, 192], sizes = [2, 64], strides = [1, 1]} : vector<2x256xf32> to vector<2x64xf32>
    %274 = arith.mulf %271, %245 : vector<2x64xf32>
    %275 = arith.mulf %270, %272 : vector<2x64xf32>
    %276 = arith.addf %274, %275 : vector<2x64xf32>
    %277 = math.tanh %276 : vector<2x64xf32>
    %278 = arith.mulf %273, %277 : vector<2x64xf32>
    %279 = vector.extract_strided_slice %278 {offsets = [0, 0], sizes = [2, 32], strides = [1, 1]} : vector<2x64xf32> to vector<2x32xf32>
    %c14_105 = arith.constant 14 : index
    %c0_106 = arith.constant 0 : index
    %280 = vector.load %arg7[%c14_105, %c0_106] : memref<16x64xf32, #tpu.memory_space<vmem>>, vector<2x32xf32>
    tpu.vector_store %arg7[%c14_105, %c0_106], %279 {strides = array<i32>} : memref<16x64xf32, #tpu.memory_space<vmem>>, vector<2x32xf32>,
    %281 = vector.extract_strided_slice %278 {offsets = [0, 32], sizes = [2, 32], strides = [1, 1]} : vector<2x64xf32> to vector<2x32xf32>
    %c0_107 = arith.constant 0 : index
    %c32_108 = arith.constant 32 : index
    %282 = vector.load %arg7[%c0_107, %c32_108] : memref<16x64xf32, #tpu.memory_space<vmem>>, vector<2x32xf32>
    tpu.vector_store %arg7[%c0_107, %c32_108], %281 {strides = array<i32>} : memref<16x64xf32, #tpu.memory_space<vmem>>, vector<2x32xf32>,
    %c0_109 = arith.constant 0 : index
    %c0_110 = arith.constant 0 : index
    %283 = vector.load %arg7[%c0_109, %c0_110] : memref<16x64xf32, #tpu.memory_space<vmem>>, vector<16x64xf32>
    %c64 = arith.constant 64 : index
    %c0_111 = arith.constant 0 : index
    %284 = vector.load %arg3[%c64, %c0_111] : memref<200x256xf32, #tpu.memory_space<vmem>>, vector<64x256xf32>
    %cst_112 = arith.constant dense<0.000000e+00> : vector<16x256xf32>
    %285 = tpu.matmul %283, %284, %cst_112 {dimension_numbers = #tpu.dot_dimension_numbers<[1], [0], [0], [1], [0, 0, 1, 1], [], []>} : vector<16x64xf32>, vector<64x256xf32>, vector<16x256xf32> -> vector<16x256xf32>
    %c193 = arith.constant 193 : index
    %c0_113 = arith.constant 0 : index
    %286 = vector.load %arg3[%c193, %c0_113] : memref<200x256xf32, #tpu.memory_space<vmem>>, vector<1x256xf32>
    %287 = vector.broadcast %286 : vector<1x256xf32> to vector<16x256xf32>
    %288 = arith.addf %285, %287 : vector<16x256xf32>
    %c0_114 = arith.constant 0 : index
    %c0_115 = arith.constant 0 : index
    %289 = vector.load %arg6[%c0_114, %c0_115] : memref<16x256xf32, #tpu.memory_space<vmem>>, vector<16x256xf32>
    tpu.vector_store %arg6[%c0_114, %c0_115], %288 {strides = array<i32>} : memref<16x256xf32, #tpu.memory_space<vmem>>, vector<16x256xf32>,
    %c128 = arith.constant 128 : index
    %c0_116 = arith.constant 0 : index
    %290 = vector.load %arg3[%c128, %c0_116] : memref<200x256xf32, #tpu.memory_space<vmem>>, vector<64x256xf32>
    %cst_117 = arith.constant 0.000000e+00 : f32
    %291 = vector.broadcast %cst_117 : f32 to vector<2x64xf32>
    %cst_118 = arith.constant 0.000000e+00 : f32
    %292 = vector.broadcast %cst_118 : f32 to vector<2x64xf32>
    %c0_119 = arith.constant 0 : index
    %c0_120 = arith.constant 0 : index
    %293 = vector.load %arg6[%c0_119, %c0_120] : memref<16x256xf32, #tpu.memory_space<vmem>>, vector<2x256xf32>
    %c14_121 = arith.constant 14 : index
    %c0_122 = arith.constant 0 : index
    %294 = vector.load %arg6[%c14_121, %c0_122] : memref<16x256xf32, #tpu.memory_space<vmem>>, vector<2x256xf32>
    %295 = arith.select %23, %293, %294 : vector<2x256xi1>, vector<2x256xf32>
    %cst_123 = arith.constant dense<0.000000e+00> : vector<2x256xf32>
    %296 = tpu.matmul %291, %290, %cst_123 {dimension_numbers = #tpu.dot_dimension_numbers<[1], [0], [0], [1], [0, 0, 1, 1], [], []>} : vector<2x64xf32>, vector<64x256xf32>, vector<2x256xf32> -> vector<2x256xf32>
    %297 = arith.addf %295, %296 : vector<2x256xf32>
    %cst_124 = arith.constant 2.000000e+00 : f32
    %298 = vector.broadcast %cst_124 : f32 to vector<2x256xf32>
    %299 = arith.mulf %298, %297 : vector<2x256xf32>
    %300 = arith.select %5, %299, %297 : vector<2x256xi1>, vector<2x256xf32>
    %301 = arith.negf %300 : vector<2x256xf32>
    %302 = math.exp %301 : vector<2x256xf32>
    %cst_125 = arith.constant 1.000000e+00 : f32
    %303 = vector.broadcast %cst_125 : f32 to vector<2x256xf32>
    %304 = arith.addf %303, %302 : vector<2x256xf32>
    %305 = arith.divf %303, %304 : vector<2x256xf32>
    %cst_126 = arith.constant 2.000000e+00 : f32
    %306 = vector.broadcast %cst_126 : f32 to vector<2x256xf32>
    %307 = arith.mulf %306, %305 : vector<2x256xf32>
    %cst_127 = arith.constant 1.000000e+00 : f32
    %308 = vector.broadcast %cst_127 : f32 to vector<2x256xf32>
    %309 = arith.subf %307, %308 : vector<2x256xf32>
    %310 = arith.select %5, %309, %305 : vector<2x256xi1>, vector<2x256xf32>
    %311 = vector.extract_strided_slice %310 {offsets = [0, 0], sizes = [2, 64], strides = [1, 1]} : vector<2x256xf32> to vector<2x64xf32>
    %312 = vector.extract_strided_slice %310 {offsets = [0, 64], sizes = [2, 64], strides = [1, 1]} : vector<2x256xf32> to vector<2x64xf32>
    %313 = vector.extract_strided_slice %310 {offsets = [0, 128], sizes = [2, 64], strides = [1, 1]} : vector<2x256xf32> to vector<2x64xf32>
    %314 = vector.extract_strided_slice %310 {offsets = [0, 192], sizes = [2, 64], strides = [1, 1]} : vector<2x256xf32> to vector<2x64xf32>
    %315 = arith.mulf %312, %292 : vector<2x64xf32>
    %316 = arith.mulf %311, %313 : vector<2x64xf32>
    %317 = arith.addf %315, %316 : vector<2x64xf32>
    %318 = math.tanh %317 : vector<2x64xf32>
    %319 = arith.mulf %314, %318 : vector<2x64xf32>
    %320 = vector.extract_strided_slice %319 {offsets = [0, 0], sizes = [2, 32], strides = [1, 1]} : vector<2x64xf32> to vector<2x32xf32>
    %c0_128 = arith.constant 0 : index
    %c0_129 = arith.constant 0 : index
    %321 = vector.load %arg8[%c0_128, %c0_129] : memref<16x64xf32, #tpu.memory_space<vmem>>, vector<2x32xf32>
    tpu.vector_store %arg8[%c0_128, %c0_129], %320 {strides = array<i32>} : memref<16x64xf32, #tpu.memory_space<vmem>>, vector<2x32xf32>,
    %322 = vector.extract_strided_slice %319 {offsets = [0, 32], sizes = [2, 32], strides = [1, 1]} : vector<2x64xf32> to vector<2x32xf32>
    %c14_130 = arith.constant 14 : index
    %c32_131 = arith.constant 32 : index
    %323 = vector.load %arg8[%c14_130, %c32_131] : memref<16x64xf32, #tpu.memory_space<vmem>>, vector<2x32xf32>
    tpu.vector_store %arg8[%c14_130, %c32_131], %322 {strides = array<i32>} : memref<16x64xf32, #tpu.memory_space<vmem>>, vector<2x32xf32>,
    %c2_132 = arith.constant 2 : index
    %c0_133 = arith.constant 0 : index
    %324 = vector.load %arg6[%c2_132, %c0_133] : memref<16x256xf32, #tpu.memory_space<vmem>>, vector<2x256xf32>
    %c12_134 = arith.constant 12 : index
    %c0_135 = arith.constant 0 : index
    %325 = vector.load %arg6[%c12_134, %c0_135] : memref<16x256xf32, #tpu.memory_space<vmem>>, vector<2x256xf32>
    %326 = arith.select %23, %324, %325 : vector<2x256xi1>, vector<2x256xf32>
    %cst_136 = arith.constant dense<0.000000e+00> : vector<2x256xf32>
    %327 = tpu.matmul %319, %290, %cst_136 {dimension_numbers = #tpu.dot_dimension_numbers<[1], [0], [0], [1], [0, 0, 1, 1], [], []>} : vector<2x64xf32>, vector<64x256xf32>, vector<2x256xf32> -> vector<2x256xf32>
    %328 = arith.addf %326, %327 : vector<2x256xf32>
    %cst_137 = arith.constant 2.000000e+00 : f32
    %329 = vector.broadcast %cst_137 : f32 to vector<2x256xf32>
    %330 = arith.mulf %329, %328 : vector<2x256xf32>
    %331 = arith.select %5, %330, %328 : vector<2x256xi1>, vector<2x256xf32>
    %332 = arith.negf %331 : vector<2x256xf32>
    %333 = math.exp %332 : vector<2x256xf32>
    %cst_138 = arith.constant 1.000000e+00 : f32
    %334 = vector.broadcast %cst_138 : f32 to vector<2x256xf32>
    %335 = arith.addf %334, %333 : vector<2x256xf32>
    %336 = arith.divf %334, %335 : vector<2x256xf32>
    %cst_139 = arith.constant 2.000000e+00 : f32
    %337 = vector.broadcast %cst_139 : f32 to vector<2x256xf32>
    %338 = arith.mulf %337, %336 : vector<2x256xf32>
    %cst_140 = arith.constant 1.000000e+00 : f32
    %339 = vector.broadcast %cst_140 : f32 to vector<2x256xf32>
    %340 = arith.subf %338, %339 : vector<2x256xf32>
    %341 = arith.select %5, %340, %336 : vector<2x256xi1>, vector<2x256xf32>
    %342 = vector.extract_strided_slice %341 {offsets = [0, 0], sizes = [2, 64], strides = [1, 1]} : vector<2x256xf32> to vector<2x64xf32>
    %343 = vector.extract_strided_slice %341 {offsets = [0, 64], sizes = [2, 64], strides = [1, 1]} : vector<2x256xf32> to vector<2x64xf32>
    %344 = vector.extract_strided_slice %341 {offsets = [0, 128], sizes = [2, 64], strides = [1, 1]} : vector<2x256xf32> to vector<2x64xf32>
    %345 = vector.extract_strided_slice %341 {offsets = [0, 192], sizes = [2, 64], strides = [1, 1]} : vector<2x256xf32> to vector<2x64xf32>
    %346 = arith.mulf %343, %317 : vector<2x64xf32>
    %347 = arith.mulf %342, %344 : vector<2x64xf32>
    %348 = arith.addf %346, %347 : vector<2x64xf32>
    %349 = math.tanh %348 : vector<2x64xf32>
    %350 = arith.mulf %345, %349 : vector<2x64xf32>
    %351 = vector.extract_strided_slice %350 {offsets = [0, 0], sizes = [2, 32], strides = [1, 1]} : vector<2x64xf32> to vector<2x32xf32>
    %c2_141 = arith.constant 2 : index
    %c0_142 = arith.constant 0 : index
    %352 = vector.load %arg8[%c2_141, %c0_142] : memref<16x64xf32, #tpu.memory_space<vmem>>, vector<2x32xf32>
    tpu.vector_store %arg8[%c2_141, %c0_142], %351 {strides = array<i32>} : memref<16x64xf32, #tpu.memory_space<vmem>>, vector<2x32xf32>,
    %353 = vector.extract_strided_slice %350 {offsets = [0, 32], sizes = [2, 32], strides = [1, 1]} : vector<2x64xf32> to vector<2x32xf32>
    %c12_143 = arith.constant 12 : index
    %c32_144 = arith.constant 32 : index
    %354 = vector.load %arg8[%c12_143, %c32_144] : memref<16x64xf32, #tpu.memory_space<vmem>>, vector<2x32xf32>
    tpu.vector_store %arg8[%c12_143, %c32_144], %353 {strides = array<i32>} : memref<16x64xf32, #tpu.memory_space<vmem>>, vector<2x32xf32>,
    %c4_145 = arith.constant 4 : index
    %c0_146 = arith.constant 0 : index
    %355 = vector.load %arg6[%c4_145, %c0_146] : memref<16x256xf32, #tpu.memory_space<vmem>>, vector<2x256xf32>
    %c10_147 = arith.constant 10 : index
    %c0_148 = arith.constant 0 : index
    %356 = vector.load %arg6[%c10_147, %c0_148] : memref<16x256xf32, #tpu.memory_space<vmem>>, vector<2x256xf32>
    %357 = arith.select %23, %355, %356 : vector<2x256xi1>, vector<2x256xf32>
    %cst_149 = arith.constant dense<0.000000e+00> : vector<2x256xf32>
    %358 = tpu.matmul %350, %290, %cst_149 {dimension_numbers = #tpu.dot_dimension_numbers<[1], [0], [0], [1], [0, 0, 1, 1], [], []>} : vector<2x64xf32>, vector<64x256xf32>, vector<2x256xf32> -> vector<2x256xf32>
    %359 = arith.addf %357, %358 : vector<2x256xf32>
    %cst_150 = arith.constant 2.000000e+00 : f32
    %360 = vector.broadcast %cst_150 : f32 to vector<2x256xf32>
    %361 = arith.mulf %360, %359 : vector<2x256xf32>
    %362 = arith.select %5, %361, %359 : vector<2x256xi1>, vector<2x256xf32>
    %363 = arith.negf %362 : vector<2x256xf32>
    %364 = math.exp %363 : vector<2x256xf32>
    %cst_151 = arith.constant 1.000000e+00 : f32
    %365 = vector.broadcast %cst_151 : f32 to vector<2x256xf32>
    %366 = arith.addf %365, %364 : vector<2x256xf32>
    %367 = arith.divf %365, %366 : vector<2x256xf32>
    %cst_152 = arith.constant 2.000000e+00 : f32
    %368 = vector.broadcast %cst_152 : f32 to vector<2x256xf32>
    %369 = arith.mulf %368, %367 : vector<2x256xf32>
    %cst_153 = arith.constant 1.000000e+00 : f32
    %370 = vector.broadcast %cst_153 : f32 to vector<2x256xf32>
    %371 = arith.subf %369, %370 : vector<2x256xf32>
    %372 = arith.select %5, %371, %367 : vector<2x256xi1>, vector<2x256xf32>
    %373 = vector.extract_strided_slice %372 {offsets = [0, 0], sizes = [2, 64], strides = [1, 1]} : vector<2x256xf32> to vector<2x64xf32>
    %374 = vector.extract_strided_slice %372 {offsets = [0, 64], sizes = [2, 64], strides = [1, 1]} : vector<2x256xf32> to vector<2x64xf32>
    %375 = vector.extract_strided_slice %372 {offsets = [0, 128], sizes = [2, 64], strides = [1, 1]} : vector<2x256xf32> to vector<2x64xf32>
    %376 = vector.extract_strided_slice %372 {offsets = [0, 192], sizes = [2, 64], strides = [1, 1]} : vector<2x256xf32> to vector<2x64xf32>
    %377 = arith.mulf %374, %348 : vector<2x64xf32>
    %378 = arith.mulf %373, %375 : vector<2x64xf32>
    %379 = arith.addf %377, %378 : vector<2x64xf32>
    %380 = math.tanh %379 : vector<2x64xf32>
    %381 = arith.mulf %376, %380 : vector<2x64xf32>
    %382 = vector.extract_strided_slice %381 {offsets = [0, 0], sizes = [2, 32], strides = [1, 1]} : vector<2x64xf32> to vector<2x32xf32>
    %c4_154 = arith.constant 4 : index
    %c0_155 = arith.constant 0 : index
    %383 = vector.load %arg8[%c4_154, %c0_155] : memref<16x64xf32, #tpu.memory_space<vmem>>, vector<2x32xf32>
    tpu.vector_store %arg8[%c4_154, %c0_155], %382 {strides = array<i32>} : memref<16x64xf32, #tpu.memory_space<vmem>>, vector<2x32xf32>,
    %384 = vector.extract_strided_slice %381 {offsets = [0, 32], sizes = [2, 32], strides = [1, 1]} : vector<2x64xf32> to vector<2x32xf32>
    %c10_156 = arith.constant 10 : index
    %c32_157 = arith.constant 32 : index
    %385 = vector.load %arg8[%c10_156, %c32_157] : memref<16x64xf32, #tpu.memory_space<vmem>>, vector<2x32xf32>
    tpu.vector_store %arg8[%c10_156, %c32_157], %384 {strides = array<i32>} : memref<16x64xf32, #tpu.memory_space<vmem>>, vector<2x32xf32>,
    %c6_158 = arith.constant 6 : index
    %c0_159 = arith.constant 0 : index
    %386 = vector.load %arg6[%c6_158, %c0_159] : memref<16x256xf32, #tpu.memory_space<vmem>>, vector<2x256xf32>
    %c8_160 = arith.constant 8 : index
    %c0_161 = arith.constant 0 : index
    %387 = vector.load %arg6[%c8_160, %c0_161] : memref<16x256xf32, #tpu.memory_space<vmem>>, vector<2x256xf32>
    %388 = arith.select %23, %386, %387 : vector<2x256xi1>, vector<2x256xf32>
    %cst_162 = arith.constant dense<0.000000e+00> : vector<2x256xf32>
    %389 = tpu.matmul %381, %290, %cst_162 {dimension_numbers = #tpu.dot_dimension_numbers<[1], [0], [0], [1], [0, 0, 1, 1], [], []>} : vector<2x64xf32>, vector<64x256xf32>, vector<2x256xf32> -> vector<2x256xf32>
    %390 = arith.addf %388, %389 : vector<2x256xf32>
    %cst_163 = arith.constant 2.000000e+00 : f32
    %391 = vector.broadcast %cst_163 : f32 to vector<2x256xf32>
    %392 = arith.mulf %391, %390 : vector<2x256xf32>
    %393 = arith.select %5, %392, %390 : vector<2x256xi1>, vector<2x256xf32>
    %394 = arith.negf %393 : vector<2x256xf32>
    %395 = math.exp %394 : vector<2x256xf32>
    %cst_164 = arith.constant 1.000000e+00 : f32
    %396 = vector.broadcast %cst_164 : f32 to vector<2x256xf32>
    %397 = arith.addf %396, %395 : vector<2x256xf32>
    %398 = arith.divf %396, %397 : vector<2x256xf32>
    %cst_165 = arith.constant 2.000000e+00 : f32
    %399 = vector.broadcast %cst_165 : f32 to vector<2x256xf32>
    %400 = arith.mulf %399, %398 : vector<2x256xf32>
    %cst_166 = arith.constant 1.000000e+00 : f32
    %401 = vector.broadcast %cst_166 : f32 to vector<2x256xf32>
    %402 = arith.subf %400, %401 : vector<2x256xf32>
    %403 = arith.select %5, %402, %398 : vector<2x256xi1>, vector<2x256xf32>
    %404 = vector.extract_strided_slice %403 {offsets = [0, 0], sizes = [2, 64], strides = [1, 1]} : vector<2x256xf32> to vector<2x64xf32>
    %405 = vector.extract_strided_slice %403 {offsets = [0, 64], sizes = [2, 64], strides = [1, 1]} : vector<2x256xf32> to vector<2x64xf32>
    %406 = vector.extract_strided_slice %403 {offsets = [0, 128], sizes = [2, 64], strides = [1, 1]} : vector<2x256xf32> to vector<2x64xf32>
    %407 = vector.extract_strided_slice %403 {offsets = [0, 192], sizes = [2, 64], strides = [1, 1]} : vector<2x256xf32> to vector<2x64xf32>
    %408 = arith.mulf %405, %379 : vector<2x64xf32>
    %409 = arith.mulf %404, %406 : vector<2x64xf32>
    %410 = arith.addf %408, %409 : vector<2x64xf32>
    %411 = math.tanh %410 : vector<2x64xf32>
    %412 = arith.mulf %407, %411 : vector<2x64xf32>
    %413 = vector.extract_strided_slice %412 {offsets = [0, 0], sizes = [2, 32], strides = [1, 1]} : vector<2x64xf32> to vector<2x32xf32>
    %c6_167 = arith.constant 6 : index
    %c0_168 = arith.constant 0 : index
    %414 = vector.load %arg8[%c6_167, %c0_168] : memref<16x64xf32, #tpu.memory_space<vmem>>, vector<2x32xf32>
    tpu.vector_store %arg8[%c6_167, %c0_168], %413 {strides = array<i32>} : memref<16x64xf32, #tpu.memory_space<vmem>>, vector<2x32xf32>,
    %415 = vector.extract_strided_slice %412 {offsets = [0, 32], sizes = [2, 32], strides = [1, 1]} : vector<2x64xf32> to vector<2x32xf32>
    %c8_169 = arith.constant 8 : index
    %c32_170 = arith.constant 32 : index
    %416 = vector.load %arg8[%c8_169, %c32_170] : memref<16x64xf32, #tpu.memory_space<vmem>>, vector<2x32xf32>
    tpu.vector_store %arg8[%c8_169, %c32_170], %415 {strides = array<i32>} : memref<16x64xf32, #tpu.memory_space<vmem>>, vector<2x32xf32>,
    %c8_171 = arith.constant 8 : index
    %c0_172 = arith.constant 0 : index
    %417 = vector.load %arg6[%c8_171, %c0_172] : memref<16x256xf32, #tpu.memory_space<vmem>>, vector<2x256xf32>
    %c6_173 = arith.constant 6 : index
    %c0_174 = arith.constant 0 : index
    %418 = vector.load %arg6[%c6_173, %c0_174] : memref<16x256xf32, #tpu.memory_space<vmem>>, vector<2x256xf32>
    %419 = arith.select %23, %417, %418 : vector<2x256xi1>, vector<2x256xf32>
    %cst_175 = arith.constant dense<0.000000e+00> : vector<2x256xf32>
    %420 = tpu.matmul %412, %290, %cst_175 {dimension_numbers = #tpu.dot_dimension_numbers<[1], [0], [0], [1], [0, 0, 1, 1], [], []>} : vector<2x64xf32>, vector<64x256xf32>, vector<2x256xf32> -> vector<2x256xf32>
    %421 = arith.addf %419, %420 : vector<2x256xf32>
    %cst_176 = arith.constant 2.000000e+00 : f32
    %422 = vector.broadcast %cst_176 : f32 to vector<2x256xf32>
    %423 = arith.mulf %422, %421 : vector<2x256xf32>
    %424 = arith.select %5, %423, %421 : vector<2x256xi1>, vector<2x256xf32>
    %425 = arith.negf %424 : vector<2x256xf32>
    %426 = math.exp %425 : vector<2x256xf32>
    %cst_177 = arith.constant 1.000000e+00 : f32
    %427 = vector.broadcast %cst_177 : f32 to vector<2x256xf32>
    %428 = arith.addf %427, %426 : vector<2x256xf32>
    %429 = arith.divf %427, %428 : vector<2x256xf32>
    %cst_178 = arith.constant 2.000000e+00 : f32
    %430 = vector.broadcast %cst_178 : f32 to vector<2x256xf32>
    %431 = arith.mulf %430, %429 : vector<2x256xf32>
    %cst_179 = arith.constant 1.000000e+00 : f32
    %432 = vector.broadcast %cst_179 : f32 to vector<2x256xf32>
    %433 = arith.subf %431, %432 : vector<2x256xf32>
    %434 = arith.select %5, %433, %429 : vector<2x256xi1>, vector<2x256xf32>
    %435 = vector.extract_strided_slice %434 {offsets = [0, 0], sizes = [2, 64], strides = [1, 1]} : vector<2x256xf32> to vector<2x64xf32>
    %436 = vector.extract_strided_slice %434 {offsets = [0, 64], sizes = [2, 64], strides = [1, 1]} : vector<2x256xf32> to vector<2x64xf32>
    %437 = vector.extract_strided_slice %434 {offsets = [0, 128], sizes = [2, 64], strides = [1, 1]} : vector<2x256xf32> to vector<2x64xf32>
    %438 = vector.extract_strided_slice %434 {offsets = [0, 192], sizes = [2, 64], strides = [1, 1]} : vector<2x256xf32> to vector<2x64xf32>
    %439 = arith.mulf %436, %410 : vector<2x64xf32>
    %440 = arith.mulf %435, %437 : vector<2x64xf32>
    %441 = arith.addf %439, %440 : vector<2x64xf32>
    %442 = math.tanh %441 : vector<2x64xf32>
    %443 = arith.mulf %438, %442 : vector<2x64xf32>
    %444 = vector.extract_strided_slice %443 {offsets = [0, 0], sizes = [2, 32], strides = [1, 1]} : vector<2x64xf32> to vector<2x32xf32>
    %c8_180 = arith.constant 8 : index
    %c0_181 = arith.constant 0 : index
    %445 = vector.load %arg8[%c8_180, %c0_181] : memref<16x64xf32, #tpu.memory_space<vmem>>, vector<2x32xf32>
    tpu.vector_store %arg8[%c8_180, %c0_181], %444 {strides = array<i32>} : memref<16x64xf32, #tpu.memory_space<vmem>>, vector<2x32xf32>,
    %446 = vector.extract_strided_slice %443 {offsets = [0, 32], sizes = [2, 32], strides = [1, 1]} : vector<2x64xf32> to vector<2x32xf32>
    %c6_182 = arith.constant 6 : index
    %c32_183 = arith.constant 32 : index
    %447 = vector.load %arg8[%c6_182, %c32_183] : memref<16x64xf32, #tpu.memory_space<vmem>>, vector<2x32xf32>
    tpu.vector_store %arg8[%c6_182, %c32_183], %446 {strides = array<i32>} : memref<16x64xf32, #tpu.memory_space<vmem>>, vector<2x32xf32>,
    %c10_184 = arith.constant 10 : index
    %c0_185 = arith.constant 0 : index
    %448 = vector.load %arg6[%c10_184, %c0_185] : memref<16x256xf32, #tpu.memory_space<vmem>>, vector<2x256xf32>
    %c4_186 = arith.constant 4 : index
    %c0_187 = arith.constant 0 : index
    %449 = vector.load %arg6[%c4_186, %c0_187] : memref<16x256xf32, #tpu.memory_space<vmem>>, vector<2x256xf32>
    %450 = arith.select %23, %448, %449 : vector<2x256xi1>, vector<2x256xf32>
    %cst_188 = arith.constant dense<0.000000e+00> : vector<2x256xf32>
    %451 = tpu.matmul %443, %290, %cst_188 {dimension_numbers = #tpu.dot_dimension_numbers<[1], [0], [0], [1], [0, 0, 1, 1], [], []>} : vector<2x64xf32>, vector<64x256xf32>, vector<2x256xf32> -> vector<2x256xf32>
    %452 = arith.addf %450, %451 : vector<2x256xf32>
    %cst_189 = arith.constant 2.000000e+00 : f32
    %453 = vector.broadcast %cst_189 : f32 to vector<2x256xf32>
    %454 = arith.mulf %453, %452 : vector<2x256xf32>
    %455 = arith.select %5, %454, %452 : vector<2x256xi1>, vector<2x256xf32>
    %456 = arith.negf %455 : vector<2x256xf32>
    %457 = math.exp %456 : vector<2x256xf32>
    %cst_190 = arith.constant 1.000000e+00 : f32
    %458 = vector.broadcast %cst_190 : f32 to vector<2x256xf32>
    %459 = arith.addf %458, %457 : vector<2x256xf32>
    %460 = arith.divf %458, %459 : vector<2x256xf32>
    %cst_191 = arith.constant 2.000000e+00 : f32
    %461 = vector.broadcast %cst_191 : f32 to vector<2x256xf32>
    %462 = arith.mulf %461, %460 : vector<2x256xf32>
    %cst_192 = arith.constant 1.000000e+00 : f32
    %463 = vector.broadcast %cst_192 : f32 to vector<2x256xf32>
    %464 = arith.subf %462, %463 : vector<2x256xf32>
    %465 = arith.select %5, %464, %460 : vector<2x256xi1>, vector<2x256xf32>
    %466 = vector.extract_strided_slice %465 {offsets = [0, 0], sizes = [2, 64], strides = [1, 1]} : vector<2x256xf32> to vector<2x64xf32>
    %467 = vector.extract_strided_slice %465 {offsets = [0, 64], sizes = [2, 64], strides = [1, 1]} : vector<2x256xf32> to vector<2x64xf32>
    %468 = vector.extract_strided_slice %465 {offsets = [0, 128], sizes = [2, 64], strides = [1, 1]} : vector<2x256xf32> to vector<2x64xf32>
    %469 = vector.extract_strided_slice %465 {offsets = [0, 192], sizes = [2, 64], strides = [1, 1]} : vector<2x256xf32> to vector<2x64xf32>
    %470 = arith.mulf %467, %441 : vector<2x64xf32>
    %471 = arith.mulf %466, %468 : vector<2x64xf32>
    %472 = arith.addf %470, %471 : vector<2x64xf32>
    %473 = math.tanh %472 : vector<2x64xf32>
    %474 = arith.mulf %469, %473 : vector<2x64xf32>
    %475 = vector.extract_strided_slice %474 {offsets = [0, 0], sizes = [2, 32], strides = [1, 1]} : vector<2x64xf32> to vector<2x32xf32>
    %c10_193 = arith.constant 10 : index
    %c0_194 = arith.constant 0 : index
    %476 = vector.load %arg8[%c10_193, %c0_194] : memref<16x64xf32, #tpu.memory_space<vmem>>, vector<2x32xf32>
    tpu.vector_store %arg8[%c10_193, %c0_194], %475 {strides = array<i32>} : memref<16x64xf32, #tpu.memory_space<vmem>>, vector<2x32xf32>,
    %477 = vector.extract_strided_slice %474 {offsets = [0, 32], sizes = [2, 32], strides = [1, 1]} : vector<2x64xf32> to vector<2x32xf32>
    %c4_195 = arith.constant 4 : index
    %c32_196 = arith.constant 32 : index
    %478 = vector.load %arg8[%c4_195, %c32_196] : memref<16x64xf32, #tpu.memory_space<vmem>>, vector<2x32xf32>
    tpu.vector_store %arg8[%c4_195, %c32_196], %477 {strides = array<i32>} : memref<16x64xf32, #tpu.memory_space<vmem>>, vector<2x32xf32>,
    %c12_197 = arith.constant 12 : index
    %c0_198 = arith.constant 0 : index
    %479 = vector.load %arg6[%c12_197, %c0_198] : memref<16x256xf32, #tpu.memory_space<vmem>>, vector<2x256xf32>
    %c2_199 = arith.constant 2 : index
    %c0_200 = arith.constant 0 : index
    %480 = vector.load %arg6[%c2_199, %c0_200] : memref<16x256xf32, #tpu.memory_space<vmem>>, vector<2x256xf32>
    %481 = arith.select %23, %479, %480 : vector<2x256xi1>, vector<2x256xf32>
    %cst_201 = arith.constant dense<0.000000e+00> : vector<2x256xf32>
    %482 = tpu.matmul %474, %290, %cst_201 {dimension_numbers = #tpu.dot_dimension_numbers<[1], [0], [0], [1], [0, 0, 1, 1], [], []>} : vector<2x64xf32>, vector<64x256xf32>, vector<2x256xf32> -> vector<2x256xf32>
    %483 = arith.addf %481, %482 : vector<2x256xf32>
    %cst_202 = arith.constant 2.000000e+00 : f32
    %484 = vector.broadcast %cst_202 : f32 to vector<2x256xf32>
    %485 = arith.mulf %484, %483 : vector<2x256xf32>
    %486 = arith.select %5, %485, %483 : vector<2x256xi1>, vector<2x256xf32>
    %487 = arith.negf %486 : vector<2x256xf32>
    %488 = math.exp %487 : vector<2x256xf32>
    %cst_203 = arith.constant 1.000000e+00 : f32
    %489 = vector.broadcast %cst_203 : f32 to vector<2x256xf32>
    %490 = arith.addf %489, %488 : vector<2x256xf32>
    %491 = arith.divf %489, %490 : vector<2x256xf32>
    %cst_204 = arith.constant 2.000000e+00 : f32
    %492 = vector.broadcast %cst_204 : f32 to vector<2x256xf32>
    %493 = arith.mulf %492, %491 : vector<2x256xf32>
    %cst_205 = arith.constant 1.000000e+00 : f32
    %494 = vector.broadcast %cst_205 : f32 to vector<2x256xf32>
    %495 = arith.subf %493, %494 : vector<2x256xf32>
    %496 = arith.select %5, %495, %491 : vector<2x256xi1>, vector<2x256xf32>
    %497 = vector.extract_strided_slice %496 {offsets = [0, 0], sizes = [2, 64], strides = [1, 1]} : vector<2x256xf32> to vector<2x64xf32>
    %498 = vector.extract_strided_slice %496 {offsets = [0, 64], sizes = [2, 64], strides = [1, 1]} : vector<2x256xf32> to vector<2x64xf32>
    %499 = vector.extract_strided_slice %496 {offsets = [0, 128], sizes = [2, 64], strides = [1, 1]} : vector<2x256xf32> to vector<2x64xf32>
    %500 = vector.extract_strided_slice %496 {offsets = [0, 192], sizes = [2, 64], strides = [1, 1]} : vector<2x256xf32> to vector<2x64xf32>
    %501 = arith.mulf %498, %472 : vector<2x64xf32>
    %502 = arith.mulf %497, %499 : vector<2x64xf32>
    %503 = arith.addf %501, %502 : vector<2x64xf32>
    %504 = math.tanh %503 : vector<2x64xf32>
    %505 = arith.mulf %500, %504 : vector<2x64xf32>
    %506 = vector.extract_strided_slice %505 {offsets = [0, 0], sizes = [2, 32], strides = [1, 1]} : vector<2x64xf32> to vector<2x32xf32>
    %c12_206 = arith.constant 12 : index
    %c0_207 = arith.constant 0 : index
    %507 = vector.load %arg8[%c12_206, %c0_207] : memref<16x64xf32, #tpu.memory_space<vmem>>, vector<2x32xf32>
    tpu.vector_store %arg8[%c12_206, %c0_207], %506 {strides = array<i32>} : memref<16x64xf32, #tpu.memory_space<vmem>>, vector<2x32xf32>,
    %508 = vector.extract_strided_slice %505 {offsets = [0, 32], sizes = [2, 32], strides = [1, 1]} : vector<2x64xf32> to vector<2x32xf32>
    %c2_208 = arith.constant 2 : index
    %c32_209 = arith.constant 32 : index
    %509 = vector.load %arg8[%c2_208, %c32_209] : memref<16x64xf32, #tpu.memory_space<vmem>>, vector<2x32xf32>
    tpu.vector_store %arg8[%c2_208, %c32_209], %508 {strides = array<i32>} : memref<16x64xf32, #tpu.memory_space<vmem>>, vector<2x32xf32>,
    %c14_210 = arith.constant 14 : index
    %c0_211 = arith.constant 0 : index
    %510 = vector.load %arg6[%c14_210, %c0_211] : memref<16x256xf32, #tpu.memory_space<vmem>>, vector<2x256xf32>
    %c0_212 = arith.constant 0 : index
    %c0_213 = arith.constant 0 : index
    %511 = vector.load %arg6[%c0_212, %c0_213] : memref<16x256xf32, #tpu.memory_space<vmem>>, vector<2x256xf32>
    %512 = arith.select %23, %510, %511 : vector<2x256xi1>, vector<2x256xf32>
    %cst_214 = arith.constant dense<0.000000e+00> : vector<2x256xf32>
    %513 = tpu.matmul %505, %290, %cst_214 {dimension_numbers = #tpu.dot_dimension_numbers<[1], [0], [0], [1], [0, 0, 1, 1], [], []>} : vector<2x64xf32>, vector<64x256xf32>, vector<2x256xf32> -> vector<2x256xf32>
    %514 = arith.addf %512, %513 : vector<2x256xf32>
    %cst_215 = arith.constant 2.000000e+00 : f32
    %515 = vector.broadcast %cst_215 : f32 to vector<2x256xf32>
    %516 = arith.mulf %515, %514 : vector<2x256xf32>
    %517 = arith.select %5, %516, %514 : vector<2x256xi1>, vector<2x256xf32>
    %518 = arith.negf %517 : vector<2x256xf32>
    %519 = math.exp %518 : vector<2x256xf32>
    %cst_216 = arith.constant 1.000000e+00 : f32
    %520 = vector.broadcast %cst_216 : f32 to vector<2x256xf32>
    %521 = arith.addf %520, %519 : vector<2x256xf32>
    %522 = arith.divf %520, %521 : vector<2x256xf32>
    %cst_217 = arith.constant 2.000000e+00 : f32
    %523 = vector.broadcast %cst_217 : f32 to vector<2x256xf32>
    %524 = arith.mulf %523, %522 : vector<2x256xf32>
    %cst_218 = arith.constant 1.000000e+00 : f32
    %525 = vector.broadcast %cst_218 : f32 to vector<2x256xf32>
    %526 = arith.subf %524, %525 : vector<2x256xf32>
    %527 = arith.select %5, %526, %522 : vector<2x256xi1>, vector<2x256xf32>
    %528 = vector.extract_strided_slice %527 {offsets = [0, 0], sizes = [2, 64], strides = [1, 1]} : vector<2x256xf32> to vector<2x64xf32>
    %529 = vector.extract_strided_slice %527 {offsets = [0, 64], sizes = [2, 64], strides = [1, 1]} : vector<2x256xf32> to vector<2x64xf32>
    %530 = vector.extract_strided_slice %527 {offsets = [0, 128], sizes = [2, 64], strides = [1, 1]} : vector<2x256xf32> to vector<2x64xf32>
    %531 = vector.extract_strided_slice %527 {offsets = [0, 192], sizes = [2, 64], strides = [1, 1]} : vector<2x256xf32> to vector<2x64xf32>
    %532 = arith.mulf %529, %503 : vector<2x64xf32>
    %533 = arith.mulf %528, %530 : vector<2x64xf32>
    %534 = arith.addf %532, %533 : vector<2x64xf32>
    %535 = math.tanh %534 : vector<2x64xf32>
    %536 = arith.mulf %531, %535 : vector<2x64xf32>
    %537 = vector.extract_strided_slice %536 {offsets = [0, 0], sizes = [2, 32], strides = [1, 1]} : vector<2x64xf32> to vector<2x32xf32>
    %c14_219 = arith.constant 14 : index
    %c0_220 = arith.constant 0 : index
    %538 = vector.load %arg8[%c14_219, %c0_220] : memref<16x64xf32, #tpu.memory_space<vmem>>, vector<2x32xf32>
    tpu.vector_store %arg8[%c14_219, %c0_220], %537 {strides = array<i32>} : memref<16x64xf32, #tpu.memory_space<vmem>>, vector<2x32xf32>,
    %539 = vector.extract_strided_slice %536 {offsets = [0, 32], sizes = [2, 32], strides = [1, 1]} : vector<2x64xf32> to vector<2x32xf32>
    %c0_221 = arith.constant 0 : index
    %c32_222 = arith.constant 32 : index
    %540 = vector.load %arg8[%c0_221, %c32_222] : memref<16x64xf32, #tpu.memory_space<vmem>>, vector<2x32xf32>
    tpu.vector_store %arg8[%c0_221, %c32_222], %539 {strides = array<i32>} : memref<16x64xf32, #tpu.memory_space<vmem>>, vector<2x32xf32>,
    %c0_223 = arith.constant 0 : index
    %c0_224 = arith.constant 0 : index
    %541 = vector.load %arg8[%c0_223, %c0_224] : memref<16x64xf32, #tpu.memory_space<vmem>>, vector<16x64xf32>
    %c0_225 = arith.constant 0 : index
    %c0_226 = arith.constant 0 : index
    %542 = vector.load %arg4[%c0_225, %c0_226] : memref<80x6xf32, #tpu.memory_space<vmem>>, vector<64x6xf32>
    %cst_227 = arith.constant dense<0.000000e+00> : vector<16x6xf32>
    %543 = tpu.matmul %541, %542, %cst_227 {dimension_numbers = #tpu.dot_dimension_numbers<[1], [0], [0], [1], [0, 0, 1, 1], [], []>} : vector<16x64xf32>, vector<64x6xf32>, vector<16x6xf32> -> vector<16x6xf32>
    %c64_228 = arith.constant 64 : index
    %c0_229 = arith.constant 0 : index
    %544 = vector.load %arg4[%c64_228, %c0_229] : memref<80x6xf32, #tpu.memory_space<vmem>>, vector<1x6xf32>
    %545 = vector.broadcast %544 : vector<1x6xf32> to vector<16x6xf32>
    %546 = arith.addf %543, %545 : vector<16x6xf32>
    %c0_230 = arith.constant 0 : index
    %c0_231 = arith.constant 0 : index
    %547 = vector.load %arg9[%c0_230, %c0_231] : memref<16x6xf32, #tpu.memory_space<vmem>>, vector<16x6xf32>
    tpu.vector_store %arg9[%c0_230, %c0_231], %546 {strides = array<i32>} : memref<16x6xf32, #tpu.memory_space<vmem>>, vector<16x6xf32>,
    %c65 = arith.constant 65 : index
    %c0_232 = arith.constant 0 : index
    %548 = vector.load %arg4[%c65, %c0_232] : memref<80x6xf32, #tpu.memory_space<vmem>>, vector<6x6xf32>
    %c71 = arith.constant 71 : index
    %c0_233 = arith.constant 0 : index
    %549 = vector.load %arg4[%c71, %c0_233] : memref<80x6xf32, #tpu.memory_space<vmem>>, vector<1x6xf32>
    %c72 = arith.constant 72 : index
    %c0_234 = arith.constant 0 : index
    %550 = vector.load %arg4[%c72, %c0_234] : memref<80x6xf32, #tpu.memory_space<vmem>>, vector<1x6xf32>
    %c0_235 = arith.constant 0 : index
    %c0_236 = arith.constant 0 : index
    %551 = vector.load %arg1[%c0_235, %c0_236] : memref<16x2xf32, #tpu.memory_space<vmem>>, vector<16x1xf32>
    %c0_237 = arith.constant 0 : index
    %c1 = arith.constant 1 : index
    %552 = vector.load %arg1[%c0_237, %c1] : memref<16x2xf32, #tpu.memory_space<vmem>>, vector<16x1xf32>
    %c0_238 = arith.constant 0 : index
    %c0_239 = arith.constant 0 : index
    %553 = vector.load %arg9[%c0_238, %c0_239] : memref<16x6xf32, #tpu.memory_space<vmem>>, vector<16x6xf32>
    %554 = tpu.iota {dimensions = array<i32: 1>} : vector<16x6xi32>
    %555 = arith.sitofp %554 : vector<16x6xi32> to vector<16x6xf32>
    %556 = vector.broadcast %552 : vector<16x1xf32> to vector<16x6xf32>
    %557 = arith.cmpf oeq, %555, %556 : vector<16x6xf32>
    %558 = arith.extui %557 : vector<16x6xi1> to vector<16x6xi32>
    %559 = arith.sitofp %558 : vector<16x6xi32> to vector<16x6xf32>
    %560 = arith.mulf %553, %559 : vector<16x6xf32>
    %561 = vector.broadcast %551 : vector<16x1xf32> to vector<16x6xf32>
    %562 = arith.mulf %560, %561 : vector<16x6xf32>
    %563 = vector.shape_cast %562 : vector<16x6xf32> to vector<1x16x6xf32>
    %cst_240 = arith.constant dense<0.000000e+00> : vector<1xf32>
    %564 = vector.multi_reduction <add>, %563, %cst_240 [1, 2] : vector<1x16x6xf32> to vector<1xf32>
    %565 = vector.shape_cast %564 : vector<1xf32> to vector<1x1x1xf32>
    %566 = vector.extract %565[0, 0, 0] : f32 from vector<1x1x1xf32>
    %567 = vector.extract_strided_slice %559 {offsets = [0, 0], sizes = [2, 6], strides = [1, 1]} : vector<16x6xf32> to vector<2x6xf32>
    %568 = vector.extract_strided_slice %551 {offsets = [0, 0], sizes = [2, 1], strides = [1, 1]} : vector<16x1xf32> to vector<2x1xf32>
    %569 = vector.broadcast %568 : vector<2x1xf32> to vector<2x6xf32>
    %570 = arith.mulf %567, %569 : vector<2x6xf32>
    %571 = vector.broadcast %549 : vector<1x6xf32> to vector<2x6xf32>
    %572 = arith.mulf %570, %571 : vector<2x6xf32>
    %573 = vector.shape_cast %572 : vector<2x6xf32> to vector<1x2x6xf32>
    %cst_241 = arith.constant dense<0.000000e+00> : vector<1xf32>
    %574 = vector.multi_reduction <add>, %573, %cst_241 [1, 2] : vector<1x2x6xf32> to vector<1xf32>
    %575 = vector.shape_cast %574 : vector<1xf32> to vector<1x1x1xf32>
    %576 = vector.extract %575[0, 0, 0] : f32 from vector<1x1x1xf32>
    %577 = arith.addf %566, %576 : f32
    %578 = vector.extract_strided_slice %559 {offsets = [0, 0], sizes = [14, 6], strides = [1, 1]} : vector<16x6xf32> to vector<14x6xf32>
    %579 = vector.extract_strided_slice %559 {offsets = [2, 0], sizes = [14, 6], strides = [1, 1]} : vector<16x6xf32> to vector<14x6xf32>
    %580 = vector.extract_strided_slice %551 {offsets = [2, 0], sizes = [14, 1], strides = [1, 1]} : vector<16x1xf32> to vector<14x1xf32>
    %cst_242 = arith.constant dense<0.000000e+00> : vector<14x6xf32>
    %581 = tpu.matmul %578, %548, %cst_242 {dimension_numbers = #tpu.dot_dimension_numbers<[1], [0], [0], [1], [0, 0, 1, 1], [], []>} : vector<14x6xf32>, vector<6x6xf32>, vector<14x6xf32> -> vector<14x6xf32>
    %582 = arith.mulf %581, %579 : vector<14x6xf32>
    %583 = vector.broadcast %580 : vector<14x1xf32> to vector<14x6xf32>
    %584 = arith.mulf %582, %583 : vector<14x6xf32>
    %585 = vector.shape_cast %584 : vector<14x6xf32> to vector<1x14x6xf32>
    %cst_243 = arith.constant dense<0.000000e+00> : vector<1xf32>
    %586 = vector.multi_reduction <add>, %585, %cst_243 [1, 2] : vector<1x14x6xf32> to vector<1xf32>
    %587 = vector.shape_cast %586 : vector<1xf32> to vector<1x1x1xf32>
    %588 = vector.extract %587[0, 0, 0] : f32 from vector<1x1x1xf32>
    %589 = arith.addf %577, %588 : f32
    %590 = vector.broadcast %551 : vector<16x1xf32> to vector<16x6xf32>
    %591 = arith.mulf %559, %590 : vector<16x6xf32>
    %592 = vector.broadcast %550 : vector<1x6xf32> to vector<16x6xf32>
    %593 = arith.mulf %591, %592 : vector<16x6xf32>
    %594 = vector.shape_cast %593 : vector<16x6xf32> to vector<1x16x6xf32>
    %cst_244 = arith.constant dense<0.000000e+00> : vector<1xf32>
    %595 = vector.multi_reduction <add>, %594, %cst_244 [1, 2] : vector<1x16x6xf32> to vector<1xf32>
    %596 = vector.shape_cast %595 : vector<1xf32> to vector<1x1x1xf32>
    %597 = vector.extract %596[0, 0, 0] : f32 from vector<1x1x1xf32>
    %598 = arith.addf %589, %597 : f32
    %599 = vector.broadcast %580 : vector<14x1xf32> to vector<14x6xf32>
    %600 = arith.mulf %578, %599 : vector<14x6xf32>
    %601 = vector.broadcast %550 : vector<1x6xf32> to vector<14x6xf32>
    %602 = arith.mulf %600, %601 : vector<14x6xf32>
    %603 = vector.shape_cast %602 : vector<14x6xf32> to vector<1x14x6xf32>
    %cst_245 = arith.constant dense<0.000000e+00> : vector<1xf32>
    %604 = vector.multi_reduction <add>, %603, %cst_245 [1, 2] : vector<1x14x6xf32> to vector<1xf32>
    %605 = vector.shape_cast %604 : vector<1xf32> to vector<1x1x1xf32>
    %606 = vector.extract %605[0, 0, 0] : f32 from vector<1x1x1xf32>
    %607 = arith.subf %598, %606 : f32
    %cst_246 = arith.constant dense<0xFF800000> : vector<6xf32>
    %608 = vector.multi_reduction <maximumf>, %548, %cst_246 [0] : vector<6x6xf32> to vector<6xf32>
    %609 = vector.shape_cast %608 : vector<6xf32> to vector<1x6xf32>
    %610 = vector.broadcast %609 : vector<1x6xf32> to vector<6x6xf32>
    %611 = arith.subf %548, %610 : vector<6x6xf32>
    %612 = math.exp %611 : vector<6x6xf32>
    %613 = vector.extract_strided_slice %612 {offsets = [0, 0], sizes = [1, 6], strides = [1, 1]} : vector<6x6xf32> to vector<1x6xf32>
    %614 = vector.extract_strided_slice %612 {offsets = [1, 0], sizes = [1, 6], strides = [1, 1]} : vector<6x6xf32> to vector<1x6xf32>
    %615 = vector.extract_strided_slice %612 {offsets = [2, 0], sizes = [1, 6], strides = [1, 1]} : vector<6x6xf32> to vector<1x6xf32>
    %616 = vector.extract_strided_slice %612 {offsets = [3, 0], sizes = [1, 6], strides = [1, 1]} : vector<6x6xf32> to vector<1x6xf32>
    %617 = vector.extract_strided_slice %612 {offsets = [4, 0], sizes = [1, 6], strides = [1, 1]} : vector<6x6xf32> to vector<1x6xf32>
    %618 = vector.extract_strided_slice %612 {offsets = [5, 0], sizes = [1, 6], strides = [1, 1]} : vector<6x6xf32> to vector<1x6xf32>
    %c0_247 = arith.constant 0 : index
    %c0_248 = arith.constant 0 : index
    %619 = vector.load %arg9[%c0_247, %c0_248] : memref<16x6xf32, #tpu.memory_space<vmem>>, vector<2x6xf32>
    %620 = vector.broadcast %549 : vector<1x6xf32> to vector<2x6xf32>
    %621 = arith.addf %620, %619 : vector<2x6xf32>
    %c2_249 = arith.constant 2 : index
    %c0_250 = arith.constant 0 : index
    %622 = vector.load %arg9[%c2_249, %c0_250] : memref<16x6xf32, #tpu.memory_space<vmem>>, vector<2x6xf32>
    %c2_251 = arith.constant 2 : index
    %c0_252 = arith.constant 0 : index
    %623 = vector.load %arg1[%c2_251, %c0_252] : memref<16x2xf32, #tpu.memory_space<vmem>>, vector<2x1xf32>
    %cst_253 = arith.constant dense<0xFF800000> : vector<2xf32>
    %624 = vector.multi_reduction <maximumf>, %621, %cst_253 [1] : vector<2x6xf32> to vector<2xf32>
    %625 = vector.shape_cast %624 : vector<2xf32> to vector<2x1xf32>
    %626 = vector.broadcast %625 : vector<2x1xf32> to vector<2x6xf32>
    %627 = arith.subf %621, %626 : vector<2x6xf32>
    %628 = math.exp %627 : vector<2x6xf32>
    %629 = vector.extract_strided_slice %628 {offsets = [0, 0], sizes = [2, 1], strides = [1, 1]} : vector<2x6xf32> to vector<2x1xf32>
    %630 = vector.broadcast %613 : vector<1x6xf32> to vector<2x6xf32>
    %631 = vector.broadcast %629 : vector<2x1xf32> to vector<2x6xf32>
    %632 = arith.mulf %630, %631 : vector<2x6xf32>
    %633 = vector.extract_strided_slice %628 {offsets = [0, 1], sizes = [2, 1], strides = [1, 1]} : vector<2x6xf32> to vector<2x1xf32>
    %634 = vector.broadcast %614 : vector<1x6xf32> to vector<2x6xf32>
    %635 = vector.broadcast %633 : vector<2x1xf32> to vector<2x6xf32>
    %636 = arith.mulf %634, %635 : vector<2x6xf32>
    %637 = arith.addf %632, %636 : vector<2x6xf32>
    %638 = vector.extract_strided_slice %628 {offsets = [0, 2], sizes = [2, 1], strides = [1, 1]} : vector<2x6xf32> to vector<2x1xf32>
    %639 = vector.broadcast %615 : vector<1x6xf32> to vector<2x6xf32>
    %640 = vector.broadcast %638 : vector<2x1xf32> to vector<2x6xf32>
    %641 = arith.mulf %639, %640 : vector<2x6xf32>
    %642 = arith.addf %637, %641 : vector<2x6xf32>
    %643 = vector.extract_strided_slice %628 {offsets = [0, 3], sizes = [2, 1], strides = [1, 1]} : vector<2x6xf32> to vector<2x1xf32>
    %644 = vector.broadcast %616 : vector<1x6xf32> to vector<2x6xf32>
    %645 = vector.broadcast %643 : vector<2x1xf32> to vector<2x6xf32>
    %646 = arith.mulf %644, %645 : vector<2x6xf32>
    %647 = arith.addf %642, %646 : vector<2x6xf32>
    %648 = vector.extract_strided_slice %628 {offsets = [0, 4], sizes = [2, 1], strides = [1, 1]} : vector<2x6xf32> to vector<2x1xf32>
    %649 = vector.broadcast %617 : vector<1x6xf32> to vector<2x6xf32>
    %650 = vector.broadcast %648 : vector<2x1xf32> to vector<2x6xf32>
    %651 = arith.mulf %649, %650 : vector<2x6xf32>
    %652 = arith.addf %647, %651 : vector<2x6xf32>
    %653 = vector.extract_strided_slice %628 {offsets = [0, 5], sizes = [2, 1], strides = [1, 1]} : vector<2x6xf32> to vector<2x1xf32>
    %654 = vector.broadcast %618 : vector<1x6xf32> to vector<2x6xf32>
    %655 = vector.broadcast %653 : vector<2x1xf32> to vector<2x6xf32>
    %656 = arith.mulf %654, %655 : vector<2x6xf32>
    %657 = arith.addf %652, %656 : vector<2x6xf32>
    %658 = vector.broadcast %625 : vector<2x1xf32> to vector<2x6xf32>
    %659 = vector.broadcast %609 : vector<1x6xf32> to vector<2x6xf32>
    %660 = arith.addf %658, %659 : vector<2x6xf32>
    %661 = math.log %657 : vector<2x6xf32>
    %662 = arith.addf %660, %661 : vector<2x6xf32>
    %663 = arith.addf %662, %622 : vector<2x6xf32>
    %cst_254 = arith.constant 5.000000e-01 : f32
    %664 = vector.broadcast %cst_254 : f32 to vector<2x1xf32>
    %665 = arith.cmpf ogt, %623, %664 : vector<2x1xf32>
    %666 = vector.shape_cast %665 : vector<2x1xi1> to vector<2x1xi1>
    %667 = vector.broadcast %666 : vector<2x1xi1> to vector<2x6xi1>
    %668 = arith.select %667, %663, %621 : vector<2x6xi1>, vector<2x6xf32>
    %c4_255 = arith.constant 4 : index
    %c0_256 = arith.constant 0 : index
    %669 = vector.load %arg9[%c4_255, %c0_256] : memref<16x6xf32, #tpu.memory_space<vmem>>, vector<2x6xf32>
    %c4_257 = arith.constant 4 : index
    %c0_258 = arith.constant 0 : index
    %670 = vector.load %arg1[%c4_257, %c0_258] : memref<16x2xf32, #tpu.memory_space<vmem>>, vector<2x1xf32>
    %cst_259 = arith.constant dense<0xFF800000> : vector<2xf32>
    %671 = vector.multi_reduction <maximumf>, %668, %cst_259 [1] : vector<2x6xf32> to vector<2xf32>
    %672 = vector.shape_cast %671 : vector<2xf32> to vector<2x1xf32>
    %673 = vector.broadcast %672 : vector<2x1xf32> to vector<2x6xf32>
    %674 = arith.subf %668, %673 : vector<2x6xf32>
    %675 = math.exp %674 : vector<2x6xf32>
    %676 = vector.extract_strided_slice %675 {offsets = [0, 0], sizes = [2, 1], strides = [1, 1]} : vector<2x6xf32> to vector<2x1xf32>
    %677 = vector.broadcast %613 : vector<1x6xf32> to vector<2x6xf32>
    %678 = vector.broadcast %676 : vector<2x1xf32> to vector<2x6xf32>
    %679 = arith.mulf %677, %678 : vector<2x6xf32>
    %680 = vector.extract_strided_slice %675 {offsets = [0, 1], sizes = [2, 1], strides = [1, 1]} : vector<2x6xf32> to vector<2x1xf32>
    %681 = vector.broadcast %614 : vector<1x6xf32> to vector<2x6xf32>
    %682 = vector.broadcast %680 : vector<2x1xf32> to vector<2x6xf32>
    %683 = arith.mulf %681, %682 : vector<2x6xf32>
    %684 = arith.addf %679, %683 : vector<2x6xf32>
    %685 = vector.extract_strided_slice %675 {offsets = [0, 2], sizes = [2, 1], strides = [1, 1]} : vector<2x6xf32> to vector<2x1xf32>
    %686 = vector.broadcast %615 : vector<1x6xf32> to vector<2x6xf32>
    %687 = vector.broadcast %685 : vector<2x1xf32> to vector<2x6xf32>
    %688 = arith.mulf %686, %687 : vector<2x6xf32>
    %689 = arith.addf %684, %688 : vector<2x6xf32>
    %690 = vector.extract_strided_slice %675 {offsets = [0, 3], sizes = [2, 1], strides = [1, 1]} : vector<2x6xf32> to vector<2x1xf32>
    %691 = vector.broadcast %616 : vector<1x6xf32> to vector<2x6xf32>
    %692 = vector.broadcast %690 : vector<2x1xf32> to vector<2x6xf32>
    %693 = arith.mulf %691, %692 : vector<2x6xf32>
    %694 = arith.addf %689, %693 : vector<2x6xf32>
    %695 = vector.extract_strided_slice %675 {offsets = [0, 4], sizes = [2, 1], strides = [1, 1]} : vector<2x6xf32> to vector<2x1xf32>
    %696 = vector.broadcast %617 : vector<1x6xf32> to vector<2x6xf32>
    %697 = vector.broadcast %695 : vector<2x1xf32> to vector<2x6xf32>
    %698 = arith.mulf %696, %697 : vector<2x6xf32>
    %699 = arith.addf %694, %698 : vector<2x6xf32>
    %700 = vector.extract_strided_slice %675 {offsets = [0, 5], sizes = [2, 1], strides = [1, 1]} : vector<2x6xf32> to vector<2x1xf32>
    %701 = vector.broadcast %618 : vector<1x6xf32> to vector<2x6xf32>
    %702 = vector.broadcast %700 : vector<2x1xf32> to vector<2x6xf32>
    %703 = arith.mulf %701, %702 : vector<2x6xf32>
    %704 = arith.addf %699, %703 : vector<2x6xf32>
    %705 = vector.broadcast %672 : vector<2x1xf32> to vector<2x6xf32>
    %706 = vector.broadcast %609 : vector<1x6xf32> to vector<2x6xf32>
    %707 = arith.addf %705, %706 : vector<2x6xf32>
    %708 = math.log %704 : vector<2x6xf32>
    %709 = arith.addf %707, %708 : vector<2x6xf32>
    %710 = arith.addf %709, %669 : vector<2x6xf32>
    %cst_260 = arith.constant 5.000000e-01 : f32
    %711 = vector.broadcast %cst_260 : f32 to vector<2x1xf32>
    %712 = arith.cmpf ogt, %670, %711 : vector<2x1xf32>
    %713 = vector.shape_cast %712 : vector<2x1xi1> to vector<2x1xi1>
    %714 = vector.broadcast %713 : vector<2x1xi1> to vector<2x6xi1>
    %715 = arith.select %714, %710, %668 : vector<2x6xi1>, vector<2x6xf32>
    %c6_261 = arith.constant 6 : index
    %c0_262 = arith.constant 0 : index
    %716 = vector.load %arg9[%c6_261, %c0_262] : memref<16x6xf32, #tpu.memory_space<vmem>>, vector<2x6xf32>
    %c6_263 = arith.constant 6 : index
    %c0_264 = arith.constant 0 : index
    %717 = vector.load %arg1[%c6_263, %c0_264] : memref<16x2xf32, #tpu.memory_space<vmem>>, vector<2x1xf32>
    %cst_265 = arith.constant dense<0xFF800000> : vector<2xf32>
    %718 = vector.multi_reduction <maximumf>, %715, %cst_265 [1] : vector<2x6xf32> to vector<2xf32>
    %719 = vector.shape_cast %718 : vector<2xf32> to vector<2x1xf32>
    %720 = vector.broadcast %719 : vector<2x1xf32> to vector<2x6xf32>
    %721 = arith.subf %715, %720 : vector<2x6xf32>
    %722 = math.exp %721 : vector<2x6xf32>
    %723 = vector.extract_strided_slice %722 {offsets = [0, 0], sizes = [2, 1], strides = [1, 1]} : vector<2x6xf32> to vector<2x1xf32>
    %724 = vector.broadcast %613 : vector<1x6xf32> to vector<2x6xf32>
    %725 = vector.broadcast %723 : vector<2x1xf32> to vector<2x6xf32>
    %726 = arith.mulf %724, %725 : vector<2x6xf32>
    %727 = vector.extract_strided_slice %722 {offsets = [0, 1], sizes = [2, 1], strides = [1, 1]} : vector<2x6xf32> to vector<2x1xf32>
    %728 = vector.broadcast %614 : vector<1x6xf32> to vector<2x6xf32>
    %729 = vector.broadcast %727 : vector<2x1xf32> to vector<2x6xf32>
    %730 = arith.mulf %728, %729 : vector<2x6xf32>
    %731 = arith.addf %726, %730 : vector<2x6xf32>
    %732 = vector.extract_strided_slice %722 {offsets = [0, 2], sizes = [2, 1], strides = [1, 1]} : vector<2x6xf32> to vector<2x1xf32>
    %733 = vector.broadcast %615 : vector<1x6xf32> to vector<2x6xf32>
    %734 = vector.broadcast %732 : vector<2x1xf32> to vector<2x6xf32>
    %735 = arith.mulf %733, %734 : vector<2x6xf32>
    %736 = arith.addf %731, %735 : vector<2x6xf32>
    %737 = vector.extract_strided_slice %722 {offsets = [0, 3], sizes = [2, 1], strides = [1, 1]} : vector<2x6xf32> to vector<2x1xf32>
    %738 = vector.broadcast %616 : vector<1x6xf32> to vector<2x6xf32>
    %739 = vector.broadcast %737 : vector<2x1xf32> to vector<2x6xf32>
    %740 = arith.mulf %738, %739 : vector<2x6xf32>
    %741 = arith.addf %736, %740 : vector<2x6xf32>
    %742 = vector.extract_strided_slice %722 {offsets = [0, 4], sizes = [2, 1], strides = [1, 1]} : vector<2x6xf32> to vector<2x1xf32>
    %743 = vector.broadcast %617 : vector<1x6xf32> to vector<2x6xf32>
    %744 = vector.broadcast %742 : vector<2x1xf32> to vector<2x6xf32>
    %745 = arith.mulf %743, %744 : vector<2x6xf32>
    %746 = arith.addf %741, %745 : vector<2x6xf32>
    %747 = vector.extract_strided_slice %722 {offsets = [0, 5], sizes = [2, 1], strides = [1, 1]} : vector<2x6xf32> to vector<2x1xf32>
    %748 = vector.broadcast %618 : vector<1x6xf32> to vector<2x6xf32>
    %749 = vector.broadcast %747 : vector<2x1xf32> to vector<2x6xf32>
    %750 = arith.mulf %748, %749 : vector<2x6xf32>
    %751 = arith.addf %746, %750 : vector<2x6xf32>
    %752 = vector.broadcast %719 : vector<2x1xf32> to vector<2x6xf32>
    %753 = vector.broadcast %609 : vector<1x6xf32> to vector<2x6xf32>
    %754 = arith.addf %752, %753 : vector<2x6xf32>
    %755 = math.log %751 : vector<2x6xf32>
    %756 = arith.addf %754, %755 : vector<2x6xf32>
    %757 = arith.addf %756, %716 : vector<2x6xf32>
    %cst_266 = arith.constant 5.000000e-01 : f32
    %758 = vector.broadcast %cst_266 : f32 to vector<2x1xf32>
    %759 = arith.cmpf ogt, %717, %758 : vector<2x1xf32>
    %760 = vector.shape_cast %759 : vector<2x1xi1> to vector<2x1xi1>
    %761 = vector.broadcast %760 : vector<2x1xi1> to vector<2x6xi1>
    %762 = arith.select %761, %757, %715 : vector<2x6xi1>, vector<2x6xf32>
    %c8_267 = arith.constant 8 : index
    %c0_268 = arith.constant 0 : index
    %763 = vector.load %arg9[%c8_267, %c0_268] : memref<16x6xf32, #tpu.memory_space<vmem>>, vector<2x6xf32>
    %c8_269 = arith.constant 8 : index
    %c0_270 = arith.constant 0 : index
    %764 = vector.load %arg1[%c8_269, %c0_270] : memref<16x2xf32, #tpu.memory_space<vmem>>, vector<2x1xf32>
    %cst_271 = arith.constant dense<0xFF800000> : vector<2xf32>
    %765 = vector.multi_reduction <maximumf>, %762, %cst_271 [1] : vector<2x6xf32> to vector<2xf32>
    %766 = vector.shape_cast %765 : vector<2xf32> to vector<2x1xf32>
    %767 = vector.broadcast %766 : vector<2x1xf32> to vector<2x6xf32>
    %768 = arith.subf %762, %767 : vector<2x6xf32>
    %769 = math.exp %768 : vector<2x6xf32>
    %770 = vector.extract_strided_slice %769 {offsets = [0, 0], sizes = [2, 1], strides = [1, 1]} : vector<2x6xf32> to vector<2x1xf32>
    %771 = vector.broadcast %613 : vector<1x6xf32> to vector<2x6xf32>
    %772 = vector.broadcast %770 : vector<2x1xf32> to vector<2x6xf32>
    %773 = arith.mulf %771, %772 : vector<2x6xf32>
    %774 = vector.extract_strided_slice %769 {offsets = [0, 1], sizes = [2, 1], strides = [1, 1]} : vector<2x6xf32> to vector<2x1xf32>
    %775 = vector.broadcast %614 : vector<1x6xf32> to vector<2x6xf32>
    %776 = vector.broadcast %774 : vector<2x1xf32> to vector<2x6xf32>
    %777 = arith.mulf %775, %776 : vector<2x6xf32>
    %778 = arith.addf %773, %777 : vector<2x6xf32>
    %779 = vector.extract_strided_slice %769 {offsets = [0, 2], sizes = [2, 1], strides = [1, 1]} : vector<2x6xf32> to vector<2x1xf32>
    %780 = vector.broadcast %615 : vector<1x6xf32> to vector<2x6xf32>
    %781 = vector.broadcast %779 : vector<2x1xf32> to vector<2x6xf32>
    %782 = arith.mulf %780, %781 : vector<2x6xf32>
    %783 = arith.addf %778, %782 : vector<2x6xf32>
    %784 = vector.extract_strided_slice %769 {offsets = [0, 3], sizes = [2, 1], strides = [1, 1]} : vector<2x6xf32> to vector<2x1xf32>
    %785 = vector.broadcast %616 : vector<1x6xf32> to vector<2x6xf32>
    %786 = vector.broadcast %784 : vector<2x1xf32> to vector<2x6xf32>
    %787 = arith.mulf %785, %786 : vector<2x6xf32>
    %788 = arith.addf %783, %787 : vector<2x6xf32>
    %789 = vector.extract_strided_slice %769 {offsets = [0, 4], sizes = [2, 1], strides = [1, 1]} : vector<2x6xf32> to vector<2x1xf32>
    %790 = vector.broadcast %617 : vector<1x6xf32> to vector<2x6xf32>
    %791 = vector.broadcast %789 : vector<2x1xf32> to vector<2x6xf32>
    %792 = arith.mulf %790, %791 : vector<2x6xf32>
    %793 = arith.addf %788, %792 : vector<2x6xf32>
    %794 = vector.extract_strided_slice %769 {offsets = [0, 5], sizes = [2, 1], strides = [1, 1]} : vector<2x6xf32> to vector<2x1xf32>
    %795 = vector.broadcast %618 : vector<1x6xf32> to vector<2x6xf32>
    %796 = vector.broadcast %794 : vector<2x1xf32> to vector<2x6xf32>
    %797 = arith.mulf %795, %796 : vector<2x6xf32>
    %798 = arith.addf %793, %797 : vector<2x6xf32>
    %799 = vector.broadcast %766 : vector<2x1xf32> to vector<2x6xf32>
    %800 = vector.broadcast %609 : vector<1x6xf32> to vector<2x6xf32>
    %801 = arith.addf %799, %800 : vector<2x6xf32>
    %802 = math.log %798 : vector<2x6xf32>
    %803 = arith.addf %801, %802 : vector<2x6xf32>
    %804 = arith.addf %803, %763 : vector<2x6xf32>
    %cst_272 = arith.constant 5.000000e-01 : f32
    %805 = vector.broadcast %cst_272 : f32 to vector<2x1xf32>
    %806 = arith.cmpf ogt, %764, %805 : vector<2x1xf32>
    %807 = vector.shape_cast %806 : vector<2x1xi1> to vector<2x1xi1>
    %808 = vector.broadcast %807 : vector<2x1xi1> to vector<2x6xi1>
    %809 = arith.select %808, %804, %762 : vector<2x6xi1>, vector<2x6xf32>
    %c10_273 = arith.constant 10 : index
    %c0_274 = arith.constant 0 : index
    %810 = vector.load %arg9[%c10_273, %c0_274] : memref<16x6xf32, #tpu.memory_space<vmem>>, vector<2x6xf32>
    %c10_275 = arith.constant 10 : index
    %c0_276 = arith.constant 0 : index
    %811 = vector.load %arg1[%c10_275, %c0_276] : memref<16x2xf32, #tpu.memory_space<vmem>>, vector<2x1xf32>
    %cst_277 = arith.constant dense<0xFF800000> : vector<2xf32>
    %812 = vector.multi_reduction <maximumf>, %809, %cst_277 [1] : vector<2x6xf32> to vector<2xf32>
    %813 = vector.shape_cast %812 : vector<2xf32> to vector<2x1xf32>
    %814 = vector.broadcast %813 : vector<2x1xf32> to vector<2x6xf32>
    %815 = arith.subf %809, %814 : vector<2x6xf32>
    %816 = math.exp %815 : vector<2x6xf32>
    %817 = vector.extract_strided_slice %816 {offsets = [0, 0], sizes = [2, 1], strides = [1, 1]} : vector<2x6xf32> to vector<2x1xf32>
    %818 = vector.broadcast %613 : vector<1x6xf32> to vector<2x6xf32>
    %819 = vector.broadcast %817 : vector<2x1xf32> to vector<2x6xf32>
    %820 = arith.mulf %818, %819 : vector<2x6xf32>
    %821 = vector.extract_strided_slice %816 {offsets = [0, 1], sizes = [2, 1], strides = [1, 1]} : vector<2x6xf32> to vector<2x1xf32>
    %822 = vector.broadcast %614 : vector<1x6xf32> to vector<2x6xf32>
    %823 = vector.broadcast %821 : vector<2x1xf32> to vector<2x6xf32>
    %824 = arith.mulf %822, %823 : vector<2x6xf32>
    %825 = arith.addf %820, %824 : vector<2x6xf32>
    %826 = vector.extract_strided_slice %816 {offsets = [0, 2], sizes = [2, 1], strides = [1, 1]} : vector<2x6xf32> to vector<2x1xf32>
    %827 = vector.broadcast %615 : vector<1x6xf32> to vector<2x6xf32>
    %828 = vector.broadcast %826 : vector<2x1xf32> to vector<2x6xf32>
    %829 = arith.mulf %827, %828 : vector<2x6xf32>
    %830 = arith.addf %825, %829 : vector<2x6xf32>
    %831 = vector.extract_strided_slice %816 {offsets = [0, 3], sizes = [2, 1], strides = [1, 1]} : vector<2x6xf32> to vector<2x1xf32>
    %832 = vector.broadcast %616 : vector<1x6xf32> to vector<2x6xf32>
    %833 = vector.broadcast %831 : vector<2x1xf32> to vector<2x6xf32>
    %834 = arith.mulf %832, %833 : vector<2x6xf32>
    %835 = arith.addf %830, %834 : vector<2x6xf32>
    %836 = vector.extract_strided_slice %816 {offsets = [0, 4], sizes = [2, 1], strides = [1, 1]} : vector<2x6xf32> to vector<2x1xf32>
    %837 = vector.broadcast %617 : vector<1x6xf32> to vector<2x6xf32>
    %838 = vector.broadcast %836 : vector<2x1xf32> to vector<2x6xf32>
    %839 = arith.mulf %837, %838 : vector<2x6xf32>
    %840 = arith.addf %835, %839 : vector<2x6xf32>
    %841 = vector.extract_strided_slice %816 {offsets = [0, 5], sizes = [2, 1], strides = [1, 1]} : vector<2x6xf32> to vector<2x1xf32>
    %842 = vector.broadcast %618 : vector<1x6xf32> to vector<2x6xf32>
    %843 = vector.broadcast %841 : vector<2x1xf32> to vector<2x6xf32>
    %844 = arith.mulf %842, %843 : vector<2x6xf32>
    %845 = arith.addf %840, %844 : vector<2x6xf32>
    %846 = vector.broadcast %813 : vector<2x1xf32> to vector<2x6xf32>
    %847 = vector.broadcast %609 : vector<1x6xf32> to vector<2x6xf32>
    %848 = arith.addf %846, %847 : vector<2x6xf32>
    %849 = math.log %845 : vector<2x6xf32>
    %850 = arith.addf %848, %849 : vector<2x6xf32>
    %851 = arith.addf %850, %810 : vector<2x6xf32>
    %cst_278 = arith.constant 5.000000e-01 : f32
    %852 = vector.broadcast %cst_278 : f32 to vector<2x1xf32>
    %853 = arith.cmpf ogt, %811, %852 : vector<2x1xf32>
    %854 = vector.shape_cast %853 : vector<2x1xi1> to vector<2x1xi1>
    %855 = vector.broadcast %854 : vector<2x1xi1> to vector<2x6xi1>
    %856 = arith.select %855, %851, %809 : vector<2x6xi1>, vector<2x6xf32>
    %c12_279 = arith.constant 12 : index
    %c0_280 = arith.constant 0 : index
    %857 = vector.load %arg9[%c12_279, %c0_280] : memref<16x6xf32, #tpu.memory_space<vmem>>, vector<2x6xf32>
    %c12_281 = arith.constant 12 : index
    %c0_282 = arith.constant 0 : index
    %858 = vector.load %arg1[%c12_281, %c0_282] : memref<16x2xf32, #tpu.memory_space<vmem>>, vector<2x1xf32>
    %cst_283 = arith.constant dense<0xFF800000> : vector<2xf32>
    %859 = vector.multi_reduction <maximumf>, %856, %cst_283 [1] : vector<2x6xf32> to vector<2xf32>
    %860 = vector.shape_cast %859 : vector<2xf32> to vector<2x1xf32>
    %861 = vector.broadcast %860 : vector<2x1xf32> to vector<2x6xf32>
    %862 = arith.subf %856, %861 : vector<2x6xf32>
    %863 = math.exp %862 : vector<2x6xf32>
    %864 = vector.extract_strided_slice %863 {offsets = [0, 0], sizes = [2, 1], strides = [1, 1]} : vector<2x6xf32> to vector<2x1xf32>
    %865 = vector.broadcast %613 : vector<1x6xf32> to vector<2x6xf32>
    %866 = vector.broadcast %864 : vector<2x1xf32> to vector<2x6xf32>
    %867 = arith.mulf %865, %866 : vector<2x6xf32>
    %868 = vector.extract_strided_slice %863 {offsets = [0, 1], sizes = [2, 1], strides = [1, 1]} : vector<2x6xf32> to vector<2x1xf32>
    %869 = vector.broadcast %614 : vector<1x6xf32> to vector<2x6xf32>
    %870 = vector.broadcast %868 : vector<2x1xf32> to vector<2x6xf32>
    %871 = arith.mulf %869, %870 : vector<2x6xf32>
    %872 = arith.addf %867, %871 : vector<2x6xf32>
    %873 = vector.extract_strided_slice %863 {offsets = [0, 2], sizes = [2, 1], strides = [1, 1]} : vector<2x6xf32> to vector<2x1xf32>
    %874 = vector.broadcast %615 : vector<1x6xf32> to vector<2x6xf32>
    %875 = vector.broadcast %873 : vector<2x1xf32> to vector<2x6xf32>
    %876 = arith.mulf %874, %875 : vector<2x6xf32>
    %877 = arith.addf %872, %876 : vector<2x6xf32>
    %878 = vector.extract_strided_slice %863 {offsets = [0, 3], sizes = [2, 1], strides = [1, 1]} : vector<2x6xf32> to vector<2x1xf32>
    %879 = vector.broadcast %616 : vector<1x6xf32> to vector<2x6xf32>
    %880 = vector.broadcast %878 : vector<2x1xf32> to vector<2x6xf32>
    %881 = arith.mulf %879, %880 : vector<2x6xf32>
    %882 = arith.addf %877, %881 : vector<2x6xf32>
    %883 = vector.extract_strided_slice %863 {offsets = [0, 4], sizes = [2, 1], strides = [1, 1]} : vector<2x6xf32> to vector<2x1xf32>
    %884 = vector.broadcast %617 : vector<1x6xf32> to vector<2x6xf32>
    %885 = vector.broadcast %883 : vector<2x1xf32> to vector<2x6xf32>
    %886 = arith.mulf %884, %885 : vector<2x6xf32>
    %887 = arith.addf %882, %886 : vector<2x6xf32>
    %888 = vector.extract_strided_slice %863 {offsets = [0, 5], sizes = [2, 1], strides = [1, 1]} : vector<2x6xf32> to vector<2x1xf32>
    %889 = vector.broadcast %618 : vector<1x6xf32> to vector<2x6xf32>
    %890 = vector.broadcast %888 : vector<2x1xf32> to vector<2x6xf32>
    %891 = arith.mulf %889, %890 : vector<2x6xf32>
    %892 = arith.addf %887, %891 : vector<2x6xf32>
    %893 = vector.broadcast %860 : vector<2x1xf32> to vector<2x6xf32>
    %894 = vector.broadcast %609 : vector<1x6xf32> to vector<2x6xf32>
    %895 = arith.addf %893, %894 : vector<2x6xf32>
    %896 = math.log %892 : vector<2x6xf32>
    %897 = arith.addf %895, %896 : vector<2x6xf32>
    %898 = arith.addf %897, %857 : vector<2x6xf32>
    %cst_284 = arith.constant 5.000000e-01 : f32
    %899 = vector.broadcast %cst_284 : f32 to vector<2x1xf32>
    %900 = arith.cmpf ogt, %858, %899 : vector<2x1xf32>
    %901 = vector.shape_cast %900 : vector<2x1xi1> to vector<2x1xi1>
    %902 = vector.broadcast %901 : vector<2x1xi1> to vector<2x6xi1>
    %903 = arith.select %902, %898, %856 : vector<2x6xi1>, vector<2x6xf32>
    %c14_285 = arith.constant 14 : index
    %c0_286 = arith.constant 0 : index
    %904 = vector.load %arg9[%c14_285, %c0_286] : memref<16x6xf32, #tpu.memory_space<vmem>>, vector<2x6xf32>
    %c14_287 = arith.constant 14 : index
    %c0_288 = arith.constant 0 : index
    %905 = vector.load %arg1[%c14_287, %c0_288] : memref<16x2xf32, #tpu.memory_space<vmem>>, vector<2x1xf32>
    %cst_289 = arith.constant dense<0xFF800000> : vector<2xf32>
    %906 = vector.multi_reduction <maximumf>, %903, %cst_289 [1] : vector<2x6xf32> to vector<2xf32>
    %907 = vector.shape_cast %906 : vector<2xf32> to vector<2x1xf32>
    %908 = vector.broadcast %907 : vector<2x1xf32> to vector<2x6xf32>
    %909 = arith.subf %903, %908 : vector<2x6xf32>
    %910 = math.exp %909 : vector<2x6xf32>
    %911 = vector.extract_strided_slice %910 {offsets = [0, 0], sizes = [2, 1], strides = [1, 1]} : vector<2x6xf32> to vector<2x1xf32>
    %912 = vector.broadcast %613 : vector<1x6xf32> to vector<2x6xf32>
    %913 = vector.broadcast %911 : vector<2x1xf32> to vector<2x6xf32>
    %914 = arith.mulf %912, %913 : vector<2x6xf32>
    %915 = vector.extract_strided_slice %910 {offsets = [0, 1], sizes = [2, 1], strides = [1, 1]} : vector<2x6xf32> to vector<2x1xf32>
    %916 = vector.broadcast %614 : vector<1x6xf32> to vector<2x6xf32>
    %917 = vector.broadcast %915 : vector<2x1xf32> to vector<2x6xf32>
    %918 = arith.mulf %916, %917 : vector<2x6xf32>
    %919 = arith.addf %914, %918 : vector<2x6xf32>
    %920 = vector.extract_strided_slice %910 {offsets = [0, 2], sizes = [2, 1], strides = [1, 1]} : vector<2x6xf32> to vector<2x1xf32>
    %921 = vector.broadcast %615 : vector<1x6xf32> to vector<2x6xf32>
    %922 = vector.broadcast %920 : vector<2x1xf32> to vector<2x6xf32>
    %923 = arith.mulf %921, %922 : vector<2x6xf32>
    %924 = arith.addf %919, %923 : vector<2x6xf32>
    %925 = vector.extract_strided_slice %910 {offsets = [0, 3], sizes = [2, 1], strides = [1, 1]} : vector<2x6xf32> to vector<2x1xf32>
    %926 = vector.broadcast %616 : vector<1x6xf32> to vector<2x6xf32>
    %927 = vector.broadcast %925 : vector<2x1xf32> to vector<2x6xf32>
    %928 = arith.mulf %926, %927 : vector<2x6xf32>
    %929 = arith.addf %924, %928 : vector<2x6xf32>
    %930 = vector.extract_strided_slice %910 {offsets = [0, 4], sizes = [2, 1], strides = [1, 1]} : vector<2x6xf32> to vector<2x1xf32>
    %931 = vector.broadcast %617 : vector<1x6xf32> to vector<2x6xf32>
    %932 = vector.broadcast %930 : vector<2x1xf32> to vector<2x6xf32>
    %933 = arith.mulf %931, %932 : vector<2x6xf32>
    %934 = arith.addf %929, %933 : vector<2x6xf32>
    %935 = vector.extract_strided_slice %910 {offsets = [0, 5], sizes = [2, 1], strides = [1, 1]} : vector<2x6xf32> to vector<2x1xf32>
    %936 = vector.broadcast %618 : vector<1x6xf32> to vector<2x6xf32>
    %937 = vector.broadcast %935 : vector<2x1xf32> to vector<2x6xf32>
    %938 = arith.mulf %936, %937 : vector<2x6xf32>
    %939 = arith.addf %934, %938 : vector<2x6xf32>
    %940 = vector.broadcast %907 : vector<2x1xf32> to vector<2x6xf32>
    %941 = vector.broadcast %609 : vector<1x6xf32> to vector<2x6xf32>
    %942 = arith.addf %940, %941 : vector<2x6xf32>
    %943 = math.log %939 : vector<2x6xf32>
    %944 = arith.addf %942, %943 : vector<2x6xf32>
    %945 = arith.addf %944, %904 : vector<2x6xf32>
    %cst_290 = arith.constant 5.000000e-01 : f32
    %946 = vector.broadcast %cst_290 : f32 to vector<2x1xf32>
    %947 = arith.cmpf ogt, %905, %946 : vector<2x1xf32>
    %948 = vector.shape_cast %947 : vector<2x1xi1> to vector<2x1xi1>
    %949 = vector.broadcast %948 : vector<2x1xi1> to vector<2x6xi1>
    %950 = arith.select %949, %945, %903 : vector<2x6xi1>, vector<2x6xf32>
    %951 = vector.broadcast %550 : vector<1x6xf32> to vector<2x6xf32>
    %952 = arith.addf %950, %951 : vector<2x6xf32>
    %cst_291 = arith.constant dense<0xFF800000> : vector<2xf32>
    %953 = vector.multi_reduction <maximumf>, %952, %cst_291 [1] : vector<2x6xf32> to vector<2xf32>
    %954 = vector.shape_cast %953 : vector<2xf32> to vector<2x1xf32>
    %955 = vector.broadcast %954 : vector<2x1xf32> to vector<2x6xf32>
    %956 = arith.subf %952, %955 : vector<2x6xf32>
    %957 = math.exp %956 : vector<2x6xf32>
    %cst_292 = arith.constant dense<0.000000e+00> : vector<2xf32>
    %958 = vector.multi_reduction <add>, %957, %cst_292 [1] : vector<2x6xf32> to vector<2xf32>
    %959 = vector.shape_cast %958 : vector<2xf32> to vector<2x1xf32>
    %960 = math.log %959 : vector<2x1xf32>
    %961 = arith.addf %954, %960 : vector<2x1xf32>
    %962 = vector.shape_cast %961 : vector<2x1xf32> to vector<1x2x1xf32>
    %cst_293 = arith.constant dense<0.000000e+00> : vector<1xf32>
    %963 = vector.multi_reduction <add>, %962, %cst_293 [1, 2] : vector<1x2x1xf32> to vector<1xf32>
    %964 = vector.shape_cast %963 : vector<1xf32> to vector<1x1x1xf32>
    %965 = vector.extract %964[0, 0, 0] : f32 from vector<1x1x1xf32>
    %966 = arith.subf %965, %607 : f32
    %c0_294 = arith.constant 0 : index
    %c0_295 = arith.constant 0 : index
    %967 = memref.load %arg5[%c0_294, %c0_295] : memref<1x1xf32, #tpu.memory_space<smem>>
    memref.store %966, %arg5[%c0_294, %c0_295] : memref<1x1xf32, #tpu.memory_space<smem>>
    return
  }
}

</mosaic_0001>

<llo_original>
// kernel: bilstm_crf_forward.1
$region0: #{bilstm_crf_forward.1}
  #allocation0 [shape = 'u32[]', space=smem, size = 0x4, offset = 0x4, fixed_abs, tag = 'smem constant byte address 0x4 - core index']
  #allocation1 [shape = 'u32[144,128]{1,0:T(1,128)}', space=vmem, size = 0x12000, scoped, tag = 'internal scratch']
  #allocation2 [shape = 'f32[16,256]{1,0:T(8,128)}', space=vmem, size = 0x4000, scoped, tag = 'scratch operand']
  #allocation3 [shape = 'f32[16,64]{1,0:T(8,128)}', space=vmem, size = 0x2000, scoped, tag = 'scratch operand']
  #allocation4 [shape = 'f32[16,64]{1,0:T(8,128)}', space=vmem, size = 0x2000, scoped, tag = 'scratch operand']
  #allocation5 [shape = 'f32[16,6]{1,0:T(8,128)}', space=vmem, size = 0x2000, scoped, tag = 'scratch operand']
  %s0 = inlined_call_operand.vmem [shape: f32[16,300], index: 0, kind: input, shape index: {}]
  %s1 = inlined_call_operand.vmem [shape: f32[16,2], index: 1, kind: input, shape index: {}]
  %s2 = inlined_call_operand.hbm [shape: bf16[300,256], index: 2, kind: input, shape index: {}]
  %s3 = inlined_call_operand.vmem [shape: f32[200,256], index: 3, kind: input, shape index: {}]
  %s4 = inlined_call_operand.vmem [shape: f32[80,6], index: 4, kind: input, shape index: {}]
  %s5 = inlined_call_operand.hbm [shape: f32[1,1], index: 5, kind: output, shape index: {}]
  %s6 = sld [smem:[#allocation0]]
  $region34: #{bilstm_crf_forward.1} parent=0
    _
  %s8 = ssub.s32 1, %s6
  %s9 = scalar_select 0, %s8, %s6
  $region1: #{bilstm_crf_forward.1} parent=0
    #allocation6 [shape = 'u8[155648]{0}', space=vmem, size = 0x26000, scoped, tag = 'input window, operand 2, single buffered']
    #allocation7 [shape = 's32[1]{0}', space=sflag, size = 0x4, scoped, tag = 'scoped memory for bilstm_crf_forward.1']
    #allocation8 [shape = 's32[1]{0}', space=sflag, size = 0x4, scoped, tag = 'scoped memory for bilstm_crf_forward.1']
    #allocation9 [shape = 'u8[512]{0}', space=smem, size = 0x200, scoped, tag = 'output window, operand 0, single buffered']
    %10 = vsyncpa [#allocation7], 0
    %11 = vsyncpa [#allocation8], 0
    // Predicated region
    $region2: #{bilstm_crf_forward.1} parent=1 // pred_check
      _
    $region3: #{bilstm_crf_forward.1} parent=1 // pred_check_branch
      %13 = sbr.rel (0) target = $region5
    $region4: #{bilstm_crf_forward.1} parent=1 // pred_region
      _
    $region5: #{bilstm_crf_forward.1} parent=1 // pred_fallthru
      _
    // Predicated region
    $region6: #{bilstm_crf_forward.1} parent=1 // pred_check
      _
    $region7: #{bilstm_crf_forward.1} parent=1 // pred_check_branch
      %15 = sbr.rel (0) target = $region9
    $region8: #{bilstm_crf_forward.1} parent=1 // pred_region
      _
    $region9: #{bilstm_crf_forward.1} parent=1 // pred_fallthru
      _
    // Predicated region
    $region10: #{bilstm_crf_forward.1} parent=1 // pred_check
      _
    $region11: #{bilstm_crf_forward.1} parent=1 // pred_check_branch
      %17 = sbr.rel (0) target = $region13
    $region12: #{bilstm_crf_forward.1} parent=1 // pred_region
      %s19 = ssub.s32 4864, 4864
      %20 = vsyncadd [#allocation7], %s19
      %s21 = sshll.u32 [#allocation6], 4
      %s22 = int_to_ptr.vmem [resolvable:$true] %s21
      %27 = dma.hbm_to_vmem [thread:$0]  %s2, 4864, %s22, [#allocation7], 128, 128, 8
    $region13: #{bilstm_crf_forward.1} parent=1 // pred_fallthru
      _
    // Predicated region
    $region14: #{bilstm_crf_forward.1} parent=1 // pred_check
      _
    $region15: #{bilstm_crf_forward.1} parent=1 // pred_check_branch
      %29 = sbr.rel (0) target = $region17
    $region16: #{bilstm_crf_forward.1} parent=1 // pred_region
      _
    $region17: #{bilstm_crf_forward.1} parent=1 // pred_fallthru
      _
    // Predicated region
    $region18: #{bilstm_crf_forward.1} parent=1 // pred_check
      _
    $region19: #{bilstm_crf_forward.1} parent=1 // pred_check_branch
      %31 = sbr.rel (0) target = $region21
    $region20: #{bilstm_crf_forward.1} parent=1 // pred_region
      _
    $region21: #{bilstm_crf_forward.1} parent=1 // pred_fallthru
      _
    // Predicated region
    $region22: #{bilstm_crf_forward.1} parent=1 // pred_check
      _
    $region23: #{bilstm_crf_forward.1} parent=1 // pred_check_branch
      %33 = sbr.rel (0) target = $region25
    $region24: #{bilstm_crf_forward.1} parent=1 // pred_region
      %34 = dma.done [#allocation7], 4864
    $region25: #{bilstm_crf_forward.1} parent=1 // pred_fallthru
      _
    %v36 = vlaneseq
    %v37 = vand.u32 %v36, 127
    %v38 = vadd.s32 %v37, 128
    %vm39 = vcmp.ge.s32.totalorder %v37, 128
    %vm40 = vcmp.ge.s32.totalorder %v38, 128
    %vm41 = vcmp.lt.s32.totalorder %v37, 192
    %vm42 = vcmp.lt.s32.totalorder %v38, 192
    %vm43 = vmand %vm39, %vm41
    %vm44 = vmand %vm40, %vm42
    %vm45 = vcmp.lt.s32.totalorder %v37, 0
    %v46 = vsub.s32 0, %v37
    %v47 = vsel %vm45, %v46, %v37
    %v48 = vshrl.u32 %v47, 6
    %v49 = vand.u32 %v47, 63
    %v50 = vsub.s32 0, %v49
    %v51 = vsel %vm45, %v50, %v49
    %vm52 = vcmp.lt.s32.totalorder %v38, 0
    %v53 = vsub.s32 0, %v38
    %v54 = vsel %vm52, %v53, %v38
    %v55 = vshrl.u32 %v54, 6
    %v56 = vand.u32 %v54, 63
    %v57 = vsub.s32 0, %v56
    %v58 = vsel %vm52, %v57, %v56
    %vm59 = vcmp.ne.s32.totalorder %v51, 0
    %vm60 = vcmp.ne.s32.totalorder %v58, 0
    %vm61 = vcmp.lt.s32.totalorder %v51, 0
    %vm62 = vcmp.lt.s32.totalorder %v58, 0
    %vm63 = vmand %vm61, %vm59
    %vm64 = vmand %vm62, %vm60
    %v65 = vadd.s32 %v51, 64
    %v66 = vadd.s32 %v58, 64
    %v67 = vsel %vm63, %v65, %v51
    %v68 = vsel %vm64, %v66, %v58
    %vm69 = vcmp.lt.s32.totalorder %v67, 32
    %vm70 = vcmp.lt.s32.totalorder %v68, 32
    %v71 = vld [vmem:[%s0] sm:$0xff]
    %v72 = vld [vmem:[%s0 + $0x8] sm:$0xff]
    %v73 = vld [vmem:[%s0 + $0x10] sm:$0xff]
    %v74 = vld [vmem:[%s0 + $0x18] sm:$0xff]
    %v75 = vld [vmem:[%s0 + $0x20] sm:$0xff]
    %v76 = vld [vmem:[%s0 + $0x28] sm:$0xff]
    %v77 = vpack.c.bf16 %v74, %v71
    %v78 = vpack.c.bf16 %v75, %v72
    %v79 = vpack.c.bf16 %v76, %v73
    %v80 = vld [vmem:[#allocation6] sm:$0xff]
    %v81 = vld [vmem:[#allocation6 + $0x8] sm:$0xff]
    %v82 = vld [vmem:[#allocation6 + $0x10] sm:$0xff]
    %v83 = vld [vmem:[#allocation6 + $0x18] sm:$0xff]
    %v84 = vld [vmem:[#allocation6 + $0x20] sm:$0xff]
    %v85 = vld [vmem:[#allocation6 + $0x28] sm:$0xff]
    %v86 = vld [vmem:[#allocation6 + $0x30] sm:$0xff]
    %v87 = vld [vmem:[#allocation6 + $0x38] sm:$0xff]
    %v88 = vld [vmem:[#allocation6 + $0x40] sm:$0xff]
    %v89 = vld [vmem:[#allocation6 + $0x48] sm:$0xff]
    %v90 = vld [vmem:[#allocation6 + $0x50] sm:$0xff]
    %v91 = vld [vmem:[#allocation6 + $0x58] sm:$0xff]
    %v92 = vld [vmem:[#allocation6 + $0x60] sm:$0xff]
    %v93 = vld [vmem:[#allocation6 + $0x68] sm:$0xff]
    %v94 = vld [vmem:[#allocation6 + $0x70] sm:$0xff]
    %v95 = vld [vmem:[#allocation6 + $0x78] sm:$0xff]
    %v96 = vld [vmem:[#allocation6 + $0x80] sm:$0xff]
    %v97 = vld [vmem:[#allocation6 + $0x88] sm:$0xff]
    %v98 = vld [vmem:[#allocation6 + $0x90] sm:$0xff]
    %v99 = vld [vmem:[#allocation6 + $0x98] sm:$0xff]
    %v100 = vld [vmem:[#allocation6 + $0xa0] sm:$0xff]
    %v101 = vld [vmem:[#allocation6 + $0xa8] sm:$0xff]
    %v102 = vld [vmem:[#allocation6 + $0xb0] sm:$0xff]
    %v103 = vld [vmem:[#allocation6 + $0xb8] sm:$0xff]
    %v104 = vld [vmem:[#allocation6 + $0xc0] sm:$0xff]
    %v105 = vld [vmem:[#allocation6 + $0xc8] sm:$0xff]
    %v106 = vld [vmem:[#allocation6 + $0xd0] sm:$0xff]
    %v107 = vld [vmem:[#allocation6 + $0xd8] sm:$0xff]
    %v108 = vld [vmem:[#allocation6 + $0xe0] sm:$0xff]
    %v109 = vld [vmem:[#allocation6 + $0xe8] sm:$0xff]
    %v110 = vld [vmem:[#allocation6 + $0xf0] sm:$0xff]
    %v111 = vld [vmem:[#allocation6 + $0xf8] sm:$0xff]
    %v112 = vld [vmem:[#allocation6 + $0x100] sm:$0xff]
    %v113 = vld [vmem:[#allocation6 + $0x108] sm:$0xff]
    %v114 = vld [vmem:[#allocation6 + $0x110] sm:$0xff]
    %v115 = vld [vmem:[#allocation6 + $0x118] sm:$0xff]
    %v116 = vld [vmem:[#allocation6 + $0x120] sm:$0xff]
    %v117 = vld [vmem:[#allocation6 + $0x128] sm:$0x33]
    %s118 = scalar_lea.vmem %s3, 384
    %v119 = vld [vmem:[%s118] ss:$8 sm:$0x3]
    %v121 = vlaneseq
    %v122 = vshrl.u32 %v121, 7
    %v123 = vsub.s32 0, %v122
    %v124 = vrot.slane %v119, %v123
    %v125 = vlaneseq
    %v126 = vshrl.u32 %v125, 7
    %v127 = vsub.s32 1, %v126
    %v128 = vrot.slane %v119, %v127
    %v169 = vunpack.c.l.b16 %v80
    %v170 = vunpack.c.h.b16 %v80
    %v171 = vunpack.c.l.b16 %v81
    %v172 = vunpack.c.h.b16 %v81
    %v173 = vunpack.c.l.b16 %v82
    %v174 = vunpack.c.h.b16 %v82
    %v175 = vunpack.c.l.b16 %v83
    %v176 = vunpack.c.h.b16 %v83
    %v177 = vunpack.c.l.b16 %v84
    %v178 = vunpack.c.h.b16 %v84
    %v179 = vunpack.c.l.b16 %v85
    %v180 = vunpack.c.h.b16 %v85
    %v181 = vunpack.c.l.b16 %v86
    %v182 = vunpack.c.h.b16 %v86
    %v183 = vunpack.c.l.b16 %v87
    %v184 = vunpack.c.h.b16 %v87
    %v185 = vunpack.c.l.b16 %v88
    %v186 = vunpack.c.h.b16 %v88
    %v187 = vunpack.c.l.b16 %v89
    %v188 = vunpack.c.h.b16 %v89
    %v189 = vunpack.c.l.b16 %v90
    %v190 = vunpack.c.h.b16 %v90
    %v191 = vunpack.c.l.b16 %v91
    %v192 = vunpack.c.h.b16 %v91
    %v193 = vunpack.c.l.b16 %v92
    %v194 = vunpack.c.h.b16 %v92
    %v195 = vunpack.c.l.b16 %v93
    %v196 = vunpack.c.h.b16 %v93
    %v197 = vunpack.c.l.b16 %v94
    %v198 = vunpack.c.h.b16 %v94
    %v199 = vunpack.c.l.b16 %v95
    %v200 = vunpack.c.h.b16 %v95
    %v201 = vunpack.c.l.b16 %v96
    %v202 = vunpack.c.h.b16 %v96
    %v203 = vunpack.c.l.b16 %v97
    %v204 = vunpack.c.h.b16 %v97
    %v205 = vunpack.c.l.b16 %v98
    %v206 = vunpack.c.h.b16 %v98
    %v207 = vunpack.c.l.b16 %v99
    %v208 = vunpack.c.h.b16 %v99
    %v209 = vunpack.c.l.b16 %v100
    %v210 = vunpack.c.h.b16 %v100
    %v211 = vunpack.c.l.b16 %v101
    %v212 = vunpack.c.h.b16 %v101
    %v213 = vunpack.c.l.b16 %v102
    %v214 = vunpack.c.h.b16 %v102
    %v215 = vunpack.c.l.b16 %v103
    %v216 = vunpack.c.h.b16 %v103
    %v217 = vunpack.c.l.b16 %v104
    %v218 = vunpack.c.h.b16 %v104
    %v219 = vunpack.c.l.b16 %v105
    %v220 = vunpack.c.h.b16 %v105
    %v221 = vunpack.c.l.b16 %v106
    %v222 = vunpack.c.h.b16 %v106
    %v223 = vunpack.c.l.b16 %v107
    %v224 = vunpack.c.h.b16 %v107
    %v225 = vunpack.c.l.b16 %v108
    %v226 = vunpack.c.h.b16 %v108
    %v227 = vunpack.c.l.b16 %v109
    %v228 = vunpack.c.h.b16 %v109
    %v229 = vunpack.c.l.b16 %v110
    %v230 = vunpack.c.h.b16 %v110
    %v231 = vunpack.c.l.b16 %v111
    %v232 = vunpack.c.h.b16 %v111
    %v233 = vunpack.c.l.b16 %v112
    %v234 = vunpack.c.h.b16 %v112
    %v235 = vunpack.c.l.b16 %v113
    %v236 = vunpack.c.h.b16 %v113
    %v237 = vunpack.c.l.b16 %v114
    %v238 = vunpack.c.h.b16 %v114
    %v239 = vunpack.c.l.b16 %v115
    %v240 = vunpack.c.h.b16 %v115
    %v241 = vunpack.c.l.b16 %v116
    %v242 = vunpack.c.h.b16 %v116
    %v243 = vunpack.c.l.b16 %v117
    %v244 = vunpack.c.h.b16 %v117
    %v245 = vpack.c.b16 %v171, %v169
    %v246 = vpack.c.b16 %v172, %v170
    %v247 = vpack.c.b16 %v175, %v173
    %v248 = vpack.c.b16 %v176, %v174
    %v249 = vpack.c.b16 %v179, %v177
    %v250 = vpack.c.b16 %v180, %v178
    %v251 = vpack.c.b16 %v183, %v181
    %v252 = vpack.c.b16 %v184, %v182
    %v253 = vpack.c.b16 %v187, %v185
    %v254 = vpack.c.b16 %v188, %v186
    %v255 = vpack.c.b16 %v191, %v189
    %v256 = vpack.c.b16 %v192, %v190
    %v257 = vpack.c.b16 %v195, %v193
    %v258 = vpack.c.b16 %v196, %v194
    %v259 = vpack.c.b16 %v199, %v197
    %v260 = vpack.c.b16 %v200, %v198
    %v261 = vpack.c.b16 %v203, %v201
    %v262 = vpack.c.b16 %v204, %v202
    %v263 = vpack.c.b16 %v207, %v205
    %v264 = vpack.c.b16 %v208, %v206
    %v265 = vpack.c.b16 %v211, %v209
    %v266 = vpack.c.b16 %v212, %v210
    %v267 = vpack.c.b16 %v215, %v213
    %v268 = vpack.c.b16 %v216, %v214
    %v269 = vpack.c.b16 %v219, %v217
    %v270 = vpack.c.b16 %v220, %v218
    %v271 = vpack.c.b16 %v223, %v221
    %v272 = vpack.c.b16 %v224, %v222
    %v273 = vpack.c.b16 %v227, %v225
    %v274 = vpack.c.b16 %v228, %v226
    %v275 = vpack.c.b16 %v231, %v229
    %v276 = vpack.c.b16 %v232, %v230
    %v277 = vpack.c.b16 %v235, %v233
    %v278 = vpack.c.b16 %v236, %v234
    %v279 = vpack.c.b16 %v239, %v237
    %v280 = vpack.c.b16 %v240, %v238
    %v281 = vpack.c.b16 %v243, %v241
    %v282 = vpack.c.b16 %v244, %v242
    %vm319 = vcmask 359424
    %v321 = vsel %vm319, %v79, 0
    %vm323 = vcmask 1045504
    %v325 = vsel %vm323, %v281, 0
    %v328 = vsel %vm323, %v282, 0
    %330 = vmatprep.subr.bf16.mxu0 %v260
    %331 = vmatpush1.bf16.msra.mxu0 %v259
    %332 = vmatprep.subr.bf16.mxu0 %v258
    %333 = vmatpush1.bf16.msra.mxu0 %v257
    %334 = vmatprep.subr.bf16.mxu0 %v256
    %335 = vmatpush1.bf16.msra.mxu0 %v255
    %336 = vmatprep.subr.bf16.mxu0 %v254
    %337 = vmatpush1.bf16.msra.mxu0 %v253
    %338 = vmatprep.subr.bf16.mxu0 %v252
    %339 = vmatpush1.bf16.msra.mxu0 %v251
    %340 = vmatprep.subr.bf16.mxu0 %v250
    %341 = vmatpush1.bf16.msra.mxu0 %v249
    %342 = vmatprep.subr.bf16.mxu0 %v248
    %343 = vmatpush1.bf16.msra.mxu0 %v247
    %344 = vmatprep.subr.bf16.mxu0 %v246
    %345 = vmatpush1.bf16.msra.mxu0 %v245
    %346 = vmatprep.subr.bf16.mxu0 %v276
    %347 = vmatpush2.bf16.msra.mxu0 %v275
    %348 = vmatprep.subr.bf16.mxu0 %v274
    %349 = vmatpush2.bf16.msra.mxu0 %v273
    %350 = vmatprep.subr.bf16.mxu0 %v272
    %351 = vmatpush2.bf16.msra.mxu0 %v271
    %352 = vmatprep.subr.bf16.mxu0 %v270
    %353 = vmatpush2.bf16.msra.mxu0 %v269
    %354 = vmatprep.subr.bf16.mxu0 %v268
    %355 = vmatpush2.bf16.msra.mxu0 %v267
    %356 = vmatprep.subr.bf16.mxu0 %v266
    %357 = vmatpush2.bf16.msra.mxu0 %v265
    %358 = vmatprep.subr.bf16.mxu0 %v264
    %359 = vmatpush2.bf16.msra.mxu0 %v263
    %360 = vmatprep.subr.bf16.mxu0 %v262
    %361 = vmatpush2.bf16.msra.mxu0 %v261
    %362 = vmatprep.mubr.bf16.mxu0 %v78
    %363 = vmatmul.mubr.bf16.gmra.mxu0 %v77
    %v364 = vpop.f32.mrf.mxu0
    %v365 = vadd.f32 %v124, %v364
    %v366 = vpop.f32.mrf.mxu0
    %v367 = vadd.f32 %v128, %v366
    %v368 = vpop.f32.mrf.mxu0
    %v369 = vadd.f32 %v124, %v368
    %v370 = vpop.f32.mrf.mxu0
    %v371 = vadd.f32 %v128, %v370
    %372 = vdwg.mxu0
    %373 = vmatprep.subr.bf16.mxu0 0
    %374 = vmatpush1.bf16.msra.mxu0 0
    %375 = vmatprep.subr.bf16.mxu0 0
    %376 = vmatpush1.bf16.msra.mxu0 0
    %377 = vmatprep.subr.bf16.mxu0 0
    %378 = vmatpush1.bf16.msra.mxu0 0
    %379 = vmatprep.subr.bf16.mxu0 0
    %380 = vmatpush1.bf16.msra.mxu0 0
    %381 = vmatprep.subr.bf16.mxu0 0
    %382 = vmatpush1.bf16.msra.mxu0 0
    %383 = vmatprep.subr.bf16.mxu0 %v328
    %384 = vmatpush1.bf16.msra.mxu0 %v325
    %385 = vmatprep.subr.bf16.mxu0 %v280
    %386 = vmatpush1.bf16.msra.mxu0 %v279
    %387 = vmatprep.subr.bf16.mxu0 %v278
    %388 = vmatpush1.bf16.msra.mxu0 %v277
    %389 = vmatprep.subr.bf16.mxu0 0
    %390 = vmatpush2.bf16.msra.mxu0 0
    %391 = vmatprep.subr.bf16.mxu0 0
    %392 = vmatpush2.bf16.msra.mxu0 0
    %393 = vmatprep.subr.bf16.mxu0 0
    %394 = vmatpush2.bf16.msra.mxu0 0
    %395 = vmatprep.subr.bf16.mxu0 0
    %396 = vmatpush2.bf16.msra.mxu0 0
    %397 = vmatprep.subr.bf16.mxu0 0
    %398 = vmatpush2.bf16.msra.mxu0 0
    %399 = vmatprep.subr.bf16.mxu0 0
    %400 = vmatpush2.bf16.msra.mxu0 0
    %401 = vmatprep.subr.bf16.mxu0 0
    %402 = vmatpush2.bf16.msra.mxu0 0
    %403 = vmatprep.subr.bf16.mxu0 0
    %404 = vmatpush2.bf16.msra.mxu0 0
    %405 = vmatprep.mubr.bf16.mxu0 0
    %406 = vmatmul.mubr.bf16.gmra.mxu0 %v321
    %v407 = vpop.f32.mrf.mxu0
    %v408 = vadd.f32 %v365, %v407
    %v409 = vpop.f32.mrf.mxu0
    %v410 = vadd.f32 %v367, %v409
    %v411 = vpop.f32.mrf.mxu0
    %v412 = vadd.f32 %v369, %v411
    %v413 = vpop.f32.mrf.mxu0
    %v414 = vadd.f32 %v371, %v413
    %415 = vdwg.mxu0
    %416 = vst [vmem:[#allocation2] sm:$0xff] %v408
    %417 = vst [vmem:[#allocation2 + $0x8] sm:$0xff] %v410
    %418 = vst [vmem:[#allocation2 + $0x10] sm:$0xff] %v412
    %419 = vst [vmem:[#allocation2 + $0x18] sm:$0xff] %v414
    %v420 = vld [vmem:[%s3] sm:$0xff]
    %v421 = vld [vmem:[%s3 + $0x8] sm:$0xff]
    %v422 = vld [vmem:[%s3 + $0x10] sm:$0xff]
    %v423 = vld [vmem:[%s3 + $0x18] sm:$0xff]
    %v424 = vld [vmem:[%s3 + $0x20] sm:$0xff]
    %v425 = vld [vmem:[%s3 + $0x28] sm:$0xff]
    %v426 = vld [vmem:[%s3 + $0x30] sm:$0xff]
    %v427 = vld [vmem:[%s3 + $0x38] sm:$0xff]
    %v428 = vld [vmem:[%s3 + $0x40] sm:$0xff]
    %v429 = vld [vmem:[%s3 + $0x48] sm:$0xff]
    %v430 = vld [vmem:[%s3 + $0x50] sm:$0xff]
    %v431 = vld [vmem:[%s3 + $0x58] sm:$0xff]
    %v432 = vld [vmem:[%s3 + $0x60] sm:$0xff]
    %v433 = vld [vmem:[%s3 + $0x68] sm:$0xff]
    %v434 = vld [vmem:[%s3 + $0x70] sm:$0xff]
    %v435 = vld [vmem:[%s3 + $0x78] sm:$0xff]
    %v436 = vld [vmem:[#allocation2] sm:$0x3]
    %v437 = vld [vmem:[#allocation2 + $0x8] sm:$0x3]
    %v438 = vld [vmem:[#allocation2 + $0x10] sm:$0xc0]
    %v439 = vld [vmem:[#allocation2 + $0x18] sm:$0xc0]
    %v442 = vrot.slane %v438, 6
    %v443 = vrot.slane %v439, 6
    %v446 = vsel %vm69, %v436, %v442
    %v447 = vsel %vm70, %v437, %v443
    %vm448 = vcmask 523264
    %v450 = vsel %vm448, 0.0, 0
    %452 = vmatprep.subr.mxu0 0.0
    %453 = vmatpush1.msra.mxu0 0.0
    %454 = vmatprep.subr.mxu0 0.0
    %455 = vmatpush1.msra.mxu0 0.0
    %456 = vmatprep.subr.mxu0 0.0
    %457 = vmatpush1.msra.mxu0 0.0
    %458 = vmatprep.subr.mxu0 0.0
    %459 = vmatpush1.msra.mxu0 0.0
    %460 = vmatprep.subr.mxu0 0.0
    %461 = vmatpush1.msra.mxu0 0.0
    %462 = vmatprep.subr.mxu0 0.0
    %463 = vmatpush1.msra.mxu0 0.0
    %464 = vmatprep.subr.mxu0 0.0
    %465 = vmatpush1.msra.mxu0 0.0
    %466 = vmatprep.subr.mxu0 0.0
    %467 = vmatpush1.msra.mxu0 0.0
    %468 = vmatprep.subr.mxu0 %v435
    %469 = vmatpush1.msra.mxu0 %v434
    %470 = vmatprep.subr.mxu0 %v433
    %471 = vmatpush1.msra.mxu0 %v432
    %472 = vmatprep.subr.mxu0 %v431
    %473 = vmatpush1.msra.mxu0 %v430
    %474 = vmatprep.subr.mxu0 %v429
    %475 = vmatpush1.msra.mxu0 %v428
    %476 = vmatprep.subr.mxu0 %v427
    %477 = vmatpush1.msra.mxu0 %v426
    %478 = vmatprep.subr.mxu0 %v425
    %479 = vmatpush1.msra.mxu0 %v424
    %480 = vmatprep.subr.mxu0 %v423
    %481 = vmatpush1.msra.mxu0 %v422
    %482 = vmatprep.subr.mxu0 %v421
    %483 = vmatpush1.msra.mxu0 %v420
    %484 = vmatprep.subr.mxu0 0.0
    %485 = vmatpush2.msra.mxu0 0.0
    %486 = vmatprep.subr.mxu0 0.0
    %487 = vmatpush2.msra.mxu0 0.0
    %488 = vmatprep.subr.mxu0 0.0
    %489 = vmatpush2.msra.mxu0 0.0
    %490 = vmatprep.subr.mxu0 0.0
    %491 = vmatpush2.msra.mxu0 0.0
    %492 = vmatprep.subr.mxu0 0.0
    %493 = vmatpush2.msra.mxu0 0.0
    %494 = vmatprep.subr.mxu0 0.0
    %495 = vmatpush2.msra.mxu0 0.0
    %496 = vmatprep.subr.mxu0 0.0
    %497 = vmatpush2.msra.mxu0 0.0
    %498 = vmatprep.subr.mxu0 0.0
    %499 = vmatpush2.msra.mxu0 0.0
    %500 = vmatprep.subr.mxu0 0.0
    %501 = vmatpush2.msra.mxu0 0.0
    %502 = vmatprep.subr.mxu0 0.0
    %503 = vmatpush2.msra.mxu0 0.0
    %504 = vmatprep.subr.mxu0 0.0
    %505 = vmatpush2.msra.mxu0 0.0
    %506 = vmatprep.subr.mxu0 0.0
    %507 = vmatpush2.msra.mxu0 0.0
    %508 = vmatprep.subr.mxu0 0.0
    %509 = vmatpush2.msra.mxu0 0.0
    %510 = vmatprep.subr.mxu0 0.0
    %511 = vmatpush2.msra.mxu0 0.0
    %512 = vmatprep.subr.mxu0 0.0
    %513 = vmatpush2.msra.mxu0 0.0
    %514 = vmatprep.subr.mxu0 0.0
    %515 = vmatpush2.msra.mxu0 0.0
    %516 = vmatprep.mubr.f32.mxu0 0.0
    %517 = vmatmul.mubr.f32.gmra.mxu0 %v450
    %v518 = vpop.f32.mrf.mxu0
    %v519 = vadd.f32 0.0, %v518
    %v520 = vpop.f32.mrf.mxu0
    %v521 = vadd.f32 0.0, %v520
    %522 = vdwg.mxu0
    %v523 = vadd.f32 %v446, %v519
    %v524 = vadd.f32 %v447, %v521
    %v525 = vmul.f32 %v523, 2.0
    %v526 = vmul.f32 %v524, 2.0
    %v527 = vsel %vm43, %v525, %v523
    %v528 = vsel %vm44, %v526, %v524
    %v529 = vxor.u32 %v527, 2147483648
    %v530 = vxor.u32 %v528, 2147483648
    %v531 = vmul.f32 %v529, 1.442695
    %v532 = vpow.pop %v531
    %v533 = vmul.f32 %v530, 1.442695
    %v534 = vpow.pop %v533
    %v535 = vadd.f32 %v532, 1.0
    %v536 = vadd.f32 %v534, 1.0
    %v537 = vrcp.pop %v535
    %v538 = vmul.f32 1.0, %v537
    %v539 = vrcp.pop %v536
    %v540 = vmul.f32 1.0, %v539
    %v541 = vmul.f32 %v538, 2.0
    %v542 = vmul.f32 %v540, 2.0
    %v543 = vsub.f32 %v541, 1.0
    %v544 = vsub.f32 %v542, 1.0
    %v545 = vsel %vm43, %v543, %v538
    %v546 = vsel %vm44, %v544, %v540
    %v547 = vmul.f32 %v545, 0.0
    %v548 = vmul.f32 %v545, %v546
    %550 = vrot.lane.b32.xlu0 %v548, 64
    %v551 = vpop.permute.xlu0 %550
    %v553 = vadd.f32 %v547, %v551
    %v554 = vtanh.pop %v553
    %v555 = vmul.f32 %v546, %v554
    %557 = vrot.lane.b32.xlu0 %v555, 64
    %v558 = vpop.permute.xlu0 %557
    %vm560 = vcmask 254976
    %561 = vst.msk [vmem:[#allocation3] sm:$0x3] %vm560, %v558
    %vm562 = vcmask 517376
    %563 = vst.msk [vmem:[#allocation3 + $0xe] sm:$0x3] %vm562, %v558
    %v564 = vld [vmem:[#allocation2] sm:$0xc]
    %v565 = vld [vmem:[#allocation2 + $0x8] sm:$0xc]
    %v566 = vld [vmem:[#allocation2 + $0x10] sm:$0x30]
    %v567 = vld [vmem:[#allocation2 + $0x18] sm:$0x30]
    %v570 = vrot.slane %v566, 2
    %v571 = vrot.slane %v567, 2
    %v574 = vsel %vm69, %v564, %v570
    %v575 = vsel %vm70, %v565, %v571
    %v576 = vsel %vm448, %v558, 0
    %578 = vmatprep.subr.mxu0 0.0
    %579 = vmatpush1.msra.mxu0 0.0
    %580 = vmatprep.subr.mxu0 0.0
    %581 = vmatpush1.msra.mxu0 0.0
    %582 = vmatprep.subr.mxu0 0.0
    %583 = vmatpush1.msra.mxu0 0.0
    %584 = vmatprep.subr.mxu0 0.0
    %585 = vmatpush1.msra.mxu0 0.0
    %586 = vmatprep.subr.mxu0 0.0
    %587 = vmatpush1.msra.mxu0 0.0
    %588 = vmatprep.subr.mxu0 0.0
    %589 = vmatpush1.msra.mxu0 0.0
    %590 = vmatprep.subr.mxu0 0.0
    %591 = vmatpush1.msra.mxu0 0.0
    %592 = vmatprep.subr.mxu0 0.0
    %593 = vmatpush1.msra.mxu0 0.0
    %594 = vmatprep.subr.mxu0 %v435
    %595 = vmatpush1.msra.mxu0 %v434
    %596 = vmatprep.subr.mxu0 %v433
    %597 = vmatpush1.msra.mxu0 %v432
    %598 = vmatprep.subr.mxu0 %v431
    %599 = vmatpush1.msra.mxu0 %v430
    %600 = vmatprep.subr.mxu0 %v429
    %601 = vmatpush1.msra.mxu0 %v428
    %602 = vmatprep.subr.mxu0 %v427
    %603 = vmatpush1.msra.mxu0 %v426
    %604 = vmatprep.subr.mxu0 %v425
    %605 = vmatpush1.msra.mxu0 %v424
    %606 = vmatprep.subr.mxu0 %v423
    %607 = vmatpush1.msra.mxu0 %v422
    %608 = vmatprep.subr.mxu0 %v421
    %609 = vmatpush1.msra.mxu0 %v420
    %610 = vmatprep.subr.mxu0 0.0
    %611 = vmatpush2.msra.mxu0 0.0
    %612 = vmatprep.subr.mxu0 0.0
    %613 = vmatpush2.msra.mxu0 0.0
    %614 = vmatprep.subr.mxu0 0.0
    %615 = vmatpush2.msra.mxu0 0.0
    %616 = vmatprep.subr.mxu0 0.0
    %617 = vmatpush2.msra.mxu0 0.0
    %618 = vmatprep.subr.mxu0 0.0
    %619 = vmatpush2.msra.mxu0 0.0
    %620 = vmatprep.subr.mxu0 0.0
    %621 = vmatpush2.msra.mxu0 0.0
    %622 = vmatprep.subr.mxu0 0.0
    %623 = vmatpush2.msra.mxu0 0.0
    %624 = vmatprep.subr.mxu0 0.0
    %625 = vmatpush2.msra.mxu0 0.0
    %626 = vmatprep.subr.mxu0 0.0
    %627 = vmatpush2.msra.mxu0 0.0
    %628 = vmatprep.subr.mxu0 0.0
    %629 = vmatpush2.msra.mxu0 0.0
    %630 = vmatprep.subr.mxu0 0.0
    %631 = vmatpush2.msra.mxu0 0.0
    %632 = vmatprep.subr.mxu0 0.0
    %633 = vmatpush2.msra.mxu0 0.0
    %634 = vmatprep.subr.mxu0 0.0
    %635 = vmatpush2.msra.mxu0 0.0
    %636 = vmatprep.subr.mxu0 0.0
    %637 = vmatpush2.msra.mxu0 0.0
    %638 = vmatprep.subr.mxu0 0.0
    %639 = vmatpush2.msra.mxu0 0.0
    %640 = vmatprep.subr.mxu0 0.0
    %641 = vmatpush2.msra.mxu0 0.0
    %642 = vmatprep.mubr.f32.mxu0 0.0
    %643 = vmatmul.mubr.f32.gmra.mxu0 %v576
    %v644 = vpop.f32.mrf.mxu0
    %v645 = vadd.f32 0.0, %v644
    %v646 = vpop.f32.mrf.mxu0
    %v647 = vadd.f32 0.0, %v646
    %648 = vdwg.mxu0
    %v651 = vrot.slane %v645, 6
    %v652 = vrot.slane %v647, 6
    %v655 = vadd.f32 %v574, %v651
    %v656 = vadd.f32 %v575, %v652
    %v657 = vmul.f32 %v655, 2.0
    %v658 = vmul.f32 %v656, 2.0
    %v659 = vsel %vm43, %v657, %v655
    %v660 = vsel %vm44, %v658, %v656
    %v661 = vxor.u32 %v659, 2147483648
    %v662 = vxor.u32 %v660, 2147483648
    %v663 = vmul.f32 %v661, 1.442695
    %v664 = vpow.pop %v663
    %v665 = vmul.f32 %v662, 1.442695
    %v666 = vpow.pop %v665
    %v667 = vadd.f32 %v664, 1.0
    %v668 = vadd.f32 %v666, 1.0
    %v669 = vrcp.pop %v667
    %v670 = vmul.f32 1.0, %v669
    %v671 = vrcp.pop %v668
    %v672 = vmul.f32 1.0, %v671
    %v673 = vmul.f32 %v670, 2.0
    %v674 = vmul.f32 %v672, 2.0
    %v675 = vsub.f32 %v673, 1.0
    %v676 = vsub.f32 %v674, 1.0
    %v677 = vsel %vm43, %v675, %v670
    %v678 = vsel %vm44, %v676, %v672
    %v680 = vrot.slane %v553, 6
    %v682 = vmul.f32 %v677, %v680
    %v683 = vmul.f32 %v677, %v678
    %685 = vrot.lane.b32.xlu0 %v683, 64
    %v686 = vpop.permute.xlu0 %685
    %v688 = vadd.f32 %v682, %v686
    %v689 = vtanh.pop %v688
    %v690 = vmul.f32 %v678, %v689
    %692 = vrot.lane.b32.xlu0 %v690, 64
    %v693 = vpop.permute.xlu0 %692
    %vm695 = vcmask 257026
    %696 = vst.msk [vmem:[#allocation3] sm:$0xc] %vm695, %v693
    %vm697 = vcmask 519426
    %698 = vst.msk [vmem:[#allocation3 + $0xa] sm:$0xc] %vm697, %v693
    %v699 = vld [vmem:[#allocation2] sm:$0x30]
    %v700 = vld [vmem:[#allocation2 + $0x8] sm:$0x30]
    %v701 = vld [vmem:[#allocation2 + $0x10] sm:$0xc]
    %v702 = vld [vmem:[#allocation2 + $0x18] sm:$0xc]
    %v705 = vrot.slane %v701, 6
    %v706 = vrot.slane %v702, 6
    %v709 = vsel %vm69, %v699, %v705
    %v710 = vsel %vm70, %v700, %v706
    %v711 = vrot.slane %v690, 2
    %712 = vrot.lane.b32.xlu0 %v711, 64
    %v713 = vpop.permute.xlu0 %712
    %v714 = vsel %vm448, %v713, 0
    %716 = vmatprep.subr.mxu0 0.0
    %717 = vmatpush1.msra.mxu0 0.0
    %718 = vmatprep.subr.mxu0 0.0
    %719 = vmatpush1.msra.mxu0 0.0
    %720 = vmatprep.subr.mxu0 0.0
    %721 = vmatpush1.msra.mxu0 0.0
    %722 = vmatprep.subr.mxu0 0.0
    %723 = vmatpush1.msra.mxu0 0.0
    %724 = vmatprep.subr.mxu0 0.0
    %725 = vmatpush1.msra.mxu0 0.0
    %726 = vmatprep.subr.mxu0 0.0
    %727 = vmatpush1.msra.mxu0 0.0
    %728 = vmatprep.subr.mxu0 0.0
    %729 = vmatpush1.msra.mxu0 0.0
    %730 = vmatprep.subr.mxu0 0.0
    %731 = vmatpush1.msra.mxu0 0.0
    %732 = vmatprep.subr.mxu0 %v435
    %733 = vmatpush1.msra.mxu0 %v434
    %734 = vmatprep.subr.mxu0 %v433
    %735 = vmatpush1.msra.mxu0 %v432
    %736 = vmatprep.subr.mxu0 %v431
    %737 = vmatpush1.msra.mxu0 %v430
    %738 = vmatprep.subr.mxu0 %v429
    %739 = vmatpush1.msra.mxu0 %v428
    %740 = vmatprep.subr.mxu0 %v427
    %741 = vmatpush1.msra.mxu0 %v426
    %742 = vmatprep.subr.mxu0 %v425
    %743 = vmatpush1.msra.mxu0 %v424
    %744 = vmatprep.subr.mxu0 %v423
    %745 = vmatpush1.msra.mxu0 %v422
    %746 = vmatprep.subr.mxu0 %v421
    %747 = vmatpush1.msra.mxu0 %v420
    %748 = vmatprep.subr.mxu0 0.0
    %749 = vmatpush2.msra.mxu0 0.0
    %750 = vmatprep.subr.mxu0 0.0
    %751 = vmatpush2.msra.mxu0 0.0
    %752 = vmatprep.subr.mxu0 0.0
    %753 = vmatpush2.msra.mxu0 0.0
    %754 = vmatprep.subr.mxu0 0.0
    %755 = vmatpush2.msra.mxu0 0.0
    %756 = vmatprep.subr.mxu0 0.0
    %757 = vmatpush2.msra.mxu0 0.0
    %758 = vmatprep.subr.mxu0 0.0
    %759 = vmatpush2.msra.mxu0 0.0
    %760 = vmatprep.subr.mxu0 0.0
    %761 = vmatpush2.msra.mxu0 0.0
    %762 = vmatprep.subr.mxu0 0.0
    %763 = vmatpush2.msra.mxu0 0.0
    %764 = vmatprep.subr.mxu0 0.0
    %765 = vmatpush2.msra.mxu0 0.0
    %766 = vmatprep.subr.mxu0 0.0
    %767 = vmatpush2.msra.mxu0 0.0
    %768 = vmatprep.subr.mxu0 0.0
    %769 = vmatpush2.msra.mxu0 0.0
    %770 = vmatprep.subr.mxu0 0.0
    %771 = vmatpush2.msra.mxu0 0.0
    %772 = vmatprep.subr.mxu0 0.0
    %773 = vmatpush2.msra.mxu0 0.0
    %774 = vmatprep.subr.mxu0 0.0
    %775 = vmatpush2.msra.mxu0 0.0
    %776 = vmatprep.subr.mxu0 0.0
    %777 = vmatpush2.msra.mxu0 0.0
    %778 = vmatprep.subr.mxu0 0.0
    %779 = vmatpush2.msra.mxu0 0.0
    %780 = vmatprep.mubr.f32.mxu0 0.0
    %781 = vmatmul.mubr.f32.gmra.mxu0 %v714
    %v782 = vpop.f32.mrf.mxu0
    %v783 = vadd.f32 0.0, %v782
    %v784 = vpop.f32.mrf.mxu0
    %v785 = vadd.f32 0.0, %v784
    %786 = vdwg.mxu0
    %v789 = vrot.slane %v783, 4
    %v790 = vrot.slane %v785, 4
    %v793 = vadd.f32 %v709, %v789
    %v794 = vadd.f32 %v710, %v790
    %v795 = vmul.f32 %v793, 2.0
    %v796 = vmul.f32 %v794, 2.0
    %v797 = vsel %vm43, %v795, %v793
    %v798 = vsel %vm44, %v796, %v794
    %v799 = vxor.u32 %v797, 2147483648
    %v800 = vxor.u32 %v798, 2147483648
    %v801 = vmul.f32 %v799, 1.442695
    %v802 = vpow.pop %v801
    %v803 = vmul.f32 %v800, 1.442695
    %v804 = vpow.pop %v803
    %v805 = vadd.f32 %v802, 1.0
    %v806 = vadd.f32 %v804, 1.0
    %v807 = vrcp.pop %v805
    %v808 = vmul.f32 1.0, %v807
    %v809 = vrcp.pop %v806
    %v810 = vmul.f32 1.0, %v809
    %v811 = vmul.f32 %v808, 2.0
    %v812 = vmul.f32 %v810, 2.0
    %v813 = vsub.f32 %v811, 1.0
    %v814 = vsub.f32 %v812, 1.0
    %v815 = vsel %vm43, %v813, %v808
    %v816 = vsel %vm44, %v814, %v810
    %v818 = vrot.slane %v688, 6
    %v820 = vmul.f32 %v815, %v818
    %v821 = vmul.f32 %v815, %v816
    %823 = vrot.lane.b32.xlu0 %v821, 64
    %v824 = vpop.permute.xlu0 %823
    %v826 = vadd.f32 %v820, %v824
    %v827 = vtanh.pop %v826
    %v828 = vmul.f32 %v816, %v827
    %830 = vrot.lane.b32.xlu0 %v828, 64
    %v831 = vpop.permute.xlu0 %830
    %vm833 = vcmask 259076
    %834 = vst.msk [vmem:[#allocation3] sm:$0x30] %vm833, %v831
    %vm835 = vcmask 521476
    %836 = vst.msk [vmem:[#allocation3 + $0x6] sm:$0x30] %vm835, %v831
    %v837 = vld [vmem:[#allocation2] sm:$0xc0]
    %v838 = vld [vmem:[#allocation2 + $0x8] sm:$0xc0]
    %v839 = vld [vmem:[#allocation2 + $0x10] sm:$0x3]
    %v840 = vld [vmem:[#allocation2 + $0x18] sm:$0x3]
    %v843 = vrot.slane %v839, 2
    %v844 = vrot.slane %v840, 2
    %v847 = vsel %vm69, %v837, %v843
    %v848 = vsel %vm70, %v838, %v844
    %v849 = vrot.slane %v828, 4
    %850 = vrot.lane.b32.xlu0 %v849, 64
    %v851 = vpop.permute.xlu0 %850
    %v852 = vsel %vm448, %v851, 0
    %854 = vmatprep.subr.mxu0 0.0
    %855 = vmatpush1.msra.mxu0 0.0
    %856 = vmatprep.subr.mxu0 0.0
    %857 = vmatpush1.msra.mxu0 0.0
    %858 = vmatprep.subr.mxu0 0.0
    %859 = vmatpush1.msra.mxu0 0.0
    %860 = vmatprep.subr.mxu0 0.0
    %861 = vmatpush1.msra.mxu0 0.0
    %862 = vmatprep.subr.mxu0 0.0
    %863 = vmatpush1.msra.mxu0 0.0
    %864 = vmatprep.subr.mxu0 0.0
    %865 = vmatpush1.msra.mxu0 0.0
    %866 = vmatprep.subr.mxu0 0.0
    %867 = vmatpush1.msra.mxu0 0.0
    %868 = vmatprep.subr.mxu0 0.0
    %869 = vmatpush1.msra.mxu0 0.0
    %870 = vmatprep.subr.mxu0 %v435
    %871 = vmatpush1.msra.mxu0 %v434
    %872 = vmatprep.subr.mxu0 %v433
    %873 = vmatpush1.msra.mxu0 %v432
    %874 = vmatprep.subr.mxu0 %v431
    %875 = vmatpush1.msra.mxu0 %v430
    %876 = vmatprep.subr.mxu0 %v429
    %877 = vmatpush1.msra.mxu0 %v428
    %878 = vmatprep.subr.mxu0 %v427
    %879 = vmatpush1.msra.mxu0 %v426
    %880 = vmatprep.subr.mxu0 %v425
    %881 = vmatpush1.msra.mxu0 %v424
    %882 = vmatprep.subr.mxu0 %v423
    %883 = vmatpush1.msra.mxu0 %v422
    %884 = vmatprep.subr.mxu0 %v421
    %885 = vmatpush1.msra.mxu0 %v420
    %886 = vmatprep.subr.mxu0 0.0
    %887 = vmatpush2.msra.mxu0 0.0
    %888 = vmatprep.subr.mxu0 0.0
    %889 = vmatpush2.msra.mxu0 0.0
    %890 = vmatprep.subr.mxu0 0.0
    %891 = vmatpush2.msra.mxu0 0.0
    %892 = vmatprep.subr.mxu0 0.0
    %893 = vmatpush2.msra.mxu0 0.0
    %894 = vmatprep.subr.mxu0 0.0
    %895 = vmatpush2.msra.mxu0 0.0
    %896 = vmatprep.subr.mxu0 0.0
    %897 = vmatpush2.msra.mxu0 0.0
    %898 = vmatprep.subr.mxu0 0.0
    %899 = vmatpush2.msra.mxu0 0.0
    %900 = vmatprep.subr.mxu0 0.0
    %901 = vmatpush2.msra.mxu0 0.0
    %902 = vmatprep.subr.mxu0 0.0
    %903 = vmatpush2.msra.mxu0 0.0
    %904 = vmatprep.subr.mxu0 0.0
    %905 = vmatpush2.msra.mxu0 0.0
    %906 = vmatprep.subr.mxu0 0.0
    %907 = vmatpush2.msra.mxu0 0.0
    %908 = vmatprep.subr.mxu0 0.0
    %909 = vmatpush2.msra.mxu0 0.0
    %910 = vmatprep.subr.mxu0 0.0
    %911 = vmatpush2.msra.mxu0 0.0
    %912 = vmatprep.subr.mxu0 0.0
    %913 = vmatpush2.msra.mxu0 0.0
    %914 = vmatprep.subr.mxu0 0.0
    %915 = vmatpush2.msra.mxu0 0.0
    %916 = vmatprep.subr.mxu0 0.0
    %917 = vmatpush2.msra.mxu0 0.0
    %918 = vmatprep.mubr.f32.mxu0 0.0
    %919 = vmatmul.mubr.f32.gmra.mxu0 %v852
    %v920 = vpop.f32.mrf.mxu0
    %v921 = vadd.f32 0.0, %v920
    %v922 = vpop.f32.mrf.mxu0
    %v923 = vadd.f32 0.0, %v922
    %924 = vdwg.mxu0
    %v927 = vrot.slane %v921, 2
    %v928 = vrot.slane %v923, 2
    %v931 = vadd.f32 %v847, %v927
    %v932 = vadd.f32 %v848, %v928
    %v933 = vmul.f32 %v931, 2.0
    %v934 = vmul.f32 %v932, 2.0
    %v935 = vsel %vm43, %v933, %v931
    %v936 = vsel %vm44, %v934, %v932
    %v937 = vxor.u32 %v935, 2147483648
    %v938 = vxor.u32 %v936, 2147483648
    %v939 = vmul.f32 %v937, 1.442695
    %v940 = vpow.pop %v939
    %v941 = vmul.f32 %v938, 1.442695
    %v942 = vpow.pop %v941
    %v943 = vadd.f32 %v940, 1.0
    %v944 = vadd.f32 %v942, 1.0
    %v945 = vrcp.pop %v943
    %v946 = vmul.f32 1.0, %v945
    %v947 = vrcp.pop %v944
    %v948 = vmul.f32 1.0, %v947
    %v949 = vmul.f32 %v946, 2.0
    %v950 = vmul.f32 %v948, 2.0
    %v951 = vsub.f32 %v949, 1.0
    %v952 = vsub.f32 %v950, 1.0
    %v953 = vsel %vm43, %v951, %v946
    %v954 = vsel %vm44, %v952, %v948
    %v956 = vrot.slane %v826, 6
    %v958 = vmul.f32 %v953, %v956
    %v959 = vmul.f32 %v953, %v954
    %961 = vrot.lane.b32.xlu0 %v959, 64
    %v962 = vpop.permute.xlu0 %961
    %v964 = vadd.f32 %v958, %v962
    %v965 = vtanh.pop %v964
    %v966 = vmul.f32 %v954, %v965
    %968 = vrot.lane.b32.xlu0 %v966, 64
    %v969 = vpop.permute.xlu0 %968
    %vm971 = vcmask 261126
    %972 = vst.msk [vmem:[#allocation3] sm:$0xc0] %vm971, %v969
    %vm973 = vcmask 523526
    %974 = vst.msk [vmem:[#allocation3 + $0x2] sm:$0xc0] %vm973, %v969
    %v975 = vld [vmem:[#allocation2 + $0x10] sm:$0x3]
    %v976 = vld [vmem:[#allocation2 + $0x18] sm:$0x3]
    %v977 = vld [vmem:[#allocation2] sm:$0xc0]
    %v978 = vld [vmem:[#allocation2 + $0x8] sm:$0xc0]
    %v981 = vrot.slane %v977, 6
    %v982 = vrot.slane %v978, 6
    %v985 = vsel %vm69, %v975, %v981
    %v986 = vsel %vm70, %v976, %v982
    %v987 = vrot.slane %v966, 6
    %988 = vrot.lane.b32.xlu0 %v987, 64
    %v989 = vpop.permute.xlu0 %988
    %v990 = vsel %vm448, %v989, 0
    %992 = vmatprep.subr.mxu0 0.0
    %993 = vmatpush1.msra.mxu0 0.0
    %994 = vmatprep.subr.mxu0 0.0
    %995 = vmatpush1.msra.mxu0 0.0
    %996 = vmatprep.subr.mxu0 0.0
    %997 = vmatpush1.msra.mxu0 0.0
    %998 = vmatprep.subr.mxu0 0.0
    %999 = vmatpush1.msra.mxu0 0.0
    %1000 = vmatprep.subr.mxu0 0.0
    %1001 = vmatpush1.msra.mxu0 0.0
    %1002 = vmatprep.subr.mxu0 0.0
    %1003 = vmatpush1.msra.mxu0 0.0
    %1004 = vmatprep.subr.mxu0 0.0
    %1005 = vmatpush1.msra.mxu0 0.0
    %1006 = vmatprep.subr.mxu0 0.0
    %1007 = vmatpush1.msra.mxu0 0.0
    %1008 = vmatprep.subr.mxu0 %v435
    %1009 = vmatpush1.msra.mxu0 %v434
    %1010 = vmatprep.subr.mxu0 %v433
    %1011 = vmatpush1.msra.mxu0 %v432
    %1012 = vmatprep.subr.mxu0 %v431
    %1013 = vmatpush1.msra.mxu0 %v430
    %1014 = vmatprep.subr.mxu0 %v429
    %1015 = vmatpush1.msra.mxu0 %v428
    %1016 = vmatprep.subr.mxu0 %v427
    %1017 = vmatpush1.msra.mxu0 %v426
    %1018 = vmatprep.subr.mxu0 %v425
    %1019 = vmatpush1.msra.mxu0 %v424
    %1020 = vmatprep.subr.mxu0 %v423
    %1021 = vmatpush1.msra.mxu0 %v422
    %1022 = vmatprep.subr.mxu0 %v421
    %1023 = vmatpush1.msra.mxu0 %v420
    %1024 = vmatprep.subr.mxu0 0.0
    %1025 = vmatpush2.msra.mxu0 0.0
    %1026 = vmatprep.subr.mxu0 0.0
    %1027 = vmatpush2.msra.mxu0 0.0
    %1028 = vmatprep.subr.mxu0 0.0
    %1029 = vmatpush2.msra.mxu0 0.0
    %1030 = vmatprep.subr.mxu0 0.0
    %1031 = vmatpush2.msra.mxu0 0.0
    %1032 = vmatprep.subr.mxu0 0.0
    %1033 = vmatpush2.msra.mxu0 0.0
    %1034 = vmatprep.subr.mxu0 0.0
    %1035 = vmatpush2.msra.mxu0 0.0
    %1036 = vmatprep.subr.mxu0 0.0
    %1037 = vmatpush2.msra.mxu0 0.0
    %1038 = vmatprep.subr.mxu0 0.0
    %1039 = vmatpush2.msra.mxu0 0.0
    %1040 = vmatprep.subr.mxu0 0.0
    %1041 = vmatpush2.msra.mxu0 0.0
    %1042 = vmatprep.subr.mxu0 0.0
    %1043 = vmatpush2.msra.mxu0 0.0
    %1044 = vmatprep.subr.mxu0 0.0
    %1045 = vmatpush2.msra.mxu0 0.0
    %1046 = vmatprep.subr.mxu0 0.0
    %1047 = vmatpush2.msra.mxu0 0.0
    %1048 = vmatprep.subr.mxu0 0.0
    %1049 = vmatpush2.msra.mxu0 0.0
    %1050 = vmatprep.subr.mxu0 0.0
    %1051 = vmatpush2.msra.mxu0 0.0
    %1052 = vmatprep.subr.mxu0 0.0
    %1053 = vmatpush2.msra.mxu0 0.0
    %1054 = vmatprep.subr.mxu0 0.0
    %1055 = vmatpush2.msra.mxu0 0.0
    %1056 = vmatprep.mubr.f32.mxu0 0.0
    %1057 = vmatmul.mubr.f32.gmra.mxu0 %v990
    %v1058 = vpop.f32.mrf.mxu0
    %v1059 = vadd.f32 0.0, %v1058
    %v1060 = vpop.f32.mrf.mxu0
    %v1061 = vadd.f32 0.0, %v1060
    %1062 = vdwg.mxu0
    %v1063 = vadd.f32 %v985, %v1059
    %v1064 = vadd.f32 %v986, %v1061
    %v1065 = vmul.f32 %v1063, 2.0
    %v1066 = vmul.f32 %v1064, 2.0
    %v1067 = vsel %vm43, %v1065, %v1063
    %v1068 = vsel %vm44, %v1066, %v1064
    %v1069 = vxor.u32 %v1067, 2147483648
    %v1070 = vxor.u32 %v1068, 2147483648
    %v1071 = vmul.f32 %v1069, 1.442695
    %v1072 = vpow.pop %v1071
    %v1073 = vmul.f32 %v1070, 1.442695
    %v1074 = vpow.pop %v1073
    %v1075 = vadd.f32 %v1072, 1.0
    %v1076 = vadd.f32 %v1074, 1.0
    %v1077 = vrcp.pop %v1075
    %v1078 = vmul.f32 1.0, %v1077
    %v1079 = vrcp.pop %v1076
    %v1080 = vmul.f32 1.0, %v1079
    %v1081 = vmul.f32 %v1078, 2.0
    %v1082 = vmul.f32 %v1080, 2.0
    %v1083 = vsub.f32 %v1081, 1.0
    %v1084 = vsub.f32 %v1082, 1.0
    %v1085 = vsel %vm43, %v1083, %v1078
    %v1086 = vsel %vm44, %v1084, %v1080
    %v1088 = vrot.slane %v964, 6
    %v1090 = vmul.f32 %v1085, %v1088
    %v1091 = vmul.f32 %v1085, %v1086
    %1093 = vrot.lane.b32.xlu0 %v1091, 64
    %v1094 = vpop.permute.xlu0 %1093
    %v1096 = vadd.f32 %v1090, %v1094
    %v1097 = vtanh.pop %v1096
    %v1098 = vmul.f32 %v1086, %v1097
    %1100 = vrot.lane.b32.xlu0 %v1098, 64
    %v1101 = vpop.permute.xlu0 %1100
    %1103 = vst.msk [vmem:[#allocation3 + $0x8] sm:$0x3] %vm560, %v1101
    %1104 = vst.msk [vmem:[#allocation3 + $0x6] sm:$0x3] %vm562, %v1101
    %v1105 = vld [vmem:[#allocation2 + $0x10] sm:$0xc]
    %v1106 = vld [vmem:[#allocation2 + $0x18] sm:$0xc]
    %v1107 = vld [vmem:[#allocation2] sm:$0x30]
    %v1108 = vld [vmem:[#allocation2 + $0x8] sm:$0x30]
    %v1111 = vrot.slane %v1107, 2
    %v1112 = vrot.slane %v1108, 2
    %v1115 = vsel %vm69, %v1105, %v1111
    %v1116 = vsel %vm70, %v1106, %v1112
    %v1117 = vsel %vm448, %v1101, 0
    %1119 = vmatprep.subr.mxu0 0.0
    %1120 = vmatpush1.msra.mxu0 0.0
    %1121 = vmatprep.subr.mxu0 0.0
    %1122 = vmatpush1.msra.mxu0 0.0
    %1123 = vmatprep.subr.mxu0 0.0
    %1124 = vmatpush1.msra.mxu0 0.0
    %1125 = vmatprep.subr.mxu0 0.0
    %1126 = vmatpush1.msra.mxu0 0.0
    %1127 = vmatprep.subr.mxu0 0.0
    %1128 = vmatpush1.msra.mxu0 0.0
    %1129 = vmatprep.subr.mxu0 0.0
    %1130 = vmatpush1.msra.mxu0 0.0
    %1131 = vmatprep.subr.mxu0 0.0
    %1132 = vmatpush1.msra.mxu0 0.0
    %1133 = vmatprep.subr.mxu0 0.0
    %1134 = vmatpush1.msra.mxu0 0.0
    %1135 = vmatprep.subr.mxu0 %v435
    %1136 = vmatpush1.msra.mxu0 %v434
    %1137 = vmatprep.subr.mxu0 %v433
    %1138 = vmatpush1.msra.mxu0 %v432
    %1139 = vmatprep.subr.mxu0 %v431
    %1140 = vmatpush1.msra.mxu0 %v430
    %1141 = vmatprep.subr.mxu0 %v429
    %1142 = vmatpush1.msra.mxu0 %v428
    %1143 = vmatprep.subr.mxu0 %v427
    %1144 = vmatpush1.msra.mxu0 %v426
    %1145 = vmatprep.subr.mxu0 %v425
    %1146 = vmatpush1.msra.mxu0 %v424
    %1147 = vmatprep.subr.mxu0 %v423
    %1148 = vmatpush1.msra.mxu0 %v422
    %1149 = vmatprep.subr.mxu0 %v421
    %1150 = vmatpush1.msra.mxu0 %v420
    %1151 = vmatprep.subr.mxu0 0.0
    %1152 = vmatpush2.msra.mxu0 0.0
    %1153 = vmatprep.subr.mxu0 0.0
    %1154 = vmatpush2.msra.mxu0 0.0
    %1155 = vmatprep.subr.mxu0 0.0
    %1156 = vmatpush2.msra.mxu0 0.0
    %1157 = vmatprep.subr.mxu0 0.0
    %1158 = vmatpush2.msra.mxu0 0.0
    %1159 = vmatprep.subr.mxu0 0.0
    %1160 = vmatpush2.msra.mxu0 0.0
    %1161 = vmatprep.subr.mxu0 0.0
    %1162 = vmatpush2.msra.mxu0 0.0
    %1163 = vmatprep.subr.mxu0 0.0
    %1164 = vmatpush2.msra.mxu0 0.0
    %1165 = vmatprep.subr.mxu0 0.0
    %1166 = vmatpush2.msra.mxu0 0.0
    %1167 = vmatprep.subr.mxu0 0.0
    %1168 = vmatpush2.msra.mxu0 0.0
    %1169 = vmatprep.subr.mxu0 0.0
    %1170 = vmatpush2.msra.mxu0 0.0
    %1171 = vmatprep.subr.mxu0 0.0
    %1172 = vmatpush2.msra.mxu0 0.0
    %1173 = vmatprep.subr.mxu0 0.0
    %1174 = vmatpush2.msra.mxu0 0.0
    %1175 = vmatprep.subr.mxu0 0.0
    %1176 = vmatpush2.msra.mxu0 0.0
    %1177 = vmatprep.subr.mxu0 0.0
    %1178 = vmatpush2.msra.mxu0 0.0
    %1179 = vmatprep.subr.mxu0 0.0
    %1180 = vmatpush2.msra.mxu0 0.0
    %1181 = vmatprep.subr.mxu0 0.0
    %1182 = vmatpush2.msra.mxu0 0.0
    %1183 = vmatprep.mubr.f32.mxu0 0.0
    %1184 = vmatmul.mubr.f32.gmra.mxu0 %v1117
    %v1185 = vpop.f32.mrf.mxu0
    %v1186 = vadd.f32 0.0, %v1185
    %v1187 = vpop.f32.mrf.mxu0
    %v1188 = vadd.f32 0.0, %v1187
    %1189 = vdwg.mxu0
    %v1192 = vrot.slane %v1186, 6
    %v1193 = vrot.slane %v1188, 6
    %v1196 = vadd.f32 %v1115, %v1192
    %v1197 = vadd.f32 %v1116, %v1193
    %v1198 = vmul.f32 %v1196, 2.0
    %v1199 = vmul.f32 %v1197, 2.0
    %v1200 = vsel %vm43, %v1198, %v1196
    %v1201 = vsel %vm44, %v1199, %v1197
    %v1202 = vxor.u32 %v1200, 2147483648
    %v1203 = vxor.u32 %v1201, 2147483648
    %v1204 = vmul.f32 %v1202, 1.442695
    %v1205 = vpow.pop %v1204
    %v1206 = vmul.f32 %v1203, 1.442695
    %v1207 = vpow.pop %v1206
    %v1208 = vadd.f32 %v1205, 1.0
    %v1209 = vadd.f32 %v1207, 1.0
    %v1210 = vrcp.pop %v1208
    %v1211 = vmul.f32 1.0, %v1210
    %v1212 = vrcp.pop %v1209
    %v1213 = vmul.f32 1.0, %v1212
    %v1214 = vmul.f32 %v1211, 2.0
    %v1215 = vmul.f32 %v1213, 2.0
    %v1216 = vsub.f32 %v1214, 1.0
    %v1217 = vsub.f32 %v1215, 1.0
    %v1218 = vsel %vm43, %v1216, %v1211
    %v1219 = vsel %vm44, %v1217, %v1213
    %v1221 = vrot.slane %v1096, 6
    %v1223 = vmul.f32 %v1218, %v1221
    %v1224 = vmul.f32 %v1218, %v1219
    %1226 = vrot.lane.b32.xlu0 %v1224, 64
    %v1227 = vpop.permute.xlu0 %1226
    %v1229 = vadd.f32 %v1223, %v1227
    %v1230 = vtanh.pop %v1229
    %v1231 = vmul.f32 %v1219, %v1230
    %1233 = vrot.lane.b32.xlu0 %v1231, 64
    %v1234 = vpop.permute.xlu0 %1233
    %1236 = vst.msk [vmem:[#allocation3 + $0x8] sm:$0xc] %vm695, %v1234
    %1237 = vst.msk [vmem:[#allocation3 + $0x2] sm:$0xc] %vm697, %v1234
    %v1238 = vld [vmem:[#allocation2 + $0x10] sm:$0x30]
    %v1239 = vld [vmem:[#allocation2 + $0x18] sm:$0x30]
    %v1240 = vld [vmem:[#allocation2] sm:$0xc]
    %v1241 = vld [vmem:[#allocation2 + $0x8] sm:$0xc]
    %v1244 = vrot.slane %v1240, 6
    %v1245 = vrot.slane %v1241, 6
    %v1248 = vsel %vm69, %v1238, %v1244
    %v1249 = vsel %vm70, %v1239, %v1245
    %v1250 = vrot.slane %v1231, 2
    %1251 = vrot.lane.b32.xlu0 %v1250, 64
    %v1252 = vpop.permute.xlu0 %1251
    %v1253 = vsel %vm448, %v1252, 0
    %1255 = vmatprep.subr.mxu0 0.0
    %1256 = vmatpush1.msra.mxu0 0.0
    %1257 = vmatprep.subr.mxu0 0.0
    %1258 = vmatpush1.msra.mxu0 0.0
    %1259 = vmatprep.subr.mxu0 0.0
    %1260 = vmatpush1.msra.mxu0 0.0
    %1261 = vmatprep.subr.mxu0 0.0
    %1262 = vmatpush1.msra.mxu0 0.0
    %1263 = vmatprep.subr.mxu0 0.0
    %1264 = vmatpush1.msra.mxu0 0.0
    %1265 = vmatprep.subr.mxu0 0.0
    %1266 = vmatpush1.msra.mxu0 0.0
    %1267 = vmatprep.subr.mxu0 0.0
    %1268 = vmatpush1.msra.mxu0 0.0
    %1269 = vmatprep.subr.mxu0 0.0
    %1270 = vmatpush1.msra.mxu0 0.0
    %1271 = vmatprep.subr.mxu0 %v435
    %1272 = vmatpush1.msra.mxu0 %v434
    %1273 = vmatprep.subr.mxu0 %v433
    %1274 = vmatpush1.msra.mxu0 %v432
    %1275 = vmatprep.subr.mxu0 %v431
    %1276 = vmatpush1.msra.mxu0 %v430
    %1277 = vmatprep.subr.mxu0 %v429
    %1278 = vmatpush1.msra.mxu0 %v428
    %1279 = vmatprep.subr.mxu0 %v427
    %1280 = vmatpush1.msra.mxu0 %v426
    %1281 = vmatprep.subr.mxu0 %v425
    %1282 = vmatpush1.msra.mxu0 %v424
    %1283 = vmatprep.subr.mxu0 %v423
    %1284 = vmatpush1.msra.mxu0 %v422
    %1285 = vmatprep.subr.mxu0 %v421
    %1286 = vmatpush1.msra.mxu0 %v420
    %1287 = vmatprep.subr.mxu0 0.0
    %1288 = vmatpush2.msra.mxu0 0.0
    %1289 = vmatprep.subr.mxu0 0.0
    %1290 = vmatpush2.msra.mxu0 0.0
    %1291 = vmatprep.subr.mxu0 0.0
    %1292 = vmatpush2.msra.mxu0 0.0
    %1293 = vmatprep.subr.mxu0 0.0
    %1294 = vmatpush2.msra.mxu0 0.0
    %1295 = vmatprep.subr.mxu0 0.0
    %1296 = vmatpush2.msra.mxu0 0.0
    %1297 = vmatprep.subr.mxu0 0.0
    %1298 = vmatpush2.msra.mxu0 0.0
    %1299 = vmatprep.subr.mxu0 0.0
    %1300 = vmatpush2.msra.mxu0 0.0
    %1301 = vmatprep.subr.mxu0 0.0
    %1302 = vmatpush2.msra.mxu0 0.0
    %1303 = vmatprep.subr.mxu0 0.0
    %1304 = vmatpush2.msra.mxu0 0.0
    %1305 = vmatprep.subr.mxu0 0.0
    %1306 = vmatpush2.msra.mxu0 0.0
    %1307 = vmatprep.subr.mxu0 0.0
    %1308 = vmatpush2.msra.mxu0 0.0
    %1309 = vmatprep.subr.mxu0 0.0
    %1310 = vmatpush2.msra.mxu0 0.0
    %1311 = vmatprep.subr.mxu0 0.0
    %1312 = vmatpush2.msra.mxu0 0.0
    %1313 = vmatprep.subr.mxu0 0.0
    %1314 = vmatpush2.msra.mxu0 0.0
    %1315 = vmatprep.subr.mxu0 0.0
    %1316 = vmatpush2.msra.mxu0 0.0
    %1317 = vmatprep.subr.mxu0 0.0
    %1318 = vmatpush2.msra.mxu0 0.0
    %1319 = vmatprep.mubr.f32.mxu0 0.0
    %1320 = vmatmul.mubr.f32.gmra.mxu0 %v1253
    %v1321 = vpop.f32.mrf.mxu0
    %v1322 = vadd.f32 0.0, %v1321
    %v1323 = vpop.f32.mrf.mxu0
    %v1324 = vadd.f32 0.0, %v1323
    %1325 = vdwg.mxu0
    %v1328 = vrot.slane %v1322, 4
    %v1329 = vrot.slane %v1324, 4
    %v1332 = vadd.f32 %v1248, %v1328
    %v1333 = vadd.f32 %v1249, %v1329
    %v1334 = vmul.f32 %v1332, 2.0
    %v1335 = vmul.f32 %v1333, 2.0
    %v1336 = vsel %vm43, %v1334, %v1332
    %v1337 = vsel %vm44, %v1335, %v1333
    %v1338 = vxor.u32 %v1336, 2147483648
    %v1339 = vxor.u32 %v1337, 2147483648
    %v1340 = vmul.f32 %v1338, 1.442695
    %v1341 = vpow.pop %v1340
    %v1342 = vmul.f32 %v1339, 1.442695
    %v1343 = vpow.pop %v1342
    %v1344 = vadd.f32 %v1341, 1.0
    %v1345 = vadd.f32 %v1343, 1.0
    %v1346 = vrcp.pop %v1344
    %v1347 = vmul.f32 1.0, %v1346
    %v1348 = vrcp.pop %v1345
    %v1349 = vmul.f32 1.0, %v1348
    %v1350 = vmul.f32 %v1347, 2.0
    %v1351 = vmul.f32 %v1349, 2.0
    %v1352 = vsub.f32 %v1350, 1.0
    %v1353 = vsub.f32 %v1351, 1.0
    %v1354 = vsel %vm43, %v1352, %v1347
    %v1355 = vsel %vm44, %v1353, %v1349
    %v1357 = vrot.slane %v1229, 6
    %v1359 = vmul.f32 %v1354, %v1357
    %v1360 = vmul.f32 %v1354, %v1355
    %1362 = vrot.lane.b32.xlu0 %v1360, 64
    %v1363 = vpop.permute.xlu0 %1362
    %v1365 = vadd.f32 %v1359, %v1363
    %v1366 = vtanh.pop %v1365
    %v1367 = vmul.f32 %v1355, %v1366
    %1369 = vrot.lane.b32.xlu0 %v1367, 64
    %v1370 = vpop.permute.xlu0 %1369
    %1372 = vst.msk [vmem:[#allocation3 + $0x8] sm:$0x30] %vm833, %v1370
    %1373 = vst.msk [vmem:[#allocation3 - $0x2] sm:$0x30] %vm835, %v1370
    %v1374 = vld [vmem:[#allocation2 + $0x10] sm:$0xc0]
    %v1375 = vld [vmem:[#allocation2 + $0x18] sm:$0xc0]
    %v1376 = vld [vmem:[#allocation2] sm:$0x3]
    %v1377 = vld [vmem:[#allocation2 + $0x8] sm:$0x3]
    %v1380 = vrot.slane %v1376, 2
    %v1381 = vrot.slane %v1377, 2
    %v1384 = vsel %vm69, %v1374, %v1380
    %v1385 = vsel %vm70, %v1375, %v1381
    %v1386 = vrot.slane %v1367, 4
    %1387 = vrot.lane.b32.xlu0 %v1386, 64
    %v1388 = vpop.permute.xlu0 %1387
    %v1389 = vsel %vm448, %v1388, 0
    %1391 = vmatprep.subr.mxu0 0.0
    %1392 = vmatpush1.msra.mxu0 0.0
    %1393 = vmatprep.subr.mxu0 0.0
    %1394 = vmatpush1.msra.mxu0 0.0
    %1395 = vmatprep.subr.mxu0 0.0
    %1396 = vmatpush1.msra.mxu0 0.0
    %1397 = vmatprep.subr.mxu0 0.0
    %1398 = vmatpush1.msra.mxu0 0.0
    %1399 = vmatprep.subr.mxu0 0.0
    %1400 = vmatpush1.msra.mxu0 0.0
    %1401 = vmatprep.subr.mxu0 0.0
    %1402 = vmatpush1.msra.mxu0 0.0
    %1403 = vmatprep.subr.mxu0 0.0
    %1404 = vmatpush1.msra.mxu0 0.0
    %1405 = vmatprep.subr.mxu0 0.0
    %1406 = vmatpush1.msra.mxu0 0.0
    %1407 = vmatprep.subr.mxu0 %v435
    %1408 = vmatpush1.msra.mxu0 %v434
    %1409 = vmatprep.subr.mxu0 %v433
    %1410 = vmatpush1.msra.mxu0 %v432
    %1411 = vmatprep.subr.mxu0 %v431
    %1412 = vmatpush1.msra.mxu0 %v430
    %1413 = vmatprep.subr.mxu0 %v429
    %1414 = vmatpush1.msra.mxu0 %v428
    %1415 = vmatprep.subr.mxu0 %v427
    %1416 = vmatpush1.msra.mxu0 %v426
    %1417 = vmatprep.subr.mxu0 %v425
    %1418 = vmatpush1.msra.mxu0 %v424
    %1419 = vmatprep.subr.mxu0 %v423
    %1420 = vmatpush1.msra.mxu0 %v422
    %1421 = vmatprep.subr.mxu0 %v421
    %1422 = vmatpush1.msra.mxu0 %v420
    %1423 = vmatprep.subr.mxu0 0.0
    %1424 = vmatpush2.msra.mxu0 0.0
    %1425 = vmatprep.subr.mxu0 0.0
    %1426 = vmatpush2.msra.mxu0 0.0
    %1427 = vmatprep.subr.mxu0 0.0
    %1428 = vmatpush2.msra.mxu0 0.0
    %1429 = vmatprep.subr.mxu0 0.0
    %1430 = vmatpush2.msra.mxu0 0.0
    %1431 = vmatprep.subr.mxu0 0.0
    %1432 = vmatpush2.msra.mxu0 0.0
    %1433 = vmatprep.subr.mxu0 0.0
    %1434 = vmatpush2.msra.mxu0 0.0
    %1435 = vmatprep.subr.mxu0 0.0
    %1436 = vmatpush2.msra.mxu0 0.0
    %1437 = vmatprep.subr.mxu0 0.0
    %1438 = vmatpush2.msra.mxu0 0.0
    %1439 = vmatprep.subr.mxu0 0.0
    %1440 = vmatpush2.msra.mxu0 0.0
    %1441 = vmatprep.subr.mxu0 0.0
    %1442 = vmatpush2.msra.mxu0 0.0
    %1443 = vmatprep.subr.mxu0 0.0
    %1444 = vmatpush2.msra.mxu0 0.0
    %1445 = vmatprep.subr.mxu0 0.0
    %1446 = vmatpush2.msra.mxu0 0.0
    %1447 = vmatprep.subr.mxu0 0.0
    %1448 = vmatpush2.msra.mxu0 0.0
    %1449 = vmatprep.subr.mxu0 0.0
    %1450 = vmatpush2.msra.mxu0 0.0
    %1451 = vmatprep.subr.mxu0 0.0
    %1452 = vmatpush2.msra.mxu0 0.0
    %1453 = vmatprep.subr.mxu0 0.0
    %1454 = vmatpush2.msra.mxu0 0.0
    %1455 = vmatprep.mubr.f32.mxu0 0.0
    %1456 = vmatmul.mubr.f32.gmra.mxu0 %v1389
    %v1457 = vpop.f32.mrf.mxu0
    %v1458 = vadd.f32 0.0, %v1457
    %v1459 = vpop.f32.mrf.mxu0
    %v1460 = vadd.f32 0.0, %v1459
    %1461 = vdwg.mxu0
    %v1464 = vrot.slane %v1458, 2
    %v1465 = vrot.slane %v1460, 2
    %v1468 = vadd.f32 %v1384, %v1464
    %v1469 = vadd.f32 %v1385, %v1465
    %v1470 = vmul.f32 %v1468, 2.0
    %v1471 = vmul.f32 %v1469, 2.0
    %v1472 = vsel %vm43, %v1470, %v1468
    %v1473 = vsel %vm44, %v1471, %v1469
    %v1474 = vxor.u32 %v1472, 2147483648
    %v1475 = vxor.u32 %v1473, 2147483648
    %v1476 = vmul.f32 %v1474, 1.442695
    %v1477 = vpow.pop %v1476
    %v1478 = vmul.f32 %v1475, 1.442695
    %v1479 = vpow.pop %v1478
    %v1480 = vadd.f32 %v1477, 1.0
    %v1481 = vadd.f32 %v1479, 1.0
    %v1482 = vrcp.pop %v1480
    %v1483 = vmul.f32 1.0, %v1482
    %v1484 = vrcp.pop %v1481
    %v1485 = vmul.f32 1.0, %v1484
    %v1486 = vmul.f32 %v1483, 2.0
    %v1487 = vmul.f32 %v1485, 2.0
    %v1488 = vsub.f32 %v1486, 1.0
    %v1489 = vsub.f32 %v1487, 1.0
    %v1490 = vsel %vm43, %v1488, %v1483
    %v1491 = vsel %vm44, %v1489, %v1485
    %v1493 = vrot.slane %v1365, 6
    %v1495 = vmul.f32 %v1490, %v1493
    %v1496 = vmul.f32 %v1490, %v1491
    %1498 = vrot.lane.b32.xlu0 %v1496, 64
    %v1499 = vpop.permute.xlu0 %1498
    %v1501 = vadd.f32 %v1495, %v1499
    %v1502 = vtanh.pop %v1501
    %v1503 = vmul.f32 %v1491, %v1502
    %1505 = vrot.lane.b32.xlu0 %v1503, 64
    %v1506 = vpop.permute.xlu0 %1505
    %1508 = vst.msk [vmem:[#allocation3 + $0x8] sm:$0xc0] %vm971, %v1506
    %1509 = vst.msk [vmem:[#allocation3 - $0x6] sm:$0xc0] %vm973, %v1506
    %v1510 = vld [vmem:[#allocation3] sm:$0xff]
    %v1511 = vld [vmem:[#allocation3 + $0x8] sm:$0xff]
    %v1512 = vld [vmem:[%s3 + $0x80] sm:$0xff]
    %v1513 = vld [vmem:[%s3 + $0x88] sm:$0xff]
    %v1514 = vld [vmem:[%s3 + $0x90] sm:$0xff]
    %v1515 = vld [vmem:[%s3 + $0x98] sm:$0xff]
    %v1516 = vld [vmem:[%s3 + $0xa0] sm:$0xff]
    %v1517 = vld [vmem:[%s3 + $0xa8] sm:$0xff]
    %v1518 = vld [vmem:[%s3 + $0xb0] sm:$0xff]
    %v1519 = vld [vmem:[%s3 + $0xb8] sm:$0xff]
    %v1520 = vld [vmem:[%s3 + $0xc0] sm:$0xff]
    %v1521 = vld [vmem:[%s3 + $0xc8] sm:$0xff]
    %v1522 = vld [vmem:[%s3 + $0xd0] sm:$0xff]
    %v1523 = vld [vmem:[%s3 + $0xd8] sm:$0xff]
    %v1524 = vld [vmem:[%s3 + $0xe0] sm:$0xff]
    %v1525 = vld [vmem:[%s3 + $0xe8] sm:$0xff]
    %v1526 = vld [vmem:[%s3 + $0xf0] sm:$0xff]
    %v1527 = vld [vmem:[%s3 + $0xf8] sm:$0xff]
    %s1528 = scalar_lea.vmem %s3, 385
    %v1529 = vld [vmem:[%s1528] ss:$8 sm:$0x3]
    %v1531 = vlaneseq
    %v1532 = vshrl.u32 %v1531, 7
    %v1533 = vsub.s32 0, %v1532
    %v1534 = vrot.slane %v1529, %v1533
    %v1535 = vlaneseq
    %v1536 = vshrl.u32 %v1535, 7
    %v1537 = vsub.s32 1, %v1536
    %v1538 = vrot.slane %v1529, %v1537
    %v1542 = vsel %vm448, %v1510, 0
    %v1545 = vsel %vm448, %v1511, 0
    %1547 = vmatprep.subr.mxu0 0.0
    %1548 = vmatpush1.msra.mxu0 0.0
    %1549 = vmatprep.subr.mxu0 0.0
    %1550 = vmatpush1.msra.mxu0 0.0
    %1551 = vmatprep.subr.mxu0 0.0
    %1552 = vmatpush1.msra.mxu0 0.0
    %1553 = vmatprep.subr.mxu0 0.0
    %1554 = vmatpush1.msra.mxu0 0.0
    %1555 = vmatprep.subr.mxu0 0.0
    %1556 = vmatpush1.msra.mxu0 0.0
    %1557 = vmatprep.subr.mxu0 0.0
    %1558 = vmatpush1.msra.mxu0 0.0
    %1559 = vmatprep.subr.mxu0 0.0
    %1560 = vmatpush1.msra.mxu0 0.0
    %1561 = vmatprep.subr.mxu0 0.0
    %1562 = vmatpush1.msra.mxu0 0.0
    %1563 = vmatprep.subr.mxu0 %v1527
    %1564 = vmatpush1.msra.mxu0 %v1526
    %1565 = vmatprep.subr.mxu0 %v1525
    %1566 = vmatpush1.msra.mxu0 %v1524
    %1567 = vmatprep.subr.mxu0 %v1523
    %1568 = vmatpush1.msra.mxu0 %v1522
    %1569 = vmatprep.subr.mxu0 %v1521
    %1570 = vmatpush1.msra.mxu0 %v1520
    %1571 = vmatprep.subr.mxu0 %v1519
    %1572 = vmatpush1.msra.mxu0 %v1518
    %1573 = vmatprep.subr.mxu0 %v1517
    %1574 = vmatpush1.msra.mxu0 %v1516
    %1575 = vmatprep.subr.mxu0 %v1515
    %1576 = vmatpush1.msra.mxu0 %v1514
    %1577 = vmatprep.subr.mxu0 %v1513
    %1578 = vmatpush1.msra.mxu0 %v1512
    %1579 = vmatprep.subr.mxu0 0.0
    %1580 = vmatpush2.msra.mxu0 0.0
    %1581 = vmatprep.subr.mxu0 0.0
    %1582 = vmatpush2.msra.mxu0 0.0
    %1583 = vmatprep.subr.mxu0 0.0
    %1584 = vmatpush2.msra.mxu0 0.0
    %1585 = vmatprep.subr.mxu0 0.0
    %1586 = vmatpush2.msra.mxu0 0.0
    %1587 = vmatprep.subr.mxu0 0.0
    %1588 = vmatpush2.msra.mxu0 0.0
    %1589 = vmatprep.subr.mxu0 0.0
    %1590 = vmatpush2.msra.mxu0 0.0
    %1591 = vmatprep.subr.mxu0 0.0
    %1592 = vmatpush2.msra.mxu0 0.0
    %1593 = vmatprep.subr.mxu0 0.0
    %1594 = vmatpush2.msra.mxu0 0.0
    %1595 = vmatprep.subr.mxu0 0.0
    %1596 = vmatpush2.msra.mxu0 0.0
    %1597 = vmatprep.subr.mxu0 0.0
    %1598 = vmatpush2.msra.mxu0 0.0
    %1599 = vmatprep.subr.mxu0 0.0
    %1600 = vmatpush2.msra.mxu0 0.0
    %1601 = vmatprep.subr.mxu0 0.0
    %1602 = vmatpush2.msra.mxu0 0.0
    %1603 = vmatprep.subr.mxu0 0.0
    %1604 = vmatpush2.msra.mxu0 0.0
    %1605 = vmatprep.subr.mxu0 0.0
    %1606 = vmatpush2.msra.mxu0 0.0
    %1607 = vmatprep.subr.mxu0 0.0
    %1608 = vmatpush2.msra.mxu0 0.0
    %1609 = vmatprep.subr.mxu0 0.0
    %1610 = vmatpush2.msra.mxu0 0.0
    %1611 = vmatprep.mubr.f32.mxu0 0.0
    %1612 = vmatmul.mubr.f32.gmra.mxu0 %v1542
    %v1613 = vpop.f32.mrf.mxu0
    %v1614 = vadd.f32 %v1534, %v1613
    %v1615 = vpop.f32.mrf.mxu0
    %v1616 = vadd.f32 %v1538, %v1615
    %1617 = vmatprep.mubr.f32.mxu0 0.0
    %1618 = vmatmul.mubr.f32.gmra.mxu0 %v1545
    %v1619 = vpop.f32.mrf.mxu0
    %v1620 = vadd.f32 %v1534, %v1619
    %v1621 = vpop.f32.mrf.mxu0
    %v1622 = vadd.f32 %v1538, %v1621
    %1623 = vdwg.mxu0
    %1624 = vst [vmem:[#allocation2] sm:$0xff] %v1614
    %1625 = vst [vmem:[#allocation2 + $0x8] sm:$0xff] %v1616
    %1626 = vst [vmem:[#allocation2 + $0x10] sm:$0xff] %v1620
    %1627 = vst [vmem:[#allocation2 + $0x18] sm:$0xff] %v1622
    %v1628 = vld [vmem:[%s3 + $0x100] sm:$0xff]
    %v1629 = vld [vmem:[%s3 + $0x108] sm:$0xff]
    %v1630 = vld [vmem:[%s3 + $0x110] sm:$0xff]
    %v1631 = vld [vmem:[%s3 + $0x118] sm:$0xff]
    %v1632 = vld [vmem:[%s3 + $0x120] sm:$0xff]
    %v1633 = vld [vmem:[%s3 + $0x128] sm:$0xff]
    %v1634 = vld [vmem:[%s3 + $0x130] sm:$0xff]
    %v1635 = vld [vmem:[%s3 + $0x138] sm:$0xff]
    %v1636 = vld [vmem:[%s3 + $0x140] sm:$0xff]
    %v1637 = vld [vmem:[%s3 + $0x148] sm:$0xff]
    %v1638 = vld [vmem:[%s3 + $0x150] sm:$0xff]
    %v1639 = vld [vmem:[%s3 + $0x158] sm:$0xff]
    %v1640 = vld [vmem:[%s3 + $0x160] sm:$0xff]
    %v1641 = vld [vmem:[%s3 + $0x168] sm:$0xff]
    %v1642 = vld [vmem:[%s3 + $0x170] sm:$0xff]
    %v1643 = vld [vmem:[%s3 + $0x178] sm:$0xff]
    %v1644 = vld [vmem:[#allocation2] sm:$0x3]
    %v1645 = vld [vmem:[#allocation2 + $0x8] sm:$0x3]
    %v1646 = vld [vmem:[#allocation2 + $0x10] sm:$0xc0]
    %v1647 = vld [vmem:[#allocation2 + $0x18] sm:$0xc0]
    %v1650 = vrot.slane %v1646, 6
    %v1651 = vrot.slane %v1647, 6
    %v1654 = vsel %vm69, %v1644, %v1650
    %v1655 = vsel %vm70, %v1645, %v1651
    %1656 = vmatprep.subr.mxu0 0.0
    %1657 = vmatpush1.msra.mxu0 0.0
    %1658 = vmatprep.subr.mxu0 0.0
    %1659 = vmatpush1.msra.mxu0 0.0
    %1660 = vmatprep.subr.mxu0 0.0
    %1661 = vmatpush1.msra.mxu0 0.0
    %1662 = vmatprep.subr.mxu0 0.0
    %1663 = vmatpush1.msra.mxu0 0.0
    %1664 = vmatprep.subr.mxu0 0.0
    %1665 = vmatpush1.msra.mxu0 0.0
    %1666 = vmatprep.subr.mxu0 0.0
    %1667 = vmatpush1.msra.mxu0 0.0
    %1668 = vmatprep.subr.mxu0 0.0
    %1669 = vmatpush1.msra.mxu0 0.0
    %1670 = vmatprep.subr.mxu0 0.0
    %1671 = vmatpush1.msra.mxu0 0.0
    %1672 = vmatprep.subr.mxu0 %v1643
    %1673 = vmatpush1.msra.mxu0 %v1642
    %1674 = vmatprep.subr.mxu0 %v1641
    %1675 = vmatpush1.msra.mxu0 %v1640
    %1676 = vmatprep.subr.mxu0 %v1639
    %1677 = vmatpush1.msra.mxu0 %v1638
    %1678 = vmatprep.subr.mxu0 %v1637
    %1679 = vmatpush1.msra.mxu0 %v1636
    %1680 = vmatprep.subr.mxu0 %v1635
    %1681 = vmatpush1.msra.mxu0 %v1634
    %1682 = vmatprep.subr.mxu0 %v1633
    %1683 = vmatpush1.msra.mxu0 %v1632
    %1684 = vmatprep.subr.mxu0 %v1631
    %1685 = vmatpush1.msra.mxu0 %v1630
    %1686 = vmatprep.subr.mxu0 %v1629
    %1687 = vmatpush1.msra.mxu0 %v1628
    %1688 = vmatprep.subr.mxu0 0.0
    %1689 = vmatpush2.msra.mxu0 0.0
    %1690 = vmatprep.subr.mxu0 0.0
    %1691 = vmatpush2.msra.mxu0 0.0
    %1692 = vmatprep.subr.mxu0 0.0
    %1693 = vmatpush2.msra.mxu0 0.0
    %1694 = vmatprep.subr.mxu0 0.0
    %1695 = vmatpush2.msra.mxu0 0.0
    %1696 = vmatprep.subr.mxu0 0.0
    %1697 = vmatpush2.msra.mxu0 0.0
    %1698 = vmatprep.subr.mxu0 0.0
    %1699 = vmatpush2.msra.mxu0 0.0
    %1700 = vmatprep.subr.mxu0 0.0
    %1701 = vmatpush2.msra.mxu0 0.0
    %1702 = vmatprep.subr.mxu0 0.0
    %1703 = vmatpush2.msra.mxu0 0.0
    %1704 = vmatprep.subr.mxu0 0.0
    %1705 = vmatpush2.msra.mxu0 0.0
    %1706 = vmatprep.subr.mxu0 0.0
    %1707 = vmatpush2.msra.mxu0 0.0
    %1708 = vmatprep.subr.mxu0 0.0
    %1709 = vmatpush2.msra.mxu0 0.0
    %1710 = vmatprep.subr.mxu0 0.0
    %1711 = vmatpush2.msra.mxu0 0.0
    %1712 = vmatprep.subr.mxu0 0.0
    %1713 = vmatpush2.msra.mxu0 0.0
    %1714 = vmatprep.subr.mxu0 0.0
    %1715 = vmatpush2.msra.mxu0 0.0
    %1716 = vmatprep.subr.mxu0 0.0
    %1717 = vmatpush2.msra.mxu0 0.0
    %1718 = vmatprep.subr.mxu0 0.0
    %1719 = vmatpush2.msra.mxu0 0.0
    %1720 = vmatprep.mubr.f32.mxu0 0.0
    %1721 = vmatmul.mubr.f32.gmra.mxu0 %v450
    %v1722 = vpop.f32.mrf.mxu0
    %v1723 = vadd.f32 0.0, %v1722
    %v1724 = vpop.f32.mrf.mxu0
    %v1725 = vadd.f32 0.0, %v1724
    %1726 = vdwg.mxu0
    %v1727 = vadd.f32 %v1654, %v1723
    %v1728 = vadd.f32 %v1655, %v1725
    %v1729 = vmul.f32 %v1727, 2.0
    %v1730 = vmul.f32 %v1728, 2.0
    %v1731 = vsel %vm43, %v1729, %v1727
    %v1732 = vsel %vm44, %v1730, %v1728
    %v1733 = vxor.u32 %v1731, 2147483648
    %v1734 = vxor.u32 %v1732, 2147483648
    %v1735 = vmul.f32 %v1733, 1.442695
    %v1736 = vpow.pop %v1735
    %v1737 = vmul.f32 %v1734, 1.442695
    %v1738 = vpow.pop %v1737
    %v1739 = vadd.f32 %v1736, 1.0
    %v1740 = vadd.f32 %v1738, 1.0
    %v1741 = vrcp.pop %v1739
    %v1742 = vmul.f32 1.0, %v1741
    %v1743 = vrcp.pop %v1740
    %v1744 = vmul.f32 1.0, %v1743
    %v1745 = vmul.f32 %v1742, 2.0
    %v1746 = vmul.f32 %v1744, 2.0
    %v1747 = vsub.f32 %v1745, 1.0
    %v1748 = vsub.f32 %v1746, 1.0
    %v1749 = vsel %vm43, %v1747, %v1742
    %v1750 = vsel %vm44, %v1748, %v1744
    %v1751 = vmul.f32 %v1749, 0.0
    %v1752 = vmul.f32 %v1749, %v1750
    %1754 = vrot.lane.b32.xlu0 %v1752, 64
    %v1755 = vpop.permute.xlu0 %1754
    %v1757 = vadd.f32 %v1751, %v1755
    %v1758 = vtanh.pop %v1757
    %v1759 = vmul.f32 %v1750, %v1758
    %1761 = vrot.lane.b32.xlu0 %v1759, 64
    %v1762 = vpop.permute.xlu0 %1761
    %1764 = vst.msk [vmem:[#allocation4] sm:$0x3] %vm560, %v1762
    %1765 = vst.msk [vmem:[#allocation4 + $0xe] sm:$0x3] %vm562, %v1762
    %v1766 = vld [vmem:[#allocation2] sm:$0xc]
    %v1767 = vld [vmem:[#allocation2 + $0x8] sm:$0xc]
    %v1768 = vld [vmem:[#allocation2 + $0x10] sm:$0x30]
    %v1769 = vld [vmem:[#allocation2 + $0x18] sm:$0x30]
    %v1772 = vrot.slane %v1768, 2
    %v1773 = vrot.slane %v1769, 2
    %v1776 = vsel %vm69, %v1766, %v1772
    %v1777 = vsel %vm70, %v1767, %v1773
    %v1778 = vsel %vm448, %v1762, 0
    %1780 = vmatprep.subr.mxu0 0.0
    %1781 = vmatpush1.msra.mxu0 0.0
    %1782 = vmatprep.subr.mxu0 0.0
    %1783 = vmatpush1.msra.mxu0 0.0
    %1784 = vmatprep.subr.mxu0 0.0
    %1785 = vmatpush1.msra.mxu0 0.0
    %1786 = vmatprep.subr.mxu0 0.0
    %1787 = vmatpush1.msra.mxu0 0.0
    %1788 = vmatprep.subr.mxu0 0.0
    %1789 = vmatpush1.msra.mxu0 0.0
    %1790 = vmatprep.subr.mxu0 0.0
    %1791 = vmatpush1.msra.mxu0 0.0
    %1792 = vmatprep.subr.mxu0 0.0
    %1793 = vmatpush1.msra.mxu0 0.0
    %1794 = vmatprep.subr.mxu0 0.0
    %1795 = vmatpush1.msra.mxu0 0.0
    %1796 = vmatprep.subr.mxu0 %v1643
    %1797 = vmatpush1.msra.mxu0 %v1642
    %1798 = vmatprep.subr.mxu0 %v1641
    %1799 = vmatpush1.msra.mxu0 %v1640
    %1800 = vmatprep.subr.mxu0 %v1639
    %1801 = vmatpush1.msra.mxu0 %v1638
    %1802 = vmatprep.subr.mxu0 %v1637
    %1803 = vmatpush1.msra.mxu0 %v1636
    %1804 = vmatprep.subr.mxu0 %v1635
    %1805 = vmatpush1.msra.mxu0 %v1634
    %1806 = vmatprep.subr.mxu0 %v1633
    %1807 = vmatpush1.msra.mxu0 %v1632
    %1808 = vmatprep.subr.mxu0 %v1631
    %1809 = vmatpush1.msra.mxu0 %v1630
    %1810 = vmatprep.subr.mxu0 %v1629
    %1811 = vmatpush1.msra.mxu0 %v1628
    %1812 = vmatprep.subr.mxu0 0.0
    %1813 = vmatpush2.msra.mxu0 0.0
    %1814 = vmatprep.subr.mxu0 0.0
    %1815 = vmatpush2.msra.mxu0 0.0
    %1816 = vmatprep.subr.mxu0 0.0
    %1817 = vmatpush2.msra.mxu0 0.0
    %1818 = vmatprep.subr.mxu0 0.0
    %1819 = vmatpush2.msra.mxu0 0.0
    %1820 = vmatprep.subr.mxu0 0.0
    %1821 = vmatpush2.msra.mxu0 0.0
    %1822 = vmatprep.subr.mxu0 0.0
    %1823 = vmatpush2.msra.mxu0 0.0
    %1824 = vmatprep.subr.mxu0 0.0
    %1825 = vmatpush2.msra.mxu0 0.0
    %1826 = vmatprep.subr.mxu0 0.0
    %1827 = vmatpush2.msra.mxu0 0.0
    %1828 = vmatprep.subr.mxu0 0.0
    %1829 = vmatpush2.msra.mxu0 0.0
    %1830 = vmatprep.subr.mxu0 0.0
    %1831 = vmatpush2.msra.mxu0 0.0
    %1832 = vmatprep.subr.mxu0 0.0
    %1833 = vmatpush2.msra.mxu0 0.0
    %1834 = vmatprep.subr.mxu0 0.0
    %1835 = vmatpush2.msra.mxu0 0.0
    %1836 = vmatprep.subr.mxu0 0.0
    %1837 = vmatpush2.msra.mxu0 0.0
    %1838 = vmatprep.subr.mxu0 0.0
    %1839 = vmatpush2.msra.mxu0 0.0
    %1840 = vmatprep.subr.mxu0 0.0
    %1841 = vmatpush2.msra.mxu0 0.0
    %1842 = vmatprep.subr.mxu0 0.0
    %1843 = vmatpush2.msra.mxu0 0.0
    %1844 = vmatprep.mubr.f32.mxu0 0.0
    %1845 = vmatmul.mubr.f32.gmra.mxu0 %v1778
    %v1846 = vpop.f32.mrf.mxu0
    %v1847 = vadd.f32 0.0, %v1846
    %v1848 = vpop.f32.mrf.mxu0
    %v1849 = vadd.f32 0.0, %v1848
    %1850 = vdwg.mxu0
    %v1853 = vrot.slane %v1847, 6
    %v1854 = vrot.slane %v1849, 6
    %v1857 = vadd.f32 %v1776, %v1853
    %v1858 = vadd.f32 %v1777, %v1854
    %v1859 = vmul.f32 %v1857, 2.0
    %v1860 = vmul.f32 %v1858, 2.0
    %v1861 = vsel %vm43, %v1859, %v1857
    %v1862 = vsel %vm44, %v1860, %v1858
    %v1863 = vxor.u32 %v1861, 2147483648
    %v1864 = vxor.u32 %v1862, 2147483648
    %v1865 = vmul.f32 %v1863, 1.442695
    %v1866 = vpow.pop %v1865
    %v1867 = vmul.f32 %v1864, 1.442695
    %v1868 = vpow.pop %v1867
    %v1869 = vadd.f32 %v1866, 1.0
    %v1870 = vadd.f32 %v1868, 1.0
    %v1871 = vrcp.pop %v1869
    %v1872 = vmul.f32 1.0, %v1871
    %v1873 = vrcp.pop %v1870
    %v1874 = vmul.f32 1.0, %v1873
    %v1875 = vmul.f32 %v1872, 2.0
    %v1876 = vmul.f32 %v1874, 2.0
    %v1877 = vsub.f32 %v1875, 1.0
    %v1878 = vsub.f32 %v1876, 1.0
    %v1879 = vsel %vm43, %v1877, %v1872
    %v1880 = vsel %vm44, %v1878, %v1874
    %v1882 = vrot.slane %v1757, 6
    %v1884 = vmul.f32 %v1879, %v1882
    %v1885 = vmul.f32 %v1879, %v1880
    %1887 = vrot.lane.b32.xlu0 %v1885, 64
    %v1888 = vpop.permute.xlu0 %1887
    %v1890 = vadd.f32 %v1884, %v1888
    %v1891 = vtanh.pop %v1890
    %v1892 = vmul.f32 %v1880, %v1891
    %1894 = vrot.lane.b32.xlu0 %v1892, 64
    %v1895 = vpop.permute.xlu0 %1894
    %1897 = vst.msk [vmem:[#allocation4] sm:$0xc] %vm695, %v1895
    %1898 = vst.msk [vmem:[#allocation4 + $0xa] sm:$0xc] %vm697, %v1895
    %v1899 = vld [vmem:[#allocation2] sm:$0x30]
    %v1900 = vld [vmem:[#allocation2 + $0x8] sm:$0x30]
    %v1901 = vld [vmem:[#allocation2 + $0x10] sm:$0xc]
    %v1902 = vld [vmem:[#allocation2 + $0x18] sm:$0xc]
    %v1905 = vrot.slane %v1901, 6
    %v1906 = vrot.slane %v1902, 6
    %v1909 = vsel %vm69, %v1899, %v1905
    %v1910 = vsel %vm70, %v1900, %v1906
    %v1911 = vrot.slane %v1892, 2
    %1912 = vrot.lane.b32.xlu0 %v1911, 64
    %v1913 = vpop.permute.xlu0 %1912
    %v1914 = vsel %vm448, %v1913, 0
    %1916 = vmatprep.subr.mxu0 0.0
    %1917 = vmatpush1.msra.mxu0 0.0
    %1918 = vmatprep.subr.mxu0 0.0
    %1919 = vmatpush1.msra.mxu0 0.0
    %1920 = vmatprep.subr.mxu0 0.0
    %1921 = vmatpush1.msra.mxu0 0.0
    %1922 = vmatprep.subr.mxu0 0.0
    %1923 = vmatpush1.msra.mxu0 0.0
    %1924 = vmatprep.subr.mxu0 0.0
    %1925 = vmatpush1.msra.mxu0 0.0
    %1926 = vmatprep.subr.mxu0 0.0
    %1927 = vmatpush1.msra.mxu0 0.0
    %1928 = vmatprep.subr.mxu0 0.0
    %1929 = vmatpush1.msra.mxu0 0.0
    %1930 = vmatprep.subr.mxu0 0.0
    %1931 = vmatpush1.msra.mxu0 0.0
    %1932 = vmatprep.subr.mxu0 %v1643
    %1933 = vmatpush1.msra.mxu0 %v1642
    %1934 = vmatprep.subr.mxu0 %v1641
    %1935 = vmatpush1.msra.mxu0 %v1640
    %1936 = vmatprep.subr.mxu0 %v1639
    %1937 = vmatpush1.msra.mxu0 %v1638
    %1938 = vmatprep.subr.mxu0 %v1637
    %1939 = vmatpush1.msra.mxu0 %v1636
    %1940 = vmatprep.subr.mxu0 %v1635
    %1941 = vmatpush1.msra.mxu0 %v1634
    %1942 = vmatprep.subr.mxu0 %v1633
    %1943 = vmatpush1.msra.mxu0 %v1632
    %1944 = vmatprep.subr.mxu0 %v1631
    %1945 = vmatpush1.msra.mxu0 %v1630
    %1946 = vmatprep.subr.mxu0 %v1629
    %1947 = vmatpush1.msra.mxu0 %v1628
    %1948 = vmatprep.subr.mxu0 0.0
    %1949 = vmatpush2.msra.mxu0 0.0
    %1950 = vmatprep.subr.mxu0 0.0
    %1951 = vmatpush2.msra.mxu0 0.0
    %1952 = vmatprep.subr.mxu0 0.0
    %1953 = vmatpush2.msra.mxu0 0.0
    %1954 = vmatprep.subr.mxu0 0.0
    %1955 = vmatpush2.msra.mxu0 0.0
    %1956 = vmatprep.subr.mxu0 0.0
    %1957 = vmatpush2.msra.mxu0 0.0
    %1958 = vmatprep.subr.mxu0 0.0
    %1959 = vmatpush2.msra.mxu0 0.0
    %1960 = vmatprep.subr.mxu0 0.0
    %1961 = vmatpush2.msra.mxu0 0.0
    %1962 = vmatprep.subr.mxu0 0.0
    %1963 = vmatpush2.msra.mxu0 0.0
    %1964 = vmatprep.subr.mxu0 0.0
    %1965 = vmatpush2.msra.mxu0 0.0
    %1966 = vmatprep.subr.mxu0 0.0
    %1967 = vmatpush2.msra.mxu0 0.0
    %1968 = vmatprep.subr.mxu0 0.0
    %1969 = vmatpush2.msra.mxu0 0.0
    %1970 = vmatprep.subr.mxu0 0.0
    %1971 = vmatpush2.msra.mxu0 0.0
    %1972 = vmatprep.subr.mxu0 0.0
    %1973 = vmatpush2.msra.mxu0 0.0
    %1974 = vmatprep.subr.mxu0 0.0
    %1975 = vmatpush2.msra.mxu0 0.0
    %1976 = vmatprep.subr.mxu0 0.0
    %1977 = vmatpush2.msra.mxu0 0.0
    %1978 = vmatprep.subr.mxu0 0.0
    %1979 = vmatpush2.msra.mxu0 0.0
    %1980 = vmatprep.mubr.f32.mxu0 0.0
    %1981 = vmatmul.mubr.f32.gmra.mxu0 %v1914
    %v1982 = vpop.f32.mrf.mxu0
    %v1983 = vadd.f32 0.0, %v1982
    %v1984 = vpop.f32.mrf.mxu0
    %v1985 = vadd.f32 0.0, %v1984
    %1986 = vdwg.mxu0
    %v1989 = vrot.slane %v1983, 4
    %v1990 = vrot.slane %v1985, 4
    %v1993 = vadd.f32 %v1909, %v1989
    %v1994 = vadd.f32 %v1910, %v1990
    %v1995 = vmul.f32 %v1993, 2.0
    %v1996 = vmul.f32 %v1994, 2.0
    %v1997 = vsel %vm43, %v1995, %v1993
    %v1998 = vsel %vm44, %v1996, %v1994
    %v1999 = vxor.u32 %v1997, 2147483648
    %v2000 = vxor.u32 %v1998, 2147483648
    %v2001 = vmul.f32 %v1999, 1.442695
    %v2002 = vpow.pop %v2001
    %v2003 = vmul.f32 %v2000, 1.442695
    %v2004 = vpow.pop %v2003
    %v2005 = vadd.f32 %v2002, 1.0
    %v2006 = vadd.f32 %v2004, 1.0
    %v2007 = vrcp.pop %v2005
    %v2008 = vmul.f32 1.0, %v2007
    %v2009 = vrcp.pop %v2006
    %v2010 = vmul.f32 1.0, %v2009
    %v2011 = vmul.f32 %v2008, 2.0
    %v2012 = vmul.f32 %v2010, 2.0
    %v2013 = vsub.f32 %v2011, 1.0
    %v2014 = vsub.f32 %v2012, 1.0
    %v2015 = vsel %vm43, %v2013, %v2008
    %v2016 = vsel %vm44, %v2014, %v2010
    %v2018 = vrot.slane %v1890, 6
    %v2020 = vmul.f32 %v2015, %v2018
    %v2021 = vmul.f32 %v2015, %v2016
    %2023 = vrot.lane.b32.xlu0 %v2021, 64
    %v2024 = vpop.permute.xlu0 %2023
    %v2026 = vadd.f32 %v2020, %v2024
    %v2027 = vtanh.pop %v2026
    %v2028 = vmul.f32 %v2016, %v2027
    %2030 = vrot.lane.b32.xlu0 %v2028, 64
    %v2031 = vpop.permute.xlu0 %2030
    %2033 = vst.msk [vmem:[#allocation4] sm:$0x30] %vm833, %v2031
    %2034 = vst.msk [vmem:[#allocation4 + $0x6] sm:$0x30] %vm835, %v2031
    %v2035 = vld [vmem:[#allocation2] sm:$0xc0]
    %v2036 = vld [vmem:[#allocation2 + $0x8] sm:$0xc0]
    %v2037 = vld [vmem:[#allocation2 + $0x10] sm:$0x3]
    %v2038 = vld [vmem:[#allocation2 + $0x18] sm:$0x3]
    %v2041 = vrot.slane %v2037, 2
    %v2042 = vrot.slane %v2038, 2
    %v2045 = vsel %vm69, %v2035, %v2041
    %v2046 = vsel %vm70, %v2036, %v2042
    %v2047 = vrot.slane %v2028, 4
    %2048 = vrot.lane.b32.xlu0 %v2047, 64
    %v2049 = vpop.permute.xlu0 %2048
    %v2050 = vsel %vm448, %v2049, 0
    %2052 = vmatprep.subr.mxu0 0.0
    %2053 = vmatpush1.msra.mxu0 0.0
    %2054 = vmatprep.subr.mxu0 0.0
    %2055 = vmatpush1.msra.mxu0 0.0
    %2056 = vmatprep.subr.mxu0 0.0
    %2057 = vmatpush1.msra.mxu0 0.0
    %2058 = vmatprep.subr.mxu0 0.0
    %2059 = vmatpush1.msra.mxu0 0.0
    %2060 = vmatprep.subr.mxu0 0.0
    %2061 = vmatpush1.msra.mxu0 0.0
    %2062 = vmatprep.subr.mxu0 0.0
    %2063 = vmatpush1.msra.mxu0 0.0
    %2064 = vmatprep.subr.mxu0 0.0
    %2065 = vmatpush1.msra.mxu0 0.0
    %2066 = vmatprep.subr.mxu0 0.0
    %2067 = vmatpush1.msra.mxu0 0.0
    %2068 = vmatprep.subr.mxu0 %v1643
    %2069 = vmatpush1.msra.mxu0 %v1642
    %2070 = vmatprep.subr.mxu0 %v1641
    %2071 = vmatpush1.msra.mxu0 %v1640
    %2072 = vmatprep.subr.mxu0 %v1639
    %2073 = vmatpush1.msra.mxu0 %v1638
    %2074 = vmatprep.subr.mxu0 %v1637
    %2075 = vmatpush1.msra.mxu0 %v1636
    %2076 = vmatprep.subr.mxu0 %v1635
    %2077 = vmatpush1.msra.mxu0 %v1634
    %2078 = vmatprep.subr.mxu0 %v1633
    %2079 = vmatpush1.msra.mxu0 %v1632
    %2080 = vmatprep.subr.mxu0 %v1631
    %2081 = vmatpush1.msra.mxu0 %v1630
    %2082 = vmatprep.subr.mxu0 %v1629
    %2083 = vmatpush1.msra.mxu0 %v1628
    %2084 = vmatprep.subr.mxu0 0.0
    %2085 = vmatpush2.msra.mxu0 0.0
    %2086 = vmatprep.subr.mxu0 0.0
    %2087 = vmatpush2.msra.mxu0 0.0
    %2088 = vmatprep.subr.mxu0 0.0
    %2089 = vmatpush2.msra.mxu0 0.0
    %2090 = vmatprep.subr.mxu0 0.0
    %2091 = vmatpush2.msra.mxu0 0.0
    %2092 = vmatprep.subr.mxu0 0.0
    %2093 = vmatpush2.msra.mxu0 0.0
    %2094 = vmatprep.subr.mxu0 0.0
    %2095 = vmatpush2.msra.mxu0 0.0
    %2096 = vmatprep.subr.mxu0 0.0
    %2097 = vmatpush2.msra.mxu0 0.0
    %2098 = vmatprep.subr.mxu0 0.0
    %2099 = vmatpush2.msra.mxu0 0.0
    %2100 = vmatprep.subr.mxu0 0.0
    %2101 = vmatpush2.msra.mxu0 0.0
    %2102 = vmatprep.subr.mxu0 0.0
    %2103 = vmatpush2.msra.mxu0 0.0
    %2104 = vmatprep.subr.mxu0 0.0
    %2105 = vmatpush2.msra.mxu0 0.0
    %2106 = vmatprep.subr.mxu0 0.0
    %2107 = vmatpush2.msra.mxu0 0.0
    %2108 = vmatprep.subr.mxu0 0.0
    %2109 = vmatpush2.msra.mxu0 0.0
    %2110 = vmatprep.subr.mxu0 0.0
    %2111 = vmatpush2.msra.mxu0 0.0
    %2112 = vmatprep.subr.mxu0 0.0
    %2113 = vmatpush2.msra.mxu0 0.0
    %2114 = vmatprep.subr.mxu0 0.0
    %2115 = vmatpush2.msra.mxu0 0.0
    %2116 = vmatprep.mubr.f32.mxu0 0.0
    %2117 = vmatmul.mubr.f32.gmra.mxu0 %v2050
    %v2118 = vpop.f32.mrf.mxu0
    %v2119 = vadd.f32 0.0, %v2118
    %v2120 = vpop.f32.mrf.mxu0
    %v2121 = vadd.f32 0.0, %v2120
    %2122 = vdwg.mxu0
    %v2125 = vrot.slane %v2119, 2
    %v2126 = vrot.slane %v2121, 2
    %v2129 = vadd.f32 %v2045, %v2125
    %v2130 = vadd.f32 %v2046, %v2126
    %v2131 = vmul.f32 %v2129, 2.0
    %v2132 = vmul.f32 %v2130, 2.0
    %v2133 = vsel %vm43, %v2131, %v2129
    %v2134 = vsel %vm44, %v2132, %v2130
    %v2135 = vxor.u32 %v2133, 2147483648
    %v2136 = vxor.u32 %v2134, 2147483648
    %v2137 = vmul.f32 %v2135, 1.442695
    %v2138 = vpow.pop %v2137
    %v2139 = vmul.f32 %v2136, 1.442695
    %v2140 = vpow.pop %v2139
    %v2141 = vadd.f32 %v2138, 1.0
    %v2142 = vadd.f32 %v2140, 1.0
    %v2143 = vrcp.pop %v2141
    %v2144 = vmul.f32 1.0, %v2143
    %v2145 = vrcp.pop %v2142
    %v2146 = vmul.f32 1.0, %v2145
    %v2147 = vmul.f32 %v2144, 2.0
    %v2148 = vmul.f32 %v2146, 2.0
    %v2149 = vsub.f32 %v2147, 1.0
    %v2150 = vsub.f32 %v2148, 1.0
    %v2151 = vsel %vm43, %v2149, %v2144
    %v2152 = vsel %vm44, %v2150, %v2146
    %v2154 = vrot.slane %v2026, 6
    %v2156 = vmul.f32 %v2151, %v2154
    %v2157 = vmul.f32 %v2151, %v2152
    %2159 = vrot.lane.b32.xlu0 %v2157, 64
    %v2160 = vpop.permute.xlu0 %2159
    %v2162 = vadd.f32 %v2156, %v2160
    %v2163 = vtanh.pop %v2162
    %v2164 = vmul.f32 %v2152, %v2163
    %2166 = vrot.lane.b32.xlu0 %v2164, 64
    %v2167 = vpop.permute.xlu0 %2166
    %2169 = vst.msk [vmem:[#allocation4] sm:$0xc0] %vm971, %v2167
    %2170 = vst.msk [vmem:[#allocation4 + $0x2] sm:$0xc0] %vm973, %v2167
    %v2171 = vld [vmem:[#allocation2 + $0x10] sm:$0x3]
    %v2172 = vld [vmem:[#allocation2 + $0x18] sm:$0x3]
    %v2173 = vld [vmem:[#allocation2] sm:$0xc0]
    %v2174 = vld [vmem:[#allocation2 + $0x8] sm:$0xc0]
    %v2177 = vrot.slane %v2173, 6
    %v2178 = vrot.slane %v2174, 6
    %v2181 = vsel %vm69, %v2171, %v2177
    %v2182 = vsel %vm70, %v2172, %v2178
    %v2183 = vrot.slane %v2164, 6
    %2184 = vrot.lane.b32.xlu0 %v2183, 64
    %v2185 = vpop.permute.xlu0 %2184
    %v2186 = vsel %vm448, %v2185, 0
    %2188 = vmatprep.subr.mxu0 0.0
    %2189 = vmatpush1.msra.mxu0 0.0
    %2190 = vmatprep.subr.mxu0 0.0
    %2191 = vmatpush1.msra.mxu0 0.0
    %2192 = vmatprep.subr.mxu0 0.0
    %2193 = vmatpush1.msra.mxu0 0.0
    %2194 = vmatprep.subr.mxu0 0.0
    %2195 = vmatpush1.msra.mxu0 0.0
    %2196 = vmatprep.subr.mxu0 0.0
    %2197 = vmatpush1.msra.mxu0 0.0
    %2198 = vmatprep.subr.mxu0 0.0
    %2199 = vmatpush1.msra.mxu0 0.0
    %2200 = vmatprep.subr.mxu0 0.0
    %2201 = vmatpush1.msra.mxu0 0.0
    %2202 = vmatprep.subr.mxu0 0.0
    %2203 = vmatpush1.msra.mxu0 0.0
    %2204 = vmatprep.subr.mxu0 %v1643
    %2205 = vmatpush1.msra.mxu0 %v1642
    %2206 = vmatprep.subr.mxu0 %v1641
    %2207 = vmatpush1.msra.mxu0 %v1640
    %2208 = vmatprep.subr.mxu0 %v1639
    %2209 = vmatpush1.msra.mxu0 %v1638
    %2210 = vmatprep.subr.mxu0 %v1637
    %2211 = vmatpush1.msra.mxu0 %v1636
    %2212 = vmatprep.subr.mxu0 %v1635
    %2213 = vmatpush1.msra.mxu0 %v1634
    %2214 = vmatprep.subr.mxu0 %v1633
    %2215 = vmatpush1.msra.mxu0 %v1632
    %2216 = vmatprep.subr.mxu0 %v1631
    %2217 = vmatpush1.msra.mxu0 %v1630
    %2218 = vmatprep.subr.mxu0 %v1629
    %2219 = vmatpush1.msra.mxu0 %v1628
    %2220 = vmatprep.subr.mxu0 0.0
    %2221 = vmatpush2.msra.mxu0 0.0
    %2222 = vmatprep.subr.mxu0 0.0
    %2223 = vmatpush2.msra.mxu0 0.0
    %2224 = vmatprep.subr.mxu0 0.0
    %2225 = vmatpush2.msra.mxu0 0.0
    %2226 = vmatprep.subr.mxu0 0.0
    %2227 = vmatpush2.msra.mxu0 0.0
    %2228 = vmatprep.subr.mxu0 0.0
    %2229 = vmatpush2.msra.mxu0 0.0
    %2230 = vmatprep.subr.mxu0 0.0
    %2231 = vmatpush2.msra.mxu0 0.0
    %2232 = vmatprep.subr.mxu0 0.0
    %2233 = vmatpush2.msra.mxu0 0.0
    %2234 = vmatprep.subr.mxu0 0.0
    %2235 = vmatpush2.msra.mxu0 0.0
    %2236 = vmatprep.subr.mxu0 0.0
    %2237 = vmatpush2.msra.mxu0 0.0
    %2238 = vmatprep.subr.mxu0 0.0
    %2239 = vmatpush2.msra.mxu0 0.0
    %2240 = vmatprep.subr.mxu0 0.0
    %2241 = vmatpush2.msra.mxu0 0.0
    %2242 = vmatprep.subr.mxu0 0.0
    %2243 = vmatpush2.msra.mxu0 0.0
    %2244 = vmatprep.subr.mxu0 0.0
    %2245 = vmatpush2.msra.mxu0 0.0
    %2246 = vmatprep.subr.mxu0 0.0
    %2247 = vmatpush2.msra.mxu0 0.0
    %2248 = vmatprep.subr.mxu0 0.0
    %2249 = vmatpush2.msra.mxu0 0.0
    %2250 = vmatprep.subr.mxu0 0.0
    %2251 = vmatpush2.msra.mxu0 0.0
    %2252 = vmatprep.mubr.f32.mxu0 0.0
    %2253 = vmatmul.mubr.f32.gmra.mxu0 %v2186
    %v2254 = vpop.f32.mrf.mxu0
    %v2255 = vadd.f32 0.0, %v2254
    %v2256 = vpop.f32.mrf.mxu0
    %v2257 = vadd.f32 0.0, %v2256
    %2258 = vdwg.mxu0
    %v2259 = vadd.f32 %v2181, %v2255
    %v2260 = vadd.f32 %v2182, %v2257
    %v2261 = vmul.f32 %v2259, 2.0
    %v2262 = vmul.f32 %v2260, 2.0
    %v2263 = vsel %vm43, %v2261, %v2259
    %v2264 = vsel %vm44, %v2262, %v2260
    %v2265 = vxor.u32 %v2263, 2147483648
    %v2266 = vxor.u32 %v2264, 2147483648
    %v2267 = vmul.f32 %v2265, 1.442695
    %v2268 = vpow.pop %v2267
    %v2269 = vmul.f32 %v2266, 1.442695
    %v2270 = vpow.pop %v2269
    %v2271 = vadd.f32 %v2268, 1.0
    %v2272 = vadd.f32 %v2270, 1.0
    %v2273 = vrcp.pop %v2271
    %v2274 = vmul.f32 1.0, %v2273
    %v2275 = vrcp.pop %v2272
    %v2276 = vmul.f32 1.0, %v2275
    %v2277 = vmul.f32 %v2274, 2.0
    %v2278 = vmul.f32 %v2276, 2.0
    %v2279 = vsub.f32 %v2277, 1.0
    %v2280 = vsub.f32 %v2278, 1.0
    %v2281 = vsel %vm43, %v2279, %v2274
    %v2282 = vsel %vm44, %v2280, %v2276
    %v2284 = vrot.slane %v2162, 6
    %v2286 = vmul.f32 %v2281, %v2284
    %v2287 = vmul.f32 %v2281, %v2282
    %2289 = vrot.lane.b32.xlu0 %v2287, 64
    %v2290 = vpop.permute.xlu0 %2289
    %v2292 = vadd.f32 %v2286, %v2290
    %v2293 = vtanh.pop %v2292
    %v2294 = vmul.f32 %v2282, %v2293
    %2296 = vrot.lane.b32.xlu0 %v2294, 64
    %v2297 = vpop.permute.xlu0 %2296
    %2299 = vst.msk [vmem:[#allocation4 + $0x8] sm:$0x3] %vm560, %v2297
    %2300 = vst.msk [vmem:[#allocation4 + $0x6] sm:$0x3] %vm562, %v2297
    %v2301 = vld [vmem:[#allocation2 + $0x10] sm:$0xc]
    %v2302 = vld [vmem:[#allocation2 + $0x18] sm:$0xc]
    %v2303 = vld [vmem:[#allocation2] sm:$0x30]
    %v2304 = vld [vmem:[#allocation2 + $0x8] sm:$0x30]
    %v2307 = vrot.slane %v2303, 2
    %v2308 = vrot.slane %v2304, 2
    %v2311 = vsel %vm69, %v2301, %v2307
    %v2312 = vsel %vm70, %v2302, %v2308
    %v2313 = vsel %vm448, %v2297, 0
    %2315 = vmatprep.subr.mxu0 0.0
    %2316 = vmatpush1.msra.mxu0 0.0
    %2317 = vmatprep.subr.mxu0 0.0
    %2318 = vmatpush1.msra.mxu0 0.0
    %2319 = vmatprep.subr.mxu0 0.0
    %2320 = vmatpush1.msra.mxu0 0.0
    %2321 = vmatprep.subr.mxu0 0.0
    %2322 = vmatpush1.msra.mxu0 0.0
    %2323 = vmatprep.subr.mxu0 0.0
    %2324 = vmatpush1.msra.mxu0 0.0
    %2325 = vmatprep.subr.mxu0 0.0
    %2326 = vmatpush1.msra.mxu0 0.0
    %2327 = vmatprep.subr.mxu0 0.0
    %2328 = vmatpush1.msra.mxu0 0.0
    %2329 = vmatprep.subr.mxu0 0.0
    %2330 = vmatpush1.msra.mxu0 0.0
    %2331 = vmatprep.subr.mxu0 %v1643
    %2332 = vmatpush1.msra.mxu0 %v1642
    %2333 = vmatprep.subr.mxu0 %v1641
    %2334 = vmatpush1.msra.mxu0 %v1640
    %2335 = vmatprep.subr.mxu0 %v1639
    %2336 = vmatpush1.msra.mxu0 %v1638
    %2337 = vmatprep.subr.mxu0 %v1637
    %2338 = vmatpush1.msra.mxu0 %v1636
    %2339 = vmatprep.subr.mxu0 %v1635
    %2340 = vmatpush1.msra.mxu0 %v1634
    %2341 = vmatprep.subr.mxu0 %v1633
    %2342 = vmatpush1.msra.mxu0 %v1632
    %2343 = vmatprep.subr.mxu0 %v1631
    %2344 = vmatpush1.msra.mxu0 %v1630
    %2345 = vmatprep.subr.mxu0 %v1629
    %2346 = vmatpush1.msra.mxu0 %v1628
    %2347 = vmatprep.subr.mxu0 0.0
    %2348 = vmatpush2.msra.mxu0 0.0
    %2349 = vmatprep.subr.mxu0 0.0
    %2350 = vmatpush2.msra.mxu0 0.0
    %2351 = vmatprep.subr.mxu0 0.0
    %2352 = vmatpush2.msra.mxu0 0.0
    %2353 = vmatprep.subr.mxu0 0.0
    %2354 = vmatpush2.msra.mxu0 0.0
    %2355 = vmatprep.subr.mxu0 0.0
    %2356 = vmatpush2.msra.mxu0 0.0
    %2357 = vmatprep.subr.mxu0 0.0
    %2358 = vmatpush2.msra.mxu0 0.0
    %2359 = vmatprep.subr.mxu0 0.0
    %2360 = vmatpush2.msra.mxu0 0.0
    %2361 = vmatprep.subr.mxu0 0.0
    %2362 = vmatpush2.msra.mxu0 0.0
    %2363 = vmatprep.subr.mxu0 0.0
    %2364 = vmatpush2.msra.mxu0 0.0
    %2365 = vmatprep.subr.mxu0 0.0
    %2366 = vmatpush2.msra.mxu0 0.0
    %2367 = vmatprep.subr.mxu0 0.0
    %2368 = vmatpush2.msra.mxu0 0.0
    %2369 = vmatprep.subr.mxu0 0.0
    %2370 = vmatpush2.msra.mxu0 0.0
    %2371 = vmatprep.subr.mxu0 0.0
    %2372 = vmatpush2.msra.mxu0 0.0
    %2373 = vmatprep.subr.mxu0 0.0
    %2374 = vmatpush2.msra.mxu0 0.0
    %2375 = vmatprep.subr.mxu0 0.0
    %2376 = vmatpush2.msra.mxu0 0.0
    %2377 = vmatprep.subr.mxu0 0.0
    %2378 = vmatpush2.msra.mxu0 0.0
    %2379 = vmatprep.mubr.f32.mxu0 0.0
    %2380 = vmatmul.mubr.f32.gmra.mxu0 %v2313
    %v2381 = vpop.f32.mrf.mxu0
    %v2382 = vadd.f32 0.0, %v2381
    %v2383 = vpop.f32.mrf.mxu0
    %v2384 = vadd.f32 0.0, %v2383
    %2385 = vdwg.mxu0
    %v2388 = vrot.slane %v2382, 6
    %v2389 = vrot.slane %v2384, 6
    %v2392 = vadd.f32 %v2311, %v2388
    %v2393 = vadd.f32 %v2312, %v2389
    %v2394 = vmul.f32 %v2392, 2.0
    %v2395 = vmul.f32 %v2393, 2.0
    %v2396 = vsel %vm43, %v2394, %v2392
    %v2397 = vsel %vm44, %v2395, %v2393
    %v2398 = vxor.u32 %v2396, 2147483648
    %v2399 = vxor.u32 %v2397, 2147483648
    %v2400 = vmul.f32 %v2398, 1.442695
    %v2401 = vpow.pop %v2400
    %v2402 = vmul.f32 %v2399, 1.442695
    %v2403 = vpow.pop %v2402
    %v2404 = vadd.f32 %v2401, 1.0
    %v2405 = vadd.f32 %v2403, 1.0
    %v2406 = vrcp.pop %v2404
    %v2407 = vmul.f32 1.0, %v2406
    %v2408 = vrcp.pop %v2405
    %v2409 = vmul.f32 1.0, %v2408
    %v2410 = vmul.f32 %v2407, 2.0
    %v2411 = vmul.f32 %v2409, 2.0
    %v2412 = vsub.f32 %v2410, 1.0
    %v2413 = vsub.f32 %v2411, 1.0
    %v2414 = vsel %vm43, %v2412, %v2407
    %v2415 = vsel %vm44, %v2413, %v2409
    %v2417 = vrot.slane %v2292, 6
    %v2419 = vmul.f32 %v2414, %v2417
    %v2420 = vmul.f32 %v2414, %v2415
    %2422 = vrot.lane.b32.xlu0 %v2420, 64
    %v2423 = vpop.permute.xlu0 %2422
    %v2425 = vadd.f32 %v2419, %v2423
    %v2426 = vtanh.pop %v2425
    %v2427 = vmul.f32 %v2415, %v2426
    %2429 = vrot.lane.b32.xlu0 %v2427, 64
    %v2430 = vpop.permute.xlu0 %2429
    %2432 = vst.msk [vmem:[#allocation4 + $0x8] sm:$0xc] %vm695, %v2430
    %2433 = vst.msk [vmem:[#allocation4 + $0x2] sm:$0xc] %vm697, %v2430
    %v2434 = vld [vmem:[#allocation2 + $0x10] sm:$0x30]
    %v2435 = vld [vmem:[#allocation2 + $0x18] sm:$0x30]
    %v2436 = vld [vmem:[#allocation2] sm:$0xc]
    %v2437 = vld [vmem:[#allocation2 + $0x8] sm:$0xc]
    %v2440 = vrot.slane %v2436, 6
    %v2441 = vrot.slane %v2437, 6
    %v2444 = vsel %vm69, %v2434, %v2440
    %v2445 = vsel %vm70, %v2435, %v2441
    %v2446 = vrot.slane %v2427, 2
    %2447 = vrot.lane.b32.xlu0 %v2446, 64
    %v2448 = vpop.permute.xlu0 %2447
    %v2449 = vsel %vm448, %v2448, 0
    %2451 = vmatprep.subr.mxu0 0.0
    %2452 = vmatpush1.msra.mxu0 0.0
    %2453 = vmatprep.subr.mxu0 0.0
    %2454 = vmatpush1.msra.mxu0 0.0
    %2455 = vmatprep.subr.mxu0 0.0
    %2456 = vmatpush1.msra.mxu0 0.0
    %2457 = vmatprep.subr.mxu0 0.0
    %2458 = vmatpush1.msra.mxu0 0.0
    %2459 = vmatprep.subr.mxu0 0.0
    %2460 = vmatpush1.msra.mxu0 0.0
    %2461 = vmatprep.subr.mxu0 0.0
    %2462 = vmatpush1.msra.mxu0 0.0
    %2463 = vmatprep.subr.mxu0 0.0
    %2464 = vmatpush1.msra.mxu0 0.0
    %2465 = vmatprep.subr.mxu0 0.0
    %2466 = vmatpush1.msra.mxu0 0.0
    %2467 = vmatprep.subr.mxu0 %v1643
    %2468 = vmatpush1.msra.mxu0 %v1642
    %2469 = vmatprep.subr.mxu0 %v1641
    %2470 = vmatpush1.msra.mxu0 %v1640
    %2471 = vmatprep.subr.mxu0 %v1639
    %2472 = vmatpush1.msra.mxu0 %v1638
    %2473 = vmatprep.subr.mxu0 %v1637
    %2474 = vmatpush1.msra.mxu0 %v1636
    %2475 = vmatprep.subr.mxu0 %v1635
    %2476 = vmatpush1.msra.mxu0 %v1634
    %2477 = vmatprep.subr.mxu0 %v1633
    %2478 = vmatpush1.msra.mxu0 %v1632
    %2479 = vmatprep.subr.mxu0 %v1631
    %2480 = vmatpush1.msra.mxu0 %v1630
    %2481 = vmatprep.subr.mxu0 %v1629
    %2482 = vmatpush1.msra.mxu0 %v1628
    %2483 = vmatprep.subr.mxu0 0.0
    %2484 = vmatpush2.msra.mxu0 0.0
    %2485 = vmatprep.subr.mxu0 0.0
    %2486 = vmatpush2.msra.mxu0 0.0
    %2487 = vmatprep.subr.mxu0 0.0
    %2488 = vmatpush2.msra.mxu0 0.0
    %2489 = vmatprep.subr.mxu0 0.0
    %2490 = vmatpush2.msra.mxu0 0.0
    %2491 = vmatprep.subr.mxu0 0.0
    %2492 = vmatpush2.msra.mxu0 0.0
    %2493 = vmatprep.subr.mxu0 0.0
    %2494 = vmatpush2.msra.mxu0 0.0
    %2495 = vmatprep.subr.mxu0 0.0
    %2496 = vmatpush2.msra.mxu0 0.0
    %2497 = vmatprep.subr.mxu0 0.0
    %2498 = vmatpush2.msra.mxu0 0.0
    %2499 = vmatprep.subr.mxu0 0.0
    %2500 = vmatpush2.msra.mxu0 0.0
    %2501 = vmatprep.subr.mxu0 0.0
    %2502 = vmatpush2.msra.mxu0 0.0
    %2503 = vmatprep.subr.mxu0 0.0
    %2504 = vmatpush2.msra.mxu0 0.0
    %2505 = vmatprep.subr.mxu0 0.0
    %2506 = vmatpush2.msra.mxu0 0.0
    %2507 = vmatprep.subr.mxu0 0.0
    %2508 = vmatpush2.msra.mxu0 0.0
    %2509 = vmatprep.subr.mxu0 0.0
    %2510 = vmatpush2.msra.mxu0 0.0
    %2511 = vmatprep.subr.mxu0 0.0
    %2512 = vmatpush2.msra.mxu0 0.0
    %2513 = vmatprep.subr.mxu0 0.0
    %2514 = vmatpush2.msra.mxu0 0.0
    %2515 = vmatprep.mubr.f32.mxu0 0.0
    %2516 = vmatmul.mubr.f32.gmra.mxu0 %v2449
    %v2517 = vpop.f32.mrf.mxu0
    %v2518 = vadd.f32 0.0, %v2517
    %v2519 = vpop.f32.mrf.mxu0
    %v2520 = vadd.f32 0.0, %v2519
    %2521 = vdwg.mxu0
    %v2524 = vrot.slane %v2518, 4
    %v2525 = vrot.slane %v2520, 4
    %v2528 = vadd.f32 %v2444, %v2524
    %v2529 = vadd.f32 %v2445, %v2525
    %v2530 = vmul.f32 %v2528, 2.0
    %v2531 = vmul.f32 %v2529, 2.0
    %v2532 = vsel %vm43, %v2530, %v2528
    %v2533 = vsel %vm44, %v2531, %v2529
    %v2534 = vxor.u32 %v2532, 2147483648
    %v2535 = vxor.u32 %v2533, 2147483648
    %v2536 = vmul.f32 %v2534, 1.442695
    %v2537 = vpow.pop %v2536
    %v2538 = vmul.f32 %v2535, 1.442695
    %v2539 = vpow.pop %v2538
    %v2540 = vadd.f32 %v2537, 1.0
    %v2541 = vadd.f32 %v2539, 1.0
    %v2542 = vrcp.pop %v2540
    %v2543 = vmul.f32 1.0, %v2542
    %v2544 = vrcp.pop %v2541
    %v2545 = vmul.f32 1.0, %v2544
    %v2546 = vmul.f32 %v2543, 2.0
    %v2547 = vmul.f32 %v2545, 2.0
    %v2548 = vsub.f32 %v2546, 1.0
    %v2549 = vsub.f32 %v2547, 1.0
    %v2550 = vsel %vm43, %v2548, %v2543
    %v2551 = vsel %vm44, %v2549, %v2545
    %v2553 = vrot.slane %v2425, 6
    %v2555 = vmul.f32 %v2550, %v2553
    %v2556 = vmul.f32 %v2550, %v2551
    %2558 = vrot.lane.b32.xlu0 %v2556, 64
    %v2559 = vpop.permute.xlu0 %2558
    %v2561 = vadd.f32 %v2555, %v2559
    %v2562 = vtanh.pop %v2561
    %v2563 = vmul.f32 %v2551, %v2562
    %2565 = vrot.lane.b32.xlu0 %v2563, 64
    %v2566 = vpop.permute.xlu0 %2565
    %2568 = vst.msk [vmem:[#allocation4 + $0x8] sm:$0x30] %vm833, %v2566
    %2569 = vst.msk [vmem:[#allocation4 - $0x2] sm:$0x30] %vm835, %v2566
    %v2570 = vld [vmem:[#allocation2 + $0x10] sm:$0xc0]
    %v2571 = vld [vmem:[#allocation2 + $0x18] sm:$0xc0]
    %v2572 = vld [vmem:[#allocation2] sm:$0x3]
    %v2573 = vld [vmem:[#allocation2 + $0x8] sm:$0x3]
    %v2576 = vrot.slane %v2572, 2
    %v2577 = vrot.slane %v2573, 2
    %v2580 = vsel %vm69, %v2570, %v2576
    %v2581 = vsel %vm70, %v2571, %v2577
    %v2582 = vrot.slane %v2563, 4
    %2583 = vrot.lane.b32.xlu0 %v2582, 64
    %v2584 = vpop.permute.xlu0 %2583
    %v2585 = vsel %vm448, %v2584, 0
    %2587 = vmatprep.subr.mxu0 0.0
    %2588 = vmatpush1.msra.mxu0 0.0
    %2589 = vmatprep.subr.mxu0 0.0
    %2590 = vmatpush1.msra.mxu0 0.0
    %2591 = vmatprep.subr.mxu0 0.0
    %2592 = vmatpush1.msra.mxu0 0.0
    %2593 = vmatprep.subr.mxu0 0.0
    %2594 = vmatpush1.msra.mxu0 0.0
    %2595 = vmatprep.subr.mxu0 0.0
    %2596 = vmatpush1.msra.mxu0 0.0
    %2597 = vmatprep.subr.mxu0 0.0
    %2598 = vmatpush1.msra.mxu0 0.0
    %2599 = vmatprep.subr.mxu0 0.0
    %2600 = vmatpush1.msra.mxu0 0.0
    %2601 = vmatprep.subr.mxu0 0.0
    %2602 = vmatpush1.msra.mxu0 0.0
    %2603 = vmatprep.subr.mxu0 %v1643
    %2604 = vmatpush1.msra.mxu0 %v1642
    %2605 = vmatprep.subr.mxu0 %v1641
    %2606 = vmatpush1.msra.mxu0 %v1640
    %2607 = vmatprep.subr.mxu0 %v1639
    %2608 = vmatpush1.msra.mxu0 %v1638
    %2609 = vmatprep.subr.mxu0 %v1637
    %2610 = vmatpush1.msra.mxu0 %v1636
    %2611 = vmatprep.subr.mxu0 %v1635
    %2612 = vmatpush1.msra.mxu0 %v1634
    %2613 = vmatprep.subr.mxu0 %v1633
    %2614 = vmatpush1.msra.mxu0 %v1632
    %2615 = vmatprep.subr.mxu0 %v1631
    %2616 = vmatpush1.msra.mxu0 %v1630
    %2617 = vmatprep.subr.mxu0 %v1629
    %2618 = vmatpush1.msra.mxu0 %v1628
    %2619 = vmatprep.subr.mxu0 0.0
    %2620 = vmatpush2.msra.mxu0 0.0
    %2621 = vmatprep.subr.mxu0 0.0
    %2622 = vmatpush2.msra.mxu0 0.0
    %2623 = vmatprep.subr.mxu0 0.0
    %2624 = vmatpush2.msra.mxu0 0.0
    %2625 = vmatprep.subr.mxu0 0.0
    %2626 = vmatpush2.msra.mxu0 0.0
    %2627 = vmatprep.subr.mxu0 0.0
    %2628 = vmatpush2.msra.mxu0 0.0
    %2629 = vmatprep.subr.mxu0 0.0
    %2630 = vmatpush2.msra.mxu0 0.0
    %2631 = vmatprep.subr.mxu0 0.0
    %2632 = vmatpush2.msra.mxu0 0.0
    %2633 = vmatprep.subr.mxu0 0.0
    %2634 = vmatpush2.msra.mxu0 0.0
    %2635 = vmatprep.subr.mxu0 0.0
    %2636 = vmatpush2.msra.mxu0 0.0
    %2637 = vmatprep.subr.mxu0 0.0
    %2638 = vmatpush2.msra.mxu0 0.0
    %2639 = vmatprep.subr.mxu0 0.0
    %2640 = vmatpush2.msra.mxu0 0.0
    %2641 = vmatprep.subr.mxu0 0.0
    %2642 = vmatpush2.msra.mxu0 0.0
    %2643 = vmatprep.subr.mxu0 0.0
    %2644 = vmatpush2.msra.mxu0 0.0
    %2645 = vmatprep.subr.mxu0 0.0
    %2646 = vmatpush2.msra.mxu0 0.0
    %2647 = vmatprep.subr.mxu0 0.0
    %2648 = vmatpush2.msra.mxu0 0.0
    %2649 = vmatprep.subr.mxu0 0.0
    %2650 = vmatpush2.msra.mxu0 0.0
    %2651 = vmatprep.mubr.f32.mxu0 0.0
    %2652 = vmatmul.mubr.f32.gmra.mxu0 %v2585
    %v2653 = vpop.f32.mrf.mxu0
    %v2654 = vadd.f32 0.0, %v2653
    %v2655 = vpop.f32.mrf.mxu0
    %v2656 = vadd.f32 0.0, %v2655
    %2657 = vdwg.mxu0
    %v2660 = vrot.slane %v2654, 2
    %v2661 = vrot.slane %v2656, 2
    %v2664 = vadd.f32 %v2580, %v2660
    %v2665 = vadd.f32 %v2581, %v2661
    %v2666 = vmul.f32 %v2664, 2.0
    %v2667 = vmul.f32 %v2665, 2.0
    %v2668 = vsel %vm43, %v2666, %v2664
    %v2669 = vsel %vm44, %v2667, %v2665
    %v2670 = vxor.u32 %v2668, 2147483648
    %v2671 = vxor.u32 %v2669, 2147483648
    %v2672 = vmul.f32 %v2670, 1.442695
    %v2673 = vpow.pop %v2672
    %v2674 = vmul.f32 %v2671, 1.442695
    %v2675 = vpow.pop %v2674
    %v2676 = vadd.f32 %v2673, 1.0
    %v2677 = vadd.f32 %v2675, 1.0
    %v2678 = vrcp.pop %v2676
    %v2679 = vmul.f32 1.0, %v2678
    %v2680 = vrcp.pop %v2677
    %v2681 = vmul.f32 1.0, %v2680
    %v2682 = vmul.f32 %v2679, 2.0
    %v2683 = vmul.f32 %v2681, 2.0
    %v2684 = vsub.f32 %v2682, 1.0
    %v2685 = vsub.f32 %v2683, 1.0
    %v2686 = vsel %vm43, %v2684, %v2679
    %v2687 = vsel %vm44, %v2685, %v2681
    %v2689 = vrot.slane %v2561, 6
    %v2691 = vmul.f32 %v2686, %v2689
    %v2692 = vmul.f32 %v2686, %v2687
    %2694 = vrot.lane.b32.xlu0 %v2692, 64
    %v2695 = vpop.permute.xlu0 %2694
    %v2697 = vadd.f32 %v2691, %v2695
    %v2698 = vtanh.pop %v2697
    %v2699 = vmul.f32 %v2687, %v2698
    %2701 = vrot.lane.b32.xlu0 %v2699, 64
    %v2702 = vpop.permute.xlu0 %2701
    %2704 = vst.msk [vmem:[#allocation4 + $0x8] sm:$0xc0] %vm971, %v2702
    %2705 = vst.msk [vmem:[#allocation4 - $0x6] sm:$0xc0] %vm973, %v2702
    %v2706 = vld [vmem:[#allocation4] sm:$0xff]
    %v2707 = vld [vmem:[#allocation4 + $0x8] sm:$0xff]
    %v2708 = vld [vmem:[%s4] sm:$0xff]
    %v2709 = vld [vmem:[%s4 + $0x8] sm:$0xff]
    %v2710 = vld [vmem:[%s4 + $0x10] sm:$0xff]
    %v2711 = vld [vmem:[%s4 + $0x18] sm:$0xff]
    %v2712 = vld [vmem:[%s4 + $0x20] sm:$0xff]
    %v2713 = vld [vmem:[%s4 + $0x28] sm:$0xff]
    %v2714 = vld [vmem:[%s4 + $0x30] sm:$0xff]
    %v2715 = vld [vmem:[%s4 + $0x38] sm:$0xff]
    %v2716 = vld [vmem:[%s4 + $0x40] sm:$0x1]
    %v2717 = vlaneseq
    %v2718 = vshrl.u32 %v2717, 7
    %v2719 = vsub.s32 0, %v2718
    %v2720 = vrot.slane %v2716, %v2719
    %v2722 = vsel %vm448, %v2706, 0
    %v2725 = vsel %vm448, %v2707, 0
    %2727 = vmatprep.subr.mxu0 0.0
    %2728 = vmatpush1.msra.mxu0 0.0
    %2729 = vmatprep.subr.mxu0 0.0
    %2730 = vmatpush1.msra.mxu0 0.0
    %2731 = vmatprep.subr.mxu0 0.0
    %2732 = vmatpush1.msra.mxu0 0.0
    %2733 = vmatprep.subr.mxu0 0.0
    %2734 = vmatpush1.msra.mxu0 0.0
    %2735 = vmatprep.subr.mxu0 0.0
    %2736 = vmatpush1.msra.mxu0 0.0
    %2737 = vmatprep.subr.mxu0 0.0
    %2738 = vmatpush1.msra.mxu0 0.0
    %2739 = vmatprep.subr.mxu0 0.0
    %2740 = vmatpush1.msra.mxu0 0.0
    %2741 = vmatprep.subr.mxu0 0.0
    %2742 = vmatpush1.msra.mxu0 0.0
    %2743 = vmatprep.subr.mxu0 0.0
    %2744 = vmatpush1.msra.mxu0 %v2715
    %2745 = vmatprep.subr.mxu0 0.0
    %2746 = vmatpush1.msra.mxu0 %v2714
    %2747 = vmatprep.subr.mxu0 0.0
    %2748 = vmatpush1.msra.mxu0 %v2713
    %2749 = vmatprep.subr.mxu0 0.0
    %2750 = vmatpush1.msra.mxu0 %v2712
    %2751 = vmatprep.subr.mxu0 0.0
    %2752 = vmatpush1.msra.mxu0 %v2711
    %2753 = vmatprep.subr.mxu0 0.0
    %2754 = vmatpush1.msra.mxu0 %v2710
    %2755 = vmatprep.subr.mxu0 0.0
    %2756 = vmatpush1.msra.mxu0 %v2709
    %2757 = vmatprep.subr.mxu0 0.0
    %2758 = vmatpush1.msra.mxu0 %v2708
    %2759 = vmatprep.subr.mxu0 0.0
    %2760 = vmatpush2.msra.mxu0 0.0
    %2761 = vmatprep.subr.mxu0 0.0
    %2762 = vmatpush2.msra.mxu0 0.0
    %2763 = vmatprep.subr.mxu0 0.0
    %2764 = vmatpush2.msra.mxu0 0.0
    %2765 = vmatprep.subr.mxu0 0.0
    %2766 = vmatpush2.msra.mxu0 0.0
    %2767 = vmatprep.subr.mxu0 0.0
    %2768 = vmatpush2.msra.mxu0 0.0
    %2769 = vmatprep.subr.mxu0 0.0
    %2770 = vmatpush2.msra.mxu0 0.0
    %2771 = vmatprep.subr.mxu0 0.0
    %2772 = vmatpush2.msra.mxu0 0.0
    %2773 = vmatprep.subr.mxu0 0.0
    %2774 = vmatpush2.msra.mxu0 0.0
    %2775 = vmatprep.subr.mxu0 0.0
    %2776 = vmatpush2.msra.mxu0 0.0
    %2777 = vmatprep.subr.mxu0 0.0
    %2778 = vmatpush2.msra.mxu0 0.0
    %2779 = vmatprep.subr.mxu0 0.0
    %2780 = vmatpush2.msra.mxu0 0.0
    %2781 = vmatprep.subr.mxu0 0.0
    %2782 = vmatpush2.msra.mxu0 0.0
    %2783 = vmatprep.subr.mxu0 0.0
    %2784 = vmatpush2.msra.mxu0 0.0
    %2785 = vmatprep.subr.mxu0 0.0
    %2786 = vmatpush2.msra.mxu0 0.0
    %2787 = vmatprep.subr.mxu0 0.0
    %2788 = vmatpush2.msra.mxu0 0.0
    %2789 = vmatprep.subr.mxu0 0.0
    %2790 = vmatpush2.msra.mxu0 0.0
    %2791 = vmatprep.mubr.f32.mxu0 0.0
    %2792 = vmatmul.mubr.f32.gmra.mxu0 %v2722
    %v2793 = vpop.f32.mrf.mxu0
    %v2794 = vadd.f32 %v2720, %v2793
    %v2795 = vpop.f32.mrf.mxu0
    %2796 = vmatprep.mubr.f32.mxu0 0.0
    %2797 = vmatmul.mubr.f32.gmra.mxu0 %v2725
    %v2798 = vpop.f32.mrf.mxu0
    %v2799 = vadd.f32 %v2720, %v2798
    %v2800 = vpop.f32.mrf.mxu0
    %2801 = vdwg.mxu0
    %vm2802 = vcmask 48128
    %2803 = vst.msk [vmem:[#allocation5] sm:$0xff] %vm2802, %v2794
    %2804 = vst.msk [vmem:[#allocation5 + $0x8] sm:$0xff] %vm2802, %v2799
    %v2805 = vld [vmem:[%s4 + $0x41] sm:$0x3f]
    %v2806 = vld [vmem:[%s4 + $0x47] sm:$0x1]
    %v2807 = vld [vmem:[%s4 + $0x48] sm:$0x1]
    %v2808 = vld [vmem:[%s1] sm:$0xff]
    %v2809 = vld [vmem:[%s1 + $0x8] sm:$0xff]
    %v2810 = vld [vmem:[#allocation5] sm:$0xff]
    %v2811 = vld [vmem:[#allocation5 + $0x8] sm:$0xff]
    %v2812 = vcvt.s32.f32 %v37
    %2814 = vset.pattern.permute.xlu0 1
    %2815 = vperm.xlu0 %2814, %v2808
    %v2816 = vpop.permute.xlu0 %2815
    %2819 = vset.pattern.permute.xlu0 1
    %2820 = vperm.xlu0 %2819, %v2809
    %v2821 = vpop.permute.xlu0 %2820
    %vm2823 = vcmp.eq.f32.partialorder %v2812, %v2816
    %vm2824 = vcmp.eq.f32.partialorder %v2812, %v2821
    %v2825 = vsel %vm2823, 1, 0
    %v2826 = vsel %vm2824, 1, 0
    %v2827 = vcvt.s32.f32 %v2825
    %v2828 = vcvt.s32.f32 %v2826
    %v2829 = vmul.f32 %v2810, %v2827
    %v2830 = vmul.f32 %v2811, %v2828
    %2831 = vset.pattern.permute.xlu0 0
    %2832 = vperm.xlu0 %2831, %v2808
    %v2833 = vpop.permute.xlu0 %2832
    %2835 = vset.pattern.permute.xlu0 0
    %2836 = vperm.xlu0 %2835, %v2809
    %v2837 = vpop.permute.xlu0 %2836
    %v2839 = vmul.f32 %v2829, %v2833
    %v2840 = vmul.f32 %v2830, %v2837
    %v2841 = vsel %vm2802, %v2839, 0.0
    %v2842 = vsel %vm2802, %v2840, 0.0
    %v2843 = vadd.f32 %v2841, %v2842
    %2844 = vadd.xlane.f32.xlu0 %v2843
    %v2845 = vpop.xlane.xlu0 %2844
    %v2846 = vrot.slane %v2845, 4
    %v2847 = vadd.f32 %v2845, %v2846
    %v2848 = vrot.slane %v2847, 2
    %v2849 = vadd.f32 %v2847, %v2848
    %v2850 = vrot.slane %v2849, 1
    %v2851 = vadd.f32 %v2849, %v2850
    %s2852 = vtos %v2851
    %v2853 = vmul.f32 %v2827, %v2833
    %v2854 = vlaneseq
    %v2855 = vshrl.u32 %v2854, 7
    %v2856 = vsub.s32 0, %v2855
    %v2857 = vrot.slane %v2806, %v2856
    %v2858 = vmul.f32 %v2853, %v2857
    %vm2859 = vcmask 41984
    %v2860 = vsel %vm2859, %v2858, 0.0
    %2861 = vadd.xlane.f32.xlu0 %v2860
    %v2862 = vpop.xlane.xlu0 %2861
    %v2863 = vrot.slane %v2862, 4
    %v2864 = vadd.f32 %v2862, %v2863
    %v2865 = vrot.slane %v2864, 2
    %v2866 = vadd.f32 %v2864, %v2865
    %v2867 = vrot.slane %v2866, 1
    %v2868 = vadd.f32 %v2866, %v2867
    %s2869 = vtos %v2868
    %s2870 = sadd.f32 %s2852, %s2869
    %v2872 = vsel %vm2802, %v2827, 0
    %v2875 = vsel %vm2802, %v2828, 0
    %v2878 = vsel %vm323, %v2805, 0
    %2880 = vmatprep.subr.mxu0 0.0
    %2881 = vmatpush1.msra.mxu0 0.0
    %2882 = vmatprep.subr.mxu0 0.0
    %2883 = vmatpush1.msra.mxu0 0.0
    %2884 = vmatprep.subr.mxu0 0.0
    %2885 = vmatpush1.msra.mxu0 0.0
    %2886 = vmatprep.subr.mxu0 0.0
    %2887 = vmatpush1.msra.mxu0 0.0
    %2888 = vmatprep.subr.mxu0 0.0
    %2889 = vmatpush1.msra.mxu0 0.0
    %2890 = vmatprep.subr.mxu0 0.0
    %2891 = vmatpush1.msra.mxu0 0.0
    %2892 = vmatprep.subr.mxu0 0.0
    %2893 = vmatpush1.msra.mxu0 0.0
    %2894 = vmatprep.subr.mxu0 0.0
    %2895 = vmatpush1.msra.mxu0 0.0
    %2896 = vmatprep.subr.mxu0 0.0
    %2897 = vmatpush1.msra.mxu0 0.0
    %2898 = vmatprep.subr.mxu0 0.0
    %2899 = vmatpush1.msra.mxu0 0.0
    %2900 = vmatprep.subr.mxu0 0.0
    %2901 = vmatpush1.msra.mxu0 0.0
    %2902 = vmatprep.subr.mxu0 0.0
    %2903 = vmatpush1.msra.mxu0 0.0
    %2904 = vmatprep.subr.mxu0 0.0
    %2905 = vmatpush1.msra.mxu0 0.0
    %2906 = vmatprep.subr.mxu0 0.0
    %2907 = vmatpush1.msra.mxu0 0.0
    %2908 = vmatprep.subr.mxu0 0.0
    %2909 = vmatpush1.msra.mxu0 0.0
    %2910 = vmatprep.subr.mxu0 0.0
    %2911 = vmatpush1.msra.mxu0 %v2878
    %2912 = vmatprep.subr.mxu0 0.0
    %2913 = vmatpush2.msra.mxu0 0.0
    %2914 = vmatprep.subr.mxu0 0.0
    %2915 = vmatpush2.msra.mxu0 0.0
    %2916 = vmatprep.subr.mxu0 0.0
    %2917 = vmatpush2.msra.mxu0 0.0
    %2918 = vmatprep.subr.mxu0 0.0
    %2919 = vmatpush2.msra.mxu0 0.0
    %2920 = vmatprep.subr.mxu0 0.0
    %2921 = vmatpush2.msra.mxu0 0.0
    %2922 = vmatprep.subr.mxu0 0.0
    %2923 = vmatpush2.msra.mxu0 0.0
    %2924 = vmatprep.subr.mxu0 0.0
    %2925 = vmatpush2.msra.mxu0 0.0
    %2926 = vmatprep.subr.mxu0 0.0
    %2927 = vmatpush2.msra.mxu0 0.0
    %2928 = vmatprep.subr.mxu0 0.0
    %2929 = vmatpush2.msra.mxu0 0.0
    %2930 = vmatprep.subr.mxu0 0.0
    %2931 = vmatpush2.msra.mxu0 0.0
    %2932 = vmatprep.subr.mxu0 0.0
    %2933 = vmatpush2.msra.mxu0 0.0
    %2934 = vmatprep.subr.mxu0 0.0
    %2935 = vmatpush2.msra.mxu0 0.0
    %2936 = vmatprep.subr.mxu0 0.0
    %2937 = vmatpush2.msra.mxu0 0.0
    %2938 = vmatprep.subr.mxu0 0.0
    %2939 = vmatpush2.msra.mxu0 0.0
    %2940 = vmatprep.subr.mxu0 0.0
    %2941 = vmatpush2.msra.mxu0 0.0
    %2942 = vmatprep.subr.mxu0 0.0
    %2943 = vmatpush2.msra.mxu0 0.0
    %2944 = vmatprep.mubr.f32.mxu0 0.0
    %2945 = vmatmul.mubr.f32.gmra.mxu0 %v2872
    %v2946 = vpop.f32.mrf.mxu0
    %v2947 = vadd.f32 0.0, %v2946
    %v2948 = vpop.f32.mrf.mxu0
    %2949 = vmatprep.mubr.f32.mxu0 0.0
    %2950 = vmatmul.mubr.f32.gmra.mxu0 %v2875
    %v2951 = vpop.f32.mrf.mxu0
    %v2952 = vadd.f32 0.0, %v2951
    %v2953 = vpop.f32.mrf.mxu0
    %2954 = vdwg.mxu0
    %v2955 = vrot.slane %v2827, 2
    %v2956 = vrot.slane %v2828, 2
    %v2957 = vsel %vm323, %v2955, %v2956
    %v2960 = vmul.f32 %v2947, %v2957
    %v2961 = vmul.f32 %v2952, %v2956
    %v2962 = vrot.slane %v2833, 2
    %v2963 = vrot.slane %v2837, 2
    %v2964 = vsel %vm323, %v2962, %v2963
    %v2967 = vmul.f32 %v2960, %v2964
    %v2968 = vmul.f32 %v2961, %v2963
    %v2969 = vsel %vm2802, %v2967, 0.0
    %vm2970 = vcmask 46080
    %v2971 = vsel %vm2970, %v2968, 0.0
    %v2972 = vadd.f32 %v2969, %v2971
    %2973 = vadd.xlane.f32.xlu0 %v2972
    %v2974 = vpop.xlane.xlu0 %2973
    %v2975 = vrot.slane %v2974, 4
    %v2976 = vadd.f32 %v2974, %v2975
    %v2977 = vrot.slane %v2976, 2
    %v2978 = vadd.f32 %v2976, %v2977
    %v2979 = vrot.slane %v2978, 1
    %v2980 = vadd.f32 %v2978, %v2979
    %s2981 = vtos %v2980
    %s2982 = sadd.f32 %s2870, %s2981
    %v2983 = vmul.f32 %v2828, %v2837
    %v2984 = vlaneseq
    %v2985 = vshrl.u32 %v2984, 7
    %v2986 = vsub.s32 0, %v2985
    %v2987 = vrot.slane %v2807, %v2986
    %v2988 = vmul.f32 %v2853, %v2987
    %v2989 = vmul.f32 %v2983, %v2987
    %v2990 = vsel %vm2802, %v2988, 0.0
    %v2991 = vsel %vm2802, %v2989, 0.0
    %v2992 = vadd.f32 %v2990, %v2991
    %2993 = vadd.xlane.f32.xlu0 %v2992
    %v2994 = vpop.xlane.xlu0 %2993
    %v2995 = vrot.slane %v2994, 4
    %v2996 = vadd.f32 %v2994, %v2995
    %v2997 = vrot.slane %v2996, 2
    %v2998 = vadd.f32 %v2996, %v2997
    %v2999 = vrot.slane %v2998, 1
    %v3000 = vadd.f32 %v2998, %v2999
    %s3001 = vtos %v3000
    %s3002 = sadd.f32 %s2982, %s3001
    %v3003 = vmul.f32 %v2827, %v2964
    %v3004 = vmul.f32 %v2828, %v2963
    %v3005 = vmul.f32 %v3003, %v2987
    %v3006 = vmul.f32 %v3004, %v2987
    %v3007 = vsel %vm2802, %v3005, 0.0
    %v3008 = vsel %vm2970, %v3006, 0.0
    %v3009 = vadd.f32 %v3007, %v3008
    %3010 = vadd.xlane.f32.xlu0 %v3009
    %v3011 = vpop.xlane.xlu0 %3010
    %v3012 = vrot.slane %v3011, 4
    %v3013 = vadd.f32 %v3011, %v3012
    %v3014 = vrot.slane %v3013, 2
    %v3015 = vadd.f32 %v3013, %v3014
    %v3016 = vrot.slane %v3015, 1
    %v3017 = vadd.f32 %v3015, %v3016
    %s3018 = vtos %v3017
    %s3019 = ssub.f32 %s3002, %s3018
    %v3020 = vsel %vm2970, %v2805, -inf
    %v3021 = vrot.slane %v3020, 4
    %v3022 = vmax.f32 %v3020, %v3021
    %v3023 = vrot.slane %v3022, 2
    %v3024 = vmax.f32 %v3022, %v3023
    %v3025 = vrot.slane %v3024, 1
    %v3026 = vmax.f32 %v3024, %v3025
    %v3027 = vsub.f32 %v2805, %v3026
    %v3028 = vmul.f32 %v3027, 1.442695
    %v3029 = vpow.pop %v3028
    %v3030 = vld [vmem:[#allocation5] sm:$0x3]
    %v3031 = vadd.f32 %v2857, %v3030
    %v3032 = vld [vmem:[#allocation5 + $0x2] sm:$0x3]
    %v3033 = vld [vmem:[%s1 + $0x2] sm:$0x3]
    %v3034 = vsel %vm2859, %v3031, -inf
    %3035 = vmax.xlane.f32.xlu0 %v3034
    %v3036 = vpop.xlane.xlu0 %3035
    %v3037 = vsub.f32 %v3031, %v3036
    %v3038 = vmul.f32 %v3037, 1.442695
    %v3039 = vpow.pop %v3038
    %v3040 = vlaneseq
    %v3041 = vshrl.u32 %v3040, 7
    %v3042 = vsub.s32 0, %v3041
    %v3043 = vrot.slane %v3029, %v3042
    %3045 = vset.pattern.permute.xlu0 0
    %3046 = vperm.xlu0 %3045, %v3039
    %v3047 = vpop.permute.xlu0 %3046
    %v3049 = vmul.f32 %v3043, %v3047
    %v3050 = vlaneseq
    %v3051 = vshrl.u32 %v3050, 7
    %v3052 = vsub.s32 1, %v3051
    %v3053 = vrot.slane %v3029, %v3052
    %3054 = vset.pattern.permute.xlu0 1
    %3055 = vperm.xlu0 %3054, %v3039
    %v3056 = vpop.permute.xlu0 %3055
    %v3058 = vmul.f32 %v3053, %v3056
    %v3059 = vadd.f32 %v3049, %v3058
    %v3060 = vlaneseq
    %v3061 = vshrl.u32 %v3060, 7
    %v3062 = vsub.s32 2, %v3061
    %v3063 = vrot.slane %v3029, %v3062
    %3064 = vset.pattern.permute.xlu0 2
    %3065 = vperm.xlu0 %3064, %v3039
    %v3066 = vpop.permute.xlu0 %3065
    %v3068 = vmul.f32 %v3063, %v3066
    %v3069 = vadd.f32 %v3059, %v3068
    %v3070 = vlaneseq
    %v3071 = vshrl.u32 %v3070, 7
    %v3072 = vsub.s32 3, %v3071
    %v3073 = vrot.slane %v3029, %v3072
    %3074 = vset.pattern.permute.xlu0 3
    %3075 = vperm.xlu0 %3074, %v3039
    %v3076 = vpop.permute.xlu0 %3075
    %v3078 = vmul.f32 %v3073, %v3076
    %v3079 = vadd.f32 %v3069, %v3078
    %v3080 = vlaneseq
    %v3081 = vshrl.u32 %v3080, 7
    %v3082 = vsub.s32 4, %v3081
    %v3083 = vrot.slane %v3029, %v3082
    %3084 = vset.pattern.permute.xlu0 4
    %3085 = vperm.xlu0 %3084, %v3039
    %v3086 = vpop.permute.xlu0 %3085
    %v3088 = vmul.f32 %v3083, %v3086
    %v3089 = vadd.f32 %v3079, %v3088
    %v3090 = vlaneseq
    %v3091 = vshrl.u32 %v3090, 7
    %v3092 = vsub.s32 5, %v3091
    %v3093 = vrot.slane %v3029, %v3092
    %3094 = vset.pattern.permute.xlu0 5
    %3095 = vperm.xlu0 %3094, %v3039
    %v3096 = vpop.permute.xlu0 %3095
    %v3098 = vmul.f32 %v3093, %v3096
    %v3099 = vadd.f32 %v3089, %v3098
    %v3100 = vadd.f32 %v3036, %v3026
    %v3101 = vlog2.pop %v3099
    %v3102 = vmul.f32 %v3101, 0.6931472
    %v3103 = vadd.f32 %v3100, %v3102
    %v3104 = vadd.f32 %v3103, %v3032
    %vm3105 = vcmp.gt.f32.partialorder %v3033, 0.5
    %v3106 = vsel %vm3105, 1, 0
    %3107 = vset.pattern.permute.xlu0 0
    %3108 = vperm.xlu0 %3107, %v3106
    %v3109 = vpop.permute.xlu0 %3108
    %vm3110 = vcmp.eq.s32.totalorder %v3109, 1
    %v3111 = vsel %vm3110, %v3104, %v3031
    %v3112 = vld [vmem:[#allocation5 + $0x4] sm:$0x3]
    %v3113 = vld [vmem:[%s1 + $0x4] sm:$0x3]
    %v3114 = vsel %vm2859, %v3111, -inf
    %3115 = vmax.xlane.f32.xlu0 %v3114
    %v3116 = vpop.xlane.xlu0 %3115
    %v3117 = vsub.f32 %v3111, %v3116
    %v3118 = vmul.f32 %v3117, 1.442695
    %v3119 = vpow.pop %v3118
    %3121 = vset.pattern.permute.xlu0 0
    %3122 = vperm.xlu0 %3121, %v3119
    %v3123 = vpop.permute.xlu0 %3122
    %v3125 = vmul.f32 %v3043, %v3123
    %3126 = vset.pattern.permute.xlu0 1
    %3127 = vperm.xlu0 %3126, %v3119
    %v3128 = vpop.permute.xlu0 %3127
    %v3130 = vmul.f32 %v3053, %v3128
    %v3131 = vadd.f32 %v3125, %v3130
    %3132 = vset.pattern.permute.xlu0 2
    %3133 = vperm.xlu0 %3132, %v3119
    %v3134 = vpop.permute.xlu0 %3133
    %v3136 = vmul.f32 %v3063, %v3134
    %v3137 = vadd.f32 %v3131, %v3136
    %3138 = vset.pattern.permute.xlu0 3
    %3139 = vperm.xlu0 %3138, %v3119
    %v3140 = vpop.permute.xlu0 %3139
    %v3142 = vmul.f32 %v3073, %v3140
    %v3143 = vadd.f32 %v3137, %v3142
    %3144 = vset.pattern.permute.xlu0 4
    %3145 = vperm.xlu0 %3144, %v3119
    %v3146 = vpop.permute.xlu0 %3145
    %v3148 = vmul.f32 %v3083, %v3146
    %v3149 = vadd.f32 %v3143, %v3148
    %3150 = vset.pattern.permute.xlu0 5
    %3151 = vperm.xlu0 %3150, %v3119
    %v3152 = vpop.permute.xlu0 %3151
    %v3154 = vmul.f32 %v3093, %v3152
    %v3155 = vadd.f32 %v3149, %v3154
    %v3156 = vadd.f32 %v3116, %v3026
    %v3157 = vlog2.pop %v3155
    %v3158 = vmul.f32 %v3157, 0.6931472
    %v3159 = vadd.f32 %v3156, %v3158
    %v3160 = vadd.f32 %v3159, %v3112
    %vm3161 = vcmp.gt.f32.partialorder %v3113, 0.5
    %v3162 = vsel %vm3161, 1, 0
    %3163 = vset.pattern.permute.xlu0 0
    %3164 = vperm.xlu0 %3163, %v3162
    %v3165 = vpop.permute.xlu0 %3164
    %vm3166 = vcmp.eq.s32.totalorder %v3165, 1
    %v3167 = vsel %vm3166, %v3160, %v3111
    %v3168 = vld [vmem:[#allocation5 + $0x6] sm:$0x3]
    %v3169 = vld [vmem:[%s1 + $0x6] sm:$0x3]
    %v3170 = vsel %vm2859, %v3167, -inf
    %3171 = vmax.xlane.f32.xlu0 %v3170
    %v3172 = vpop.xlane.xlu0 %3171
    %v3173 = vsub.f32 %v3167, %v3172
    %v3174 = vmul.f32 %v3173, 1.442695
    %v3175 = vpow.pop %v3174
    %3177 = vset.pattern.permute.xlu0 0
    %3178 = vperm.xlu0 %3177, %v3175
    %v3179 = vpop.permute.xlu0 %3178
    %v3181 = vmul.f32 %v3043, %v3179
    %3182 = vset.pattern.permute.xlu0 1
    %3183 = vperm.xlu0 %3182, %v3175
    %v3184 = vpop.permute.xlu0 %3183
    %v3186 = vmul.f32 %v3053, %v3184
    %v3187 = vadd.f32 %v3181, %v3186
    %3188 = vset.pattern.permute.xlu0 2
    %3189 = vperm.xlu0 %3188, %v3175
    %v3190 = vpop.permute.xlu0 %3189
    %v3192 = vmul.f32 %v3063, %v3190
    %v3193 = vadd.f32 %v3187, %v3192
    %3194 = vset.pattern.permute.xlu0 3
    %3195 = vperm.xlu0 %3194, %v3175
    %v3196 = vpop.permute.xlu0 %3195
    %v3198 = vmul.f32 %v3073, %v3196
    %v3199 = vadd.f32 %v3193, %v3198
    %3200 = vset.pattern.permute.xlu0 4
    %3201 = vperm.xlu0 %3200, %v3175
    %v3202 = vpop.permute.xlu0 %3201
    %v3204 = vmul.f32 %v3083, %v3202
    %v3205 = vadd.f32 %v3199, %v3204
    %3206 = vset.pattern.permute.xlu0 5
    %3207 = vperm.xlu0 %3206, %v3175
    %v3208 = vpop.permute.xlu0 %3207
    %v3210 = vmul.f32 %v3093, %v3208
    %v3211 = vadd.f32 %v3205, %v3210
    %v3212 = vadd.f32 %v3172, %v3026
    %v3213 = vlog2.pop %v3211
    %v3214 = vmul.f32 %v3213, 0.6931472
    %v3215 = vadd.f32 %v3212, %v3214
    %v3216 = vadd.f32 %v3215, %v3168
    %vm3217 = vcmp.gt.f32.partialorder %v3169, 0.5
    %v3218 = vsel %vm3217, 1, 0
    %3219 = vset.pattern.permute.xlu0 0
    %3220 = vperm.xlu0 %3219, %v3218
    %v3221 = vpop.permute.xlu0 %3220
    %vm3222 = vcmp.eq.s32.totalorder %v3221, 1
    %v3223 = vsel %vm3222, %v3216, %v3167
    %v3224 = vld [vmem:[#allocation5 + $0x8] sm:$0x3]
    %v3225 = vld [vmem:[%s1 + $0x8] sm:$0x3]
    %v3226 = vsel %vm2859, %v3223, -inf
    %3227 = vmax.xlane.f32.xlu0 %v3226
    %v3228 = vpop.xlane.xlu0 %3227
    %v3229 = vsub.f32 %v3223, %v3228
    %v3230 = vmul.f32 %v3229, 1.442695
    %v3231 = vpow.pop %v3230
    %3233 = vset.pattern.permute.xlu0 0
    %3234 = vperm.xlu0 %3233, %v3231
    %v3235 = vpop.permute.xlu0 %3234
    %v3237 = vmul.f32 %v3043, %v3235
    %3238 = vset.pattern.permute.xlu0 1
    %3239 = vperm.xlu0 %3238, %v3231
    %v3240 = vpop.permute.xlu0 %3239
    %v3242 = vmul.f32 %v3053, %v3240
    %v3243 = vadd.f32 %v3237, %v3242
    %3244 = vset.pattern.permute.xlu0 2
    %3245 = vperm.xlu0 %3244, %v3231
    %v3246 = vpop.permute.xlu0 %3245
    %v3248 = vmul.f32 %v3063, %v3246
    %v3249 = vadd.f32 %v3243, %v3248
    %3250 = vset.pattern.permute.xlu0 3
    %3251 = vperm.xlu0 %3250, %v3231
    %v3252 = vpop.permute.xlu0 %3251
    %v3254 = vmul.f32 %v3073, %v3252
    %v3255 = vadd.f32 %v3249, %v3254
    %3256 = vset.pattern.permute.xlu0 4
    %3257 = vperm.xlu0 %3256, %v3231
    %v3258 = vpop.permute.xlu0 %3257
    %v3260 = vmul.f32 %v3083, %v3258
    %v3261 = vadd.f32 %v3255, %v3260
    %3262 = vset.pattern.permute.xlu0 5
    %3263 = vperm.xlu0 %3262, %v3231
    %v3264 = vpop.permute.xlu0 %3263
    %v3266 = vmul.f32 %v3093, %v3264
    %v3267 = vadd.f32 %v3261, %v3266
    %v3268 = vadd.f32 %v3228, %v3026
    %v3269 = vlog2.pop %v3267
    %v3270 = vmul.f32 %v3269, 0.6931472
    %v3271 = vadd.f32 %v3268, %v3270
    %v3272 = vadd.f32 %v3271, %v3224
    %vm3273 = vcmp.gt.f32.partialorder %v3225, 0.5
    %v3274 = vsel %vm3273, 1, 0
    %3275 = vset.pattern.permute.xlu0 0
    %3276 = vperm.xlu0 %3275, %v3274
    %v3277 = vpop.permute.xlu0 %3276
    %vm3278 = vcmp.eq.s32.totalorder %v3277, 1
    %v3279 = vsel %vm3278, %v3272, %v3223
    %v3280 = vld [vmem:[#allocation5 + $0xa] sm:$0x3]
    %v3281 = vld [vmem:[%s1 + $0xa] sm:$0x3]
    %v3282 = vsel %vm2859, %v3279, -inf
    %3283 = vmax.xlane.f32.xlu0 %v3282
    %v3284 = vpop.xlane.xlu0 %3283
    %v3285 = vsub.f32 %v3279, %v3284
    %v3286 = vmul.f32 %v3285, 1.442695
    %v3287 = vpow.pop %v3286
    %3289 = vset.pattern.permute.xlu0 0
    %3290 = vperm.xlu0 %3289, %v3287
    %v3291 = vpop.permute.xlu0 %3290
    %v3293 = vmul.f32 %v3043, %v3291
    %3294 = vset.pattern.permute.xlu0 1
    %3295 = vperm.xlu0 %3294, %v3287
    %v3296 = vpop.permute.xlu0 %3295
    %v3298 = vmul.f32 %v3053, %v3296
    %v3299 = vadd.f32 %v3293, %v3298
    %3300 = vset.pattern.permute.xlu0 2
    %3301 = vperm.xlu0 %3300, %v3287
    %v3302 = vpop.permute.xlu0 %3301
    %v3304 = vmul.f32 %v3063, %v3302
    %v3305 = vadd.f32 %v3299, %v3304
    %3306 = vset.pattern.permute.xlu0 3
    %3307 = vperm.xlu0 %3306, %v3287
    %v3308 = vpop.permute.xlu0 %3307
    %v3310 = vmul.f32 %v3073, %v3308
    %v3311 = vadd.f32 %v3305, %v3310
    %3312 = vset.pattern.permute.xlu0 4
    %3313 = vperm.xlu0 %3312, %v3287
    %v3314 = vpop.permute.xlu0 %3313
    %v3316 = vmul.f32 %v3083, %v3314
    %v3317 = vadd.f32 %v3311, %v3316
    %3318 = vset.pattern.permute.xlu0 5
    %3319 = vperm.xlu0 %3318, %v3287
    %v3320 = vpop.permute.xlu0 %3319
    %v3322 = vmul.f32 %v3093, %v3320
    %v3323 = vadd.f32 %v3317, %v3322
    %v3324 = vadd.f32 %v3284, %v3026
    %v3325 = vlog2.pop %v3323
    %v3326 = vmul.f32 %v3325, 0.6931472
    %v3327 = vadd.f32 %v3324, %v3326
    %v3328 = vadd.f32 %v3327, %v3280
    %vm3329 = vcmp.gt.f32.partialorder %v3281, 0.5
    %v3330 = vsel %vm3329, 1, 0
    %3331 = vset.pattern.permute.xlu0 0
    %3332 = vperm.xlu0 %3331, %v3330
    %v3333 = vpop.permute.xlu0 %3332
    %vm3334 = vcmp.eq.s32.totalorder %v3333, 1
    %v3335 = vsel %vm3334, %v3328, %v3279
    %v3336 = vld [vmem:[#allocation5 + $0xc] sm:$0x3]
    %v3337 = vld [vmem:[%s1 + $0xc] sm:$0x3]
    %v3338 = vsel %vm2859, %v3335, -inf
    %3339 = vmax.xlane.f32.xlu0 %v3338
    %v3340 = vpop.xlane.xlu0 %3339
    %v3341 = vsub.f32 %v3335, %v3340
    %v3342 = vmul.f32 %v3341, 1.442695
    %v3343 = vpow.pop %v3342
    %3345 = vset.pattern.permute.xlu0 0
    %3346 = vperm.xlu0 %3345, %v3343
    %v3347 = vpop.permute.xlu0 %3346
    %v3349 = vmul.f32 %v3043, %v3347
    %3350 = vset.pattern.permute.xlu0 1
    %3351 = vperm.xlu0 %3350, %v3343
    %v3352 = vpop.permute.xlu0 %3351
    %v3354 = vmul.f32 %v3053, %v3352
    %v3355 = vadd.f32 %v3349, %v3354
    %3356 = vset.pattern.permute.xlu0 2
    %3357 = vperm.xlu0 %3356, %v3343
    %v3358 = vpop.permute.xlu0 %3357
    %v3360 = vmul.f32 %v3063, %v3358
    %v3361 = vadd.f32 %v3355, %v3360
    %3362 = vset.pattern.permute.xlu0 3
    %3363 = vperm.xlu0 %3362, %v3343
    %v3364 = vpop.permute.xlu0 %3363
    %v3366 = vmul.f32 %v3073, %v3364
    %v3367 = vadd.f32 %v3361, %v3366
    %3368 = vset.pattern.permute.xlu0 4
    %3369 = vperm.xlu0 %3368, %v3343
    %v3370 = vpop.permute.xlu0 %3369
    %v3372 = vmul.f32 %v3083, %v3370
    %v3373 = vadd.f32 %v3367, %v3372
    %3374 = vset.pattern.permute.xlu0 5
    %3375 = vperm.xlu0 %3374, %v3343
    %v3376 = vpop.permute.xlu0 %3375
    %v3378 = vmul.f32 %v3093, %v3376
    %v3379 = vadd.f32 %v3373, %v3378
    %v3380 = vadd.f32 %v3340, %v3026
    %v3381 = vlog2.pop %v3379
    %v3382 = vmul.f32 %v3381, 0.6931472
    %v3383 = vadd.f32 %v3380, %v3382
    %v3384 = vadd.f32 %v3383, %v3336
    %vm3385 = vcmp.gt.f32.partialorder %v3337, 0.5
    %v3386 = vsel %vm3385, 1, 0
    %3387 = vset.pattern.permute.xlu0 0
    %3388 = vperm.xlu0 %3387, %v3386
    %v3389 = vpop.permute.xlu0 %3388
    %vm3390 = vcmp.eq.s32.totalorder %v3389, 1
    %v3391 = vsel %vm3390, %v3384, %v3335
    %v3392 = vld [vmem:[#allocation5 + $0xe] sm:$0x3]
    %v3393 = vld [vmem:[%s1 + $0xe] sm:$0x3]
    %v3394 = vsel %vm2859, %v3391, -inf
    %3395 = vmax.xlane.f32.xlu0 %v3394
    %v3396 = vpop.xlane.xlu0 %3395
    %v3397 = vsub.f32 %v3391, %v3396
    %v3398 = vmul.f32 %v3397, 1.442695
    %v3399 = vpow.pop %v3398
    %3401 = vset.pattern.permute.xlu0 0
    %3402 = vperm.xlu0 %3401, %v3399
    %v3403 = vpop.permute.xlu0 %3402
    %v3405 = vmul.f32 %v3043, %v3403
    %3406 = vset.pattern.permute.xlu0 1
    %3407 = vperm.xlu0 %3406, %v3399
    %v3408 = vpop.permute.xlu0 %3407
    %v3410 = vmul.f32 %v3053, %v3408
    %v3411 = vadd.f32 %v3405, %v3410
    %3412 = vset.pattern.permute.xlu0 2
    %3413 = vperm.xlu0 %3412, %v3399
    %v3414 = vpop.permute.xlu0 %3413
    %v3416 = vmul.f32 %v3063, %v3414
    %v3417 = vadd.f32 %v3411, %v3416
    %3418 = vset.pattern.permute.xlu0 3
    %3419 = vperm.xlu0 %3418, %v3399
    %v3420 = vpop.permute.xlu0 %3419
    %v3422 = vmul.f32 %v3073, %v3420
    %v3423 = vadd.f32 %v3417, %v3422
    %3424 = vset.pattern.permute.xlu0 4
    %3425 = vperm.xlu0 %3424, %v3399
    %v3426 = vpop.permute.xlu0 %3425
    %v3428 = vmul.f32 %v3083, %v3426
    %v3429 = vadd.f32 %v3423, %v3428
    %3430 = vset.pattern.permute.xlu0 5
    %3431 = vperm.xlu0 %3430, %v3399
    %v3432 = vpop.permute.xlu0 %3431
    %v3434 = vmul.f32 %v3093, %v3432
    %v3435 = vadd.f32 %v3429, %v3434
    %v3436 = vadd.f32 %v3396, %v3026
    %v3437 = vlog2.pop %v3435
    %v3438 = vmul.f32 %v3437, 0.6931472
    %v3439 = vadd.f32 %v3436, %v3438
    %v3440 = vadd.f32 %v3439, %v3392
    %vm3441 = vcmp.gt.f32.partialorder %v3393, 0.5
    %v3442 = vsel %vm3441, 1, 0
    %3443 = vset.pattern.permute.xlu0 0
    %3444 = vperm.xlu0 %3443, %v3442
    %v3445 = vpop.permute.xlu0 %3444
    %vm3446 = vcmp.eq.s32.totalorder %v3445, 1
    %v3447 = vsel %vm3446, %v3440, %v3391
    %v3448 = vadd.f32 %v3447, %v2987
    %v3449 = vsel %vm2859, %v3448, -inf
    %3450 = vmax.xlane.f32.xlu0 %v3449
    %v3451 = vpop.xlane.xlu0 %3450
    %v3452 = vsub.f32 %v3448, %v3451
    %v3453 = vmul.f32 %v3452, 1.442695
    %v3454 = vpow.pop %v3453
    %v3455 = vsel %vm2859, %v3454, 0.0
    %3456 = vadd.xlane.f32.xlu0 %v3455
    %v3457 = vpop.xlane.xlu0 %3456
    %v3458 = vlog2.pop %v3457
    %v3459 = vmul.f32 %v3458, 0.6931472
    %v3460 = vadd.f32 %v3451, %v3459
    %vm3461 = vcmask 1024
    %v3462 = vsel %vm3461, %v3460, 0.0
    %3463 = vadd.xlane.f32.xlu0 %v3462
    %v3464 = vpop.xlane.xlu0 %3463
    %v3465 = vrot.slane %v3464, 4
    %v3466 = vadd.f32 %v3464, %v3465
    %v3467 = vrot.slane %v3466, 2
    %v3468 = vadd.f32 %v3466, %v3467
    %v3469 = vrot.slane %v3468, 1
    %v3470 = vadd.f32 %v3468, %v3469
    %s3471 = vtos %v3470
    %s3472 = ssub.f32 %s3471, %s3019
    %s3473 = scalar_lea.smem [#allocation9], 0
    %3474 = sst [smem:[%s3473]] %s3472
    // Predicated region
    $region26: #{bilstm_crf_forward.1} parent=1 // pred_check
      _
    $region27: #{bilstm_crf_forward.1} parent=1 // pred_check_branch
      %3476 = sbr.rel (0) target = $region29
    $region28: #{bilstm_crf_forward.1} parent=1 // pred_region
      %s3478 = ssub.s32 16, 16
      %3479 = vsyncadd [#allocation8], %s3478
      %3482 = dma.smem_to_hbm [#allocation9], 16, %s5, [#allocation8]
    $region29: #{bilstm_crf_forward.1} parent=1 // pred_fallthru
      _
    // Predicated region
    $region30: #{bilstm_crf_forward.1} parent=1 // pred_check
      _
    $region31: #{bilstm_crf_forward.1} parent=1 // pred_check_branch
      %3484 = sbr.rel (0) target = $region33
    $region32: #{bilstm_crf_forward.1} parent=1 // pred_region
      %3485 = dma.done [#allocation8], 16
    $region33: #{bilstm_crf_forward.1} parent=1 // pred_fallthru
      _
    %3486 = sfence
    %3487 = vsyncpa [#allocation7], 1
    %3488 = vsyncpa [#allocation8], 1

</llo_original>
